<compile_context>
chip_gen: v6e
topology: v6e:2x2x1
jax: 0.10.0
libtpu: 0.0.40
codegen_flags: <defaults>
</compile_context>

<pallas_src>
import functools

import jax
import jax.numpy as jnp
from jax.experimental import pallas as pl
from jax.experimental.pallas import tpu as pltpu

LN_EPS = 1e-5                     # torch.nn.LayerNorm default
_INV_SQRT2 = 0.7071067811865476
_VMEM_LIMIT = 48 * 1024 * 1024    # stays under v7x's 64 MiB physical VMEM


def _round_up(a, b):
    return ((a + b - 1) // b) * b


def _ln_f32(xf, g_ref, b_ref):
    """LayerNorm over the last dim in f32 (torch semantics, biased variance)."""
    mu = jnp.mean(xf, axis=-1, keepdims=True)
    var = jnp.mean(jnp.square(xf - mu), axis=-1, keepdims=True)
    y = (xf - mu) * jax.lax.rsqrt(var + LN_EPS)
    return y * g_ref[...].astype(jnp.float32) + b_ref[...].astype(jnp.float32)


# ---------------------------------------------------------------------------
# Kernel 1: one full PreNorm transformer layer (attention + MLP), fused.
# One grid step = one batch element; the full (s, d) sequence lives in VMEM.
# ---------------------------------------------------------------------------
def _layer_kernel(x_ref, g1_ref, b1_ref, wqkv_ref, wo_ref, bo_ref,
                  g2_ref, b2_ref, w1_ref, bb1_ref, w2_ref, bb2_ref,
                  o_ref, *, heads):
    x = x_ref[0]                                       # (s, d), native dtype
    xf = x.astype(jnp.float32)                         # residual stream (f32)

    d = x.shape[-1]
    hd = d // heads
    scale = float(hd) ** -0.5

    # ---- PreNorm multi-head self-attention -------------------------------
    ln = _ln_f32(xf, g1_ref, b1_ref).astype(wqkv_ref.dtype)
    qkv = jnp.dot(ln, wqkv_ref[...], preferred_element_type=jnp.float32)   # (s, 3d) f32
    q = qkv[:, :d]
    k = qkv[:, d:2 * d]
    v = qkv[:, 2 * d:]

    head_outs = []
    for h in range(heads):                             # heads is small and static
        sl = slice(h * hd, (h + 1) * hd)
        qh, kh, vh = q[:, sl], k[:, sl], v[:, sl]
        dots = jax.lax.dot_general(qh, kh, (((1,), (1,)), ((), ())),
                                   preferred_element_type=jnp.float32) * scale
        dots = dots - jnp.max(dots, axis=-1, keepdims=True)
        p = jnp.exp(dots)
        inv = pl.reciprocal(jnp.sum(p, axis=-1, keepdims=True), approx=True)
        attn = p * inv
        head_outs.append(jnp.dot(attn, vh, preferred_element_type=jnp.float32))
    att = jnp.concatenate(head_outs, axis=-1)          # (s, d) f32

    att = jnp.dot(att.astype(wo_ref.dtype), wo_ref[...],
                  preferred_element_type=jnp.float32)
    att = att + bo_ref[...].astype(jnp.float32)
    xf = xf + att                                      # residual add #1

    # ---- PreNorm FeedForward ----------------------------------------------
    ln2 = _ln_f32(xf, g2_ref, b2_ref).astype(w1_ref.dtype)
    hid = jnp.dot(ln2, w1_ref[...], preferred_element_type=jnp.float32)
    hid = hid + bb1_ref[...].astype(jnp.float32)
    # Exact GELU (matches torch.nn.GELU() default, approximate='none').
    hid = 0.5 * hid * (1.0 + jax.lax.erf(hid * _INV_SQRT2))

    y = jnp.dot(hid.astype(w2_ref.dtype), w2_ref[...],
                preferred_element_type=jnp.float32)
    y = y + bb2_ref[...].astype(jnp.float32)
    o_ref[0] = (xf + y).astype(o_ref.dtype)            # residual add #2


def transformer_layer(x, lyr, heads):
    n, s, d = x.shape
    hidden = lyr["w1"].shape[1]
    kernel = functools.partial(_layer_kernel, heads=heads)
    return pl.pallas_call(
        kernel,
        out_shape=jax.ShapeDtypeStruct((n, s, d), x.dtype),
        grid=(n,),
        in_specs=[
            pl.BlockSpec((1, s, d), lambda i: (i, 0, 0)),       # x (streams per batch)
            pl.BlockSpec((1, d), lambda i: (0, 0)),             # ln1 gamma
            pl.BlockSpec((1, d), lambda i: (0, 0)),             # ln1 beta
            pl.BlockSpec((d, 3 * d), lambda i: (0, 0)),         # w_qkv (resident)
            pl.BlockSpec((d, d), lambda i: (0, 0)),             # w_o   (resident)
            pl.BlockSpec((1, d), lambda i: (0, 0)),             # b_o
            pl.BlockSpec((1, d), lambda i: (0, 0)),             # ln2 gamma
            pl.BlockSpec((1, d), lambda i: (0, 0)),             # ln2 beta
            pl.BlockSpec((d, hidden), lambda i: (0, 0)),        # w1    (resident)
            pl.BlockSpec((1, hidden), lambda i: (0, 0)),        # b1
            pl.BlockSpec((hidden, d), lambda i: (0, 0)),        # w2    (resident)
            pl.BlockSpec((1, d), lambda i: (0, 0)),             # b2
        ],
        out_specs=pl.BlockSpec((1, s, d), lambda i: (i, 0, 0)),
        compiler_params=pltpu.CompilerParams(
            dimension_semantics=("parallel",),
            vmem_limit_bytes=_VMEM_LIMIT),
    )(x, lyr["ln1_g"], lyr["ln1_b"], lyr["w_qkv"], lyr["w_o"], lyr["b_o"],
      lyr["ln2_g"], lyr["ln2_b"], lyr["w1"], lyr["b1"], lyr["w2"], lyr["b2"])


# ---------------------------------------------------------------------------
# Kernel 2: plain LayerNorm (final norm_out), tiled over flattened token axis.
# ---------------------------------------------------------------------------
def _ln_kernel(x_ref, g_ref, b_ref, o_ref):
    xf = x_ref[...].astype(jnp.float32)
    o_ref[...] = _ln_f32(xf, g_ref, b_ref).astype(o_ref.dtype)


def layer_norm(x, ln_g, ln_b, block_m=512):
    n, s, d = x.shape
    m = n * s
    tm = block_m if m >= block_m else _round_up(m, 8)
    m_pad = _round_up(m, tm)
    x2d = x.reshape(m, d)
    if m_pad != m:
        x2d = jnp.pad(x2d, ((0, m_pad - m), (0, 0)))   # tail rows sliced off after

    out = pl.pallas_call(
        _ln_kernel,
        out_shape=jax.ShapeDtypeStruct((m_pad, d), x.dtype),
        grid=(m_pad // tm,),
        in_specs=[
            pl.BlockSpec((tm, d), lambda i: (i, 0)),
            pl.BlockSpec((1, d), lambda i: (0, 0)),
            pl.BlockSpec((1, d), lambda i: (0, 0)),
        ],
        out_specs=pl.BlockSpec((tm, d), lambda i: (i, 0)),
        compiler_params=pltpu.CompilerParams(
            dimension_semantics=("parallel",),
            vmem_limit_bytes=_VMEM_LIMIT),
    )(x2d, ln_g, ln_b)
    return out[:m].reshape(n, s, d)


# ---------------------------------------------------------------------------
# Full TransRtgDet forward.
# ---------------------------------------------------------------------------
def trans_rtg_det_forward(params, rtg, obs, act):
    """rtg/obs/act: (n, t, hid_dim) token embeddings (the torch in-place interleave
    requires embedded rtg/act despite the (n, t) docstring). Returns (n, 3t, hid_dim)."""
    n, t, d = obs.shape
    heads = d // 64                              # num_heads = hid_dim // 64 (module ctor)
    pe = params["pos_embed"][:, :t, :]
    # Token interleave + pos-embed: x[:, 3i]=rtg, x[:, 3i+1]=obs, x[:, 3i+2]=act.
    # TODO(synk): pure layout op left to XLA (stack+reshape) rather than a Pallas scatter.
    x = jnp.stack([rtg + pe, obs + pe, act + pe], axis=2).reshape(n, 3 * t, d)
    # TODO(synk): attn_mask (masked_fill) branch not implemented; forward default is None.
    for lyr in params["layers"]:
        x = transformer_layer(x, lyr, heads)
    return layer_norm(x, params["ln_out_g"], params["ln_out_b"])


# ---------------------------------------------------------------------------
# Parameter construction (synthetic, deterministic).
# ---------------------------------------------------------------------------
def sincos_pos_embed(dim, length):
    pos = jnp.arange(length, dtype=jnp.float32)
    omega = jnp.arange(dim // 2, dtype=jnp.float32) / (dim / 2.0)
    omega = 1.0 / (10000.0 ** omega)
    out = pos[:, None] * omega[None, :]
    return jnp.concatenate([jnp.sin(out), jnp.cos(out)], axis=-1)[None]   # (1, L, dim)


def _xavier(key, shape, dtype):
    bound = (6.0 / (shape[0] + shape[1])) ** 0.5
    return jax.random.uniform(key, shape, dtype, -bound, bound)


def init_params(key, hid_dim, num_layers, max_t_step=256, dtype=jnp.float32):
    mlp_dim = hid_dim * 4
    layers = []
    for _ in range(num_layers):
        key, k1, k2, k3, k4 = jax.random.split(key, 5)
        layers.append(dict(
            ln1_g=jnp.ones((1, hid_dim), dtype), ln1_b=jnp.zeros((1, hid_dim), dtype),
            w_qkv=_xavier(k1, (hid_dim, 3 * hid_dim), dtype),
            w_o=_xavier(k2, (hid_dim, hid_dim), dtype),
            b_o=jnp.zeros((1, hid_dim), dtype),
            ln2_g=jnp.ones((1, hid_dim), dtype), ln2_b=jnp.zeros((1, hid_dim), dtype),
            w1=_xavier(k3, (hid_dim, mlp_dim), dtype),
            b1=jnp.zeros((1, mlp_dim), dtype),
            w2=_xavier(k4, (mlp_dim, hid_dim), dtype),
            b2=jnp.zeros((1, hid_dim), dtype),
        ))
    return dict(
        layers=layers,
        ln_out_g=jnp.ones((1, hid_dim), dtype),
        ln_out_b=jnp.zeros((1, hid_dim), dtype),
        pos_embed=sincos_pos_embed(hid_dim, max_t_step).astype(dtype),
    )


# ---------------------------------------------------------------------------
# Pure-JAX reference (same math) for the correctness check.
# ---------------------------------------------------------------------------
def _layer_norm_ref(x, g, b):
    mu = jnp.mean(x, axis=-1, keepdims=True)
    var = jnp.mean(jnp.square(x - mu), axis=-1, keepdims=True)
    return (x - mu) * jax.lax.rsqrt(var + LN_EPS) * g + b


def reference_forward(params, rtg, obs, act):
    n, t, d = obs.shape
    heads = d // 64
    hd = d // heads
    scale = float(hd) ** -0.5
    pe = params["pos_embed"][:, :t, :]
    x = jnp.stack([rtg + pe, obs + pe, act + pe], axis=2).reshape(n, 3 * t, d)
    s = 3 * t
    for lyr in params["layers"]:
        ln = _layer_norm_ref(x, lyr["ln1_g"], lyr["ln1_b"])
        qkv = ln @ lyr["w_qkv"]
        q, k, v = jnp.split(qkv, 3, axis=-1)
        q = q.reshape(n, s, heads, hd).transpose(0, 2, 1, 3)
        k = k.reshape(n, s, heads, hd).transpose(0, 2, 1, 3)
        v = v.reshape(n, s, heads, hd).transpose(0, 2, 1, 3)
        dots = jnp.einsum("nhqd,nhkd->nhqk", q, k) * scale
        dots = dots - jnp.max(dots, axis=-1, keepdims=True)
        p = jnp.exp(dots)
        attn = p / jnp.sum(p, axis=-1, keepdims=True)
        o = jnp.einsum("nhqk,nhkd->nhqd", attn, v).transpose(0, 2, 1, 3).reshape(n, s, d)
        o = o @ lyr["w_o"] + lyr["b_o"]
        x = o + x
        ln2 = _layer_norm_ref(x, lyr["ln2_g"], lyr["ln2_b"])
        h = ln2 @ lyr["w1"] + lyr["b1"]
        h = 0.5 * h * (1.0 + jax.lax.erf(h * _INV_SQRT2))
        x = h @ lyr["w2"] + lyr["b2"] + x
    return _layer_norm_ref(x, params["ln_out_g"], params["ln_out_b"])


if __name__ == "__main__":
    n, t = 2, 8
    hid_dim, num_layers = 128, 2            # -> num_heads=2, head_dim=64, mlp_dim=512
    key = jax.random.PRNGKey(0)
    k_rtg, k_obs, k_act, k_par = jax.random.split(key, 4)
    rtg = jax.random.normal(k_rtg, (n, t, hid_dim), jnp.float32)
    obs = jax.random.normal(k_obs, (n, t, hid_dim), jnp.float32)
    act = jax.random.normal(k_act, (n, t, hid_dim), jnp.float32)
    params = init_params(k_par, hid_dim, num_layers)

    fwd = jax.jit(trans_rtg_det_forward)
    out = jax.block_until_ready(fwd(params, rtg, obs, act))
    assert out.shape == (n, 3 * t, hid_dim)

    with jax.default_matmul_precision("highest"):
        ref = jax.block_until_ready(reference_forward(params, rtg, obs, act))
    max_err = float(jnp.max(jnp.abs(out - ref)))
    assert max_err < 5e-2, f"mismatch vs reference: max abs err {max_err}"
    print("KERNEL_OK")
</pallas_src>

<mosaic_0001>
module attributes {stable_mosaic.version = 11 : i64} {
  func.func @_ln_kernel(%arg0: i32, %arg1: memref<48x128xf32, #tpu.memory_space<vmem>>, %arg2: memref<1x128xf32, #tpu.memory_space<vmem>>, %arg3: memref<1x128xf32, #tpu.memory_space<vmem>>, %arg4: memref<48x128xf32, #tpu.memory_space<vmem>>) attributes {dimension_semantics = [#tpu.dimension_semantics<parallel>], iteration_bounds = array<i64: 1>, scalar_prefetch = 0 : i64, scratch_operands = 0 : i64, tpu.core_type = #tpu.core_type<tc>, window_params = [{transform_indices = @transform_0, window_bounds = array<i64: 48, 128>}, {pipeline_mode = #tpu.pipeline_mode<synchronous>, transform_indices = @transform_1, window_bounds = array<i64: 1, 128>}, {pipeline_mode = #tpu.pipeline_mode<synchronous>, transform_indices = @transform_2, window_bounds = array<i64: 1, 128>}, {transform_indices = @transform_3, window_bounds = array<i64: 48, 128>}]} {
    %c0 = arith.constant 0 : index
    %c0_0 = arith.constant 0 : index
    %0 = vector.load %arg1[%c0, %c0_0] : memref<48x128xf32, #tpu.memory_space<vmem>>, vector<48x128xf32>
    %cst = arith.constant dense<0.000000e+00> : vector<48xf32>
    %1 = vector.multi_reduction <add>, %0, %cst [1] : vector<48x128xf32> to vector<48xf32>
    %2 = vector.shape_cast %1 : vector<48xf32> to vector<48x1xf32>
    %cst_1 = arith.constant 1.280000e+02 : f32
    %3 = vector.broadcast %cst_1 : f32 to vector<48x1xf32>
    %4 = arith.divf %2, %3 : vector<48x1xf32>
    %5 = vector.broadcast %4 : vector<48x1xf32> to vector<48x128xf32>
    %6 = arith.subf %0, %5 : vector<48x128xf32>
    %7 = arith.mulf %6, %6 : vector<48x128xf32>
    %cst_2 = arith.constant dense<0.000000e+00> : vector<48xf32>
    %8 = vector.multi_reduction <add>, %7, %cst_2 [1] : vector<48x128xf32> to vector<48xf32>
    %9 = vector.shape_cast %8 : vector<48xf32> to vector<48x1xf32>
    %cst_3 = arith.constant 1.280000e+02 : f32
    %10 = vector.broadcast %cst_3 : f32 to vector<48x1xf32>
    %11 = arith.divf %9, %10 : vector<48x1xf32>
    %12 = vector.broadcast %4 : vector<48x1xf32> to vector<48x128xf32>
    %13 = arith.subf %0, %12 : vector<48x128xf32>
    %cst_4 = arith.constant 9.99999974E-6 : f32
    %14 = vector.broadcast %cst_4 : f32 to vector<48x1xf32>
    %15 = arith.addf %11, %14 : vector<48x1xf32>
    %16 = math.rsqrt %15 : vector<48x1xf32>
    %17 = vector.broadcast %16 : vector<48x1xf32> to vector<48x128xf32>
    %18 = arith.mulf %13, %17 : vector<48x128xf32>
    %c0_5 = arith.constant 0 : index
    %c0_6 = arith.constant 0 : index
    %19 = vector.load %arg2[%c0_5, %c0_6] : memref<1x128xf32, #tpu.memory_space<vmem>>, vector<1x128xf32>
    %20 = vector.broadcast %19 : vector<1x128xf32> to vector<48x128xf32>
    %21 = arith.mulf %18, %20 : vector<48x128xf32>
    %c0_7 = arith.constant 0 : index
    %c0_8 = arith.constant 0 : index
    %22 = vector.load %arg3[%c0_7, %c0_8] : memref<1x128xf32, #tpu.memory_space<vmem>>, vector<1x128xf32>
    %23 = vector.broadcast %22 : vector<1x128xf32> to vector<48x128xf32>
    %24 = arith.addf %21, %23 : vector<48x128xf32>
    %c0_9 = arith.constant 0 : index
    %c0_10 = arith.constant 0 : index
    %25 = vector.load %arg4[%c0_9, %c0_10] : memref<48x128xf32, #tpu.memory_space<vmem>>, vector<48x128xf32>
    tpu.vector_store %arg4[%c0_9, %c0_10], %24 {strides = array<i32>} : memref<48x128xf32, #tpu.memory_space<vmem>>, vector<48x128xf32>,
    return
  }
  func.func @transform_0(%arg0: i32) -> (i32, i32) {
    %c0_i32 = arith.constant 0 : i32
    %c0_i32_0 = arith.constant 0 : i32
    return %arg0, %c0_i32 : i32, i32
  }
  func.func @transform_1(%arg0: i32) -> (i32, i32) {
    %c0_i32 = arith.constant 0 : i32
    %c0_i32_0 = arith.constant 0 : i32
    %c0_i32_1 = arith.constant 0 : i32
    return %c0_i32, %c0_i32_0 : i32, i32
  }
  func.func @transform_2(%arg0: i32) -> (i32, i32) {
    %c0_i32 = arith.constant 0 : i32
    %c0_i32_0 = arith.constant 0 : i32
    %c0_i32_1 = arith.constant 0 : i32
    return %c0_i32, %c0_i32_0 : i32, i32
  }
  func.func @transform_3(%arg0: i32) -> (i32, i32) {
    %c0_i32 = arith.constant 0 : i32
    %c0_i32_0 = arith.constant 0 : i32
    return %arg0, %c0_i32 : i32, i32
  }
}

module attributes {stable_mosaic.version = 11 : i64} {
  func.func @_layer_kernel(%arg0: i32, %arg1: memref<1x24x128xf32, #tpu.memory_space<vmem>>, %arg2: memref<1x128xf32, #tpu.memory_space<vmem>>, %arg3: memref<1x128xf32, #tpu.memory_space<vmem>>, %arg4: memref<128x384xf32, #tpu.memory_space<vmem>>, %arg5: memref<128x128xf32, #tpu.memory_space<vmem>>, %arg6: memref<1x128xf32, #tpu.memory_space<vmem>>, %arg7: memref<1x128xf32, #tpu.memory_space<vmem>>, %arg8: memref<1x128xf32, #tpu.memory_space<vmem>>, %arg9: memref<128x512xf32, #tpu.memory_space<vmem>>, %arg10: memref<1x512xf32, #tpu.memory_space<vmem>>, %arg11: memref<512x128xf32, #tpu.memory_space<vmem>>, %arg12: memref<1x128xf32, #tpu.memory_space<vmem>>, %arg13: memref<1x24x128xf32, #tpu.memory_space<vmem>>) attributes {dimension_semantics = [#tpu.dimension_semantics<parallel>], iteration_bounds = array<i64: 2>, scalar_prefetch = 0 : i64, scratch_operands = 0 : i64, tpu.core_type = #tpu.core_type<tc>, window_params = [{transform_indices = @transform_0, window_bounds = array<i64: 1, 24, 128>}, {pipeline_mode = #tpu.pipeline_mode<synchronous>, transform_indices = @transform_1, window_bounds = array<i64: 1, 128>}, {pipeline_mode = #tpu.pipeline_mode<synchronous>, transform_indices = @transform_2, window_bounds = array<i64: 1, 128>}, {pipeline_mode = #tpu.pipeline_mode<synchronous>, transform_indices = @transform_3, window_bounds = array<i64: 128, 384>}, {pipeline_mode = #tpu.pipeline_mode<synchronous>, transform_indices = @transform_4, window_bounds = array<i64: 128, 128>}, {pipeline_mode = #tpu.pipeline_mode<synchronous>, transform_indices = @transform_5, window_bounds = array<i64: 1, 128>}, {pipeline_mode = #tpu.pipeline_mode<synchronous>, transform_indices = @transform_6, window_bounds = array<i64: 1, 128>}, {pipeline_mode = #tpu.pipeline_mode<synchronous>, transform_indices = @transform_7, window_bounds = array<i64: 1, 128>}, {pipeline_mode = #tpu.pipeline_mode<synchronous>, transform_indices = @transform_8, window_bounds = array<i64: 128, 512>}, {pipeline_mode = #tpu.pipeline_mode<synchronous>, transform_indices = @transform_9, window_bounds = array<i64: 1, 512>}, {pipeline_mode = #tpu.pipeline_mode<synchronous>, transform_indices = @transform_10, window_bounds = array<i64: 512, 128>}, {pipeline_mode = #tpu.pipeline_mode<synchronous>, transform_indices = @transform_11, window_bounds = array<i64: 1, 128>}, {transform_indices = @transform_12, window_bounds = array<i64: 1, 24, 128>}]} {
    %c0 = arith.constant 0 : index
    %c0_0 = arith.constant 0 : index
    %c0_1 = arith.constant 0 : index
    %0 = vector.load %arg1[%c0, %c0_0, %c0_1] : memref<1x24x128xf32, #tpu.memory_space<vmem>>, vector<1x24x128xf32>
    %1 = vector.shape_cast %0 : vector<1x24x128xf32> to vector<24x128xf32>
    %cst = arith.constant dense<0.000000e+00> : vector<24xf32>
    %2 = vector.multi_reduction <add>, %1, %cst [1] : vector<24x128xf32> to vector<24xf32>
    %3 = vector.shape_cast %2 : vector<24xf32> to vector<24x1xf32>
    %cst_2 = arith.constant 1.280000e+02 : f32
    %4 = vector.broadcast %cst_2 : f32 to vector<24x1xf32>
    %5 = arith.divf %3, %4 : vector<24x1xf32>
    %6 = vector.broadcast %5 : vector<24x1xf32> to vector<24x128xf32>
    %7 = arith.subf %1, %6 : vector<24x128xf32>
    %8 = arith.mulf %7, %7 : vector<24x128xf32>
    %cst_3 = arith.constant dense<0.000000e+00> : vector<24xf32>
    %9 = vector.multi_reduction <add>, %8, %cst_3 [1] : vector<24x128xf32> to vector<24xf32>
    %10 = vector.shape_cast %9 : vector<24xf32> to vector<24x1xf32>
    %cst_4 = arith.constant 1.280000e+02 : f32
    %11 = vector.broadcast %cst_4 : f32 to vector<24x1xf32>
    %12 = arith.divf %10, %11 : vector<24x1xf32>
    %13 = vector.broadcast %5 : vector<24x1xf32> to vector<24x128xf32>
    %14 = arith.subf %1, %13 : vector<24x128xf32>
    %cst_5 = arith.constant 9.99999974E-6 : f32
    %15 = vector.broadcast %cst_5 : f32 to vector<24x1xf32>
    %16 = arith.addf %12, %15 : vector<24x1xf32>
    %17 = math.rsqrt %16 : vector<24x1xf32>
    %18 = vector.broadcast %17 : vector<24x1xf32> to vector<24x128xf32>
    %19 = arith.mulf %14, %18 : vector<24x128xf32>
    %c0_6 = arith.constant 0 : index
    %c0_7 = arith.constant 0 : index
    %20 = vector.load %arg2[%c0_6, %c0_7] : memref<1x128xf32, #tpu.memory_space<vmem>>, vector<1x128xf32>
    %21 = vector.broadcast %20 : vector<1x128xf32> to vector<24x128xf32>
    %22 = arith.mulf %19, %21 : vector<24x128xf32>
    %c0_8 = arith.constant 0 : index
    %c0_9 = arith.constant 0 : index
    %23 = vector.load %arg3[%c0_8, %c0_9] : memref<1x128xf32, #tpu.memory_space<vmem>>, vector<1x128xf32>
    %24 = vector.broadcast %23 : vector<1x128xf32> to vector<24x128xf32>
    %25 = arith.addf %22, %24 : vector<24x128xf32>
    %c0_10 = arith.constant 0 : index
    %c0_11 = arith.constant 0 : index
    %26 = vector.load %arg4[%c0_10, %c0_11] : memref<128x384xf32, #tpu.memory_space<vmem>>, vector<128x384xf32>
    %cst_12 = arith.constant dense<0.000000e+00> : vector<24x384xf32>
    %27 = tpu.matmul %25, %26, %cst_12 {dimension_numbers = #tpu.dot_dimension_numbers<[1], [0], [0], [1], [0, 0, 1, 1], [], []>} : vector<24x128xf32>, vector<128x384xf32>, vector<24x384xf32> -> vector<24x384xf32>
    %28 = vector.extract_strided_slice %27 {offsets = [0, 0], sizes = [24, 128], strides = [1, 1]} : vector<24x384xf32> to vector<24x128xf32>
    %29 = vector.extract_strided_slice %27 {offsets = [0, 128], sizes = [24, 128], strides = [1, 1]} : vector<24x384xf32> to vector<24x128xf32>
    %30 = vector.extract_strided_slice %27 {offsets = [0, 256], sizes = [24, 128], strides = [1, 1]} : vector<24x384xf32> to vector<24x128xf32>
    %31 = vector.extract_strided_slice %28 {offsets = [0, 0], sizes = [24, 64], strides = [1, 1]} : vector<24x128xf32> to vector<24x64xf32>
    %32 = vector.extract_strided_slice %29 {offsets = [0, 0], sizes = [24, 64], strides = [1, 1]} : vector<24x128xf32> to vector<24x64xf32>
    %33 = vector.extract_strided_slice %30 {offsets = [0, 0], sizes = [24, 64], strides = [1, 1]} : vector<24x128xf32> to vector<24x64xf32>
    %cst_13 = arith.constant dense<0.000000e+00> : vector<24x24xf32>
    %34 = tpu.matmul %31, %32, %cst_13 {dimension_numbers = #tpu.dot_dimension_numbers<[1], [1], [0], [0], [0, 0, 1, 0], [], []>} : vector<24x64xf32>, vector<24x64xf32>, vector<24x24xf32> -> vector<24x24xf32>
    %cst_14 = arith.constant 1.250000e-01 : f32
    %35 = vector.broadcast %cst_14 : f32 to vector<24x24xf32>
    %36 = arith.mulf %34, %35 : vector<24x24xf32>
    %cst_15 = arith.constant dense<0xFF800000> : vector<24xf32>
    %37 = vector.multi_reduction <maximumf>, %36, %cst_15 [1] : vector<24x24xf32> to vector<24xf32>
    %38 = vector.shape_cast %37 : vector<24xf32> to vector<24x1xf32>
    %39 = vector.broadcast %38 : vector<24x1xf32> to vector<24x24xf32>
    %40 = arith.subf %36, %39 : vector<24x24xf32>
    %41 = math.exp %40 : vector<24x24xf32>
    %cst_16 = arith.constant dense<0.000000e+00> : vector<24xf32>
    %42 = vector.multi_reduction <add>, %41, %cst_16 [1] : vector<24x24xf32> to vector<24xf32>
    %43 = vector.shape_cast %42 : vector<24xf32> to vector<24x1xf32>
    %44 = tpu.reciprocal %43 {approx = true} : vector<24x1xf32> -> vector<24x1xf32>
    %45 = vector.broadcast %44 : vector<24x1xf32> to vector<24x24xf32>
    %46 = arith.mulf %41, %45 : vector<24x24xf32>
    %cst_17 = arith.constant dense<0.000000e+00> : vector<24x64xf32>
    %47 = tpu.matmul %46, %33, %cst_17 {dimension_numbers = #tpu.dot_dimension_numbers<[1], [0], [0], [1], [0, 0, 1, 1], [], []>} : vector<24x24xf32>, vector<24x64xf32>, vector<24x64xf32> -> vector<24x64xf32>
    %48 = vector.extract_strided_slice %28 {offsets = [0, 64], sizes = [24, 64], strides = [1, 1]} : vector<24x128xf32> to vector<24x64xf32>
    %49 = vector.extract_strided_slice %29 {offsets = [0, 64], sizes = [24, 64], strides = [1, 1]} : vector<24x128xf32> to vector<24x64xf32>
    %50 = vector.extract_strided_slice %30 {offsets = [0, 64], sizes = [24, 64], strides = [1, 1]} : vector<24x128xf32> to vector<24x64xf32>
    %cst_18 = arith.constant dense<0.000000e+00> : vector<24x24xf32>
    %51 = tpu.matmul %48, %49, %cst_18 {dimension_numbers = #tpu.dot_dimension_numbers<[1], [1], [0], [0], [0, 0, 1, 0], [], []>} : vector<24x64xf32>, vector<24x64xf32>, vector<24x24xf32> -> vector<24x24xf32>
    %cst_19 = arith.constant 1.250000e-01 : f32
    %52 = vector.broadcast %cst_19 : f32 to vector<24x24xf32>
    %53 = arith.mulf %51, %52 : vector<24x24xf32>
    %cst_20 = arith.constant dense<0xFF800000> : vector<24xf32>
    %54 = vector.multi_reduction <maximumf>, %53, %cst_20 [1] : vector<24x24xf32> to vector<24xf32>
    %55 = vector.shape_cast %54 : vector<24xf32> to vector<24x1xf32>
    %56 = vector.broadcast %55 : vector<24x1xf32> to vector<24x24xf32>
    %57 = arith.subf %53, %56 : vector<24x24xf32>
    %58 = math.exp %57 : vector<24x24xf32>
    %cst_21 = arith.constant dense<0.000000e+00> : vector<24xf32>
    %59 = vector.multi_reduction <add>, %58, %cst_21 [1] : vector<24x24xf32> to vector<24xf32>
    %60 = vector.shape_cast %59 : vector<24xf32> to vector<24x1xf32>
    %61 = tpu.reciprocal %60 {approx = true} : vector<24x1xf32> -> vector<24x1xf32>
    %62 = vector.broadcast %61 : vector<24x1xf32> to vector<24x24xf32>
    %63 = arith.mulf %58, %62 : vector<24x24xf32>
    %cst_22 = arith.constant dense<0.000000e+00> : vector<24x64xf32>
    %64 = tpu.matmul %63, %50, %cst_22 {dimension_numbers = #tpu.dot_dimension_numbers<[1], [0], [0], [1], [0, 0, 1, 1], [], []>} : vector<24x24xf32>, vector<24x64xf32>, vector<24x64xf32> -> vector<24x64xf32>
    %65 = tpu.concatenate %47, %64 in 1 : vector<24x64xf32>, vector<24x64xf32> -> vector<24x128xf32>
    %c0_23 = arith.constant 0 : index
    %c0_24 = arith.constant 0 : index
    %66 = vector.load %arg5[%c0_23, %c0_24] : memref<128x128xf32, #tpu.memory_space<vmem>>, vector<128x128xf32>
    %cst_25 = arith.constant dense<0.000000e+00> : vector<24x128xf32>
    %67 = tpu.matmul %65, %66, %cst_25 {dimension_numbers = #tpu.dot_dimension_numbers<[1], [0], [0], [1], [0, 0, 1, 1], [], []>} : vector<24x128xf32>, vector<128x128xf32>, vector<24x128xf32> -> vector<24x128xf32>
    %c0_26 = arith.constant 0 : index
    %c0_27 = arith.constant 0 : index
    %68 = vector.load %arg6[%c0_26, %c0_27] : memref<1x128xf32, #tpu.memory_space<vmem>>, vector<1x128xf32>
    %69 = vector.broadcast %68 : vector<1x128xf32> to vector<24x128xf32>
    %70 = arith.addf %67, %69 : vector<24x128xf32>
    %71 = arith.addf %1, %70 : vector<24x128xf32>
    %cst_28 = arith.constant dense<0.000000e+00> : vector<24xf32>
    %72 = vector.multi_reduction <add>, %71, %cst_28 [1] : vector<24x128xf32> to vector<24xf32>
    %73 = vector.shape_cast %72 : vector<24xf32> to vector<24x1xf32>
    %cst_29 = arith.constant 1.280000e+02 : f32
    %74 = vector.broadcast %cst_29 : f32 to vector<24x1xf32>
    %75 = arith.divf %73, %74 : vector<24x1xf32>
    %76 = vector.broadcast %75 : vector<24x1xf32> to vector<24x128xf32>
    %77 = arith.subf %71, %76 : vector<24x128xf32>
    %78 = arith.mulf %77, %77 : vector<24x128xf32>
    %cst_30 = arith.constant dense<0.000000e+00> : vector<24xf32>
    %79 = vector.multi_reduction <add>, %78, %cst_30 [1] : vector<24x128xf32> to vector<24xf32>
    %80 = vector.shape_cast %79 : vector<24xf32> to vector<24x1xf32>
    %cst_31 = arith.constant 1.280000e+02 : f32
    %81 = vector.broadcast %cst_31 : f32 to vector<24x1xf32>
    %82 = arith.divf %80, %81 : vector<24x1xf32>
    %83 = vector.broadcast %75 : vector<24x1xf32> to vector<24x128xf32>
    %84 = arith.subf %71, %83 : vector<24x128xf32>
    %cst_32 = arith.constant 9.99999974E-6 : f32
    %85 = vector.broadcast %cst_32 : f32 to vector<24x1xf32>
    %86 = arith.addf %82, %85 : vector<24x1xf32>
    %87 = math.rsqrt %86 : vector<24x1xf32>
    %88 = vector.broadcast %87 : vector<24x1xf32> to vector<24x128xf32>
    %89 = arith.mulf %84, %88 : vector<24x128xf32>
    %c0_33 = arith.constant 0 : index
    %c0_34 = arith.constant 0 : index
    %90 = vector.load %arg7[%c0_33, %c0_34] : memref<1x128xf32, #tpu.memory_space<vmem>>, vector<1x128xf32>
    %91 = vector.broadcast %90 : vector<1x128xf32> to vector<24x128xf32>
    %92 = arith.mulf %89, %91 : vector<24x128xf32>
    %c0_35 = arith.constant 0 : index
    %c0_36 = arith.constant 0 : index
    %93 = vector.load %arg8[%c0_35, %c0_36] : memref<1x128xf32, #tpu.memory_space<vmem>>, vector<1x128xf32>
    %94 = vector.broadcast %93 : vector<1x128xf32> to vector<24x128xf32>
    %95 = arith.addf %92, %94 : vector<24x128xf32>
    %c0_37 = arith.constant 0 : index
    %c0_38 = arith.constant 0 : index
    %96 = vector.load %arg9[%c0_37, %c0_38] : memref<128x512xf32, #tpu.memory_space<vmem>>, vector<128x512xf32>
    %cst_39 = arith.constant dense<0.000000e+00> : vector<24x512xf32>
    %97 = tpu.matmul %95, %96, %cst_39 {dimension_numbers = #tpu.dot_dimension_numbers<[1], [0], [0], [1], [0, 0, 1, 1], [], []>} : vector<24x128xf32>, vector<128x512xf32>, vector<24x512xf32> -> vector<24x512xf32>
    %c0_40 = arith.constant 0 : index
    %c0_41 = arith.constant 0 : index
    %98 = vector.load %arg10[%c0_40, %c0_41] : memref<1x512xf32, #tpu.memory_space<vmem>>, vector<1x512xf32>
    %99 = vector.broadcast %98 : vector<1x512xf32> to vector<24x512xf32>
    %100 = arith.addf %97, %99 : vector<24x512xf32>
    %cst_42 = arith.constant 5.000000e-01 : f32
    %101 = vector.broadcast %cst_42 : f32 to vector<24x512xf32>
    %102 = arith.mulf %101, %100 : vector<24x512xf32>
    %cst_43 = arith.constant 0.707106769 : f32
    %103 = vector.broadcast %cst_43 : f32 to vector<24x512xf32>
    %104 = arith.mulf %100, %103 : vector<24x512xf32>
    %105 = math.erf %104 : vector<24x512xf32>
    %cst_44 = arith.constant 1.000000e+00 : f32
    %106 = vector.broadcast %cst_44 : f32 to vector<24x512xf32>
    %107 = arith.addf %106, %105 : vector<24x512xf32>
    %108 = arith.mulf %102, %107 : vector<24x512xf32>
    %c0_45 = arith.constant 0 : index
    %c0_46 = arith.constant 0 : index
    %109 = vector.load %arg11[%c0_45, %c0_46] : memref<512x128xf32, #tpu.memory_space<vmem>>, vector<512x128xf32>
    %cst_47 = arith.constant dense<0.000000e+00> : vector<24x128xf32>
    %110 = tpu.matmul %108, %109, %cst_47 {dimension_numbers = #tpu.dot_dimension_numbers<[1], [0], [0], [1], [0, 0, 1, 1], [], []>} : vector<24x512xf32>, vector<512x128xf32>, vector<24x128xf32> -> vector<24x128xf32>
    %c0_48 = arith.constant 0 : index
    %c0_49 = arith.constant 0 : index
    %111 = vector.load %arg12[%c0_48, %c0_49] : memref<1x128xf32, #tpu.memory_space<vmem>>, vector<1x128xf32>
    %112 = vector.broadcast %111 : vector<1x128xf32> to vector<24x128xf32>
    %113 = arith.addf %110, %112 : vector<24x128xf32>
    %114 = arith.addf %71, %113 : vector<24x128xf32>
    %c0_50 = arith.constant 0 : index
    %c0_51 = arith.constant 0 : index
    %c0_52 = arith.constant 0 : index
    %115 = vector.load %arg13[%c0_50, %c0_51, %c0_52] : memref<1x24x128xf32, #tpu.memory_space<vmem>>, vector<1x24x128xf32>
    %116 = vector.shape_cast %115 : vector<1x24x128xf32> to vector<24x128xf32>
    %117 = vector.shape_cast %114 : vector<24x128xf32> to vector<1x24x128xf32>
    tpu.vector_store %arg13[%c0_50, %c0_51, %c0_52], %117 {strides = array<i32>} : memref<1x24x128xf32, #tpu.memory_space<vmem>>, vector<1x24x128xf32>,
    return
  }
  func.func @transform_0(%arg0: i32) -> (i32, i32, i32) {
    %c0_i32 = arith.constant 0 : i32
    %c0_i32_0 = arith.constant 0 : i32
    %c0_i32_1 = arith.constant 0 : i32
    return %arg0, %c0_i32, %c0_i32_0 : i32, i32, i32
  }
  func.func @transform_1(%arg0: i32) -> (i32, i32) {
    %c0_i32 = arith.constant 0 : i32
    %c0_i32_0 = arith.constant 0 : i32
    %c0_i32_1 = arith.constant 0 : i32
    return %c0_i32, %c0_i32_0 : i32, i32
  }
  func.func @transform_2(%arg0: i32) -> (i32, i32) {
    %c0_i32 = arith.constant 0 : i32
    %c0_i32_0 = arith.constant 0 : i32
    %c0_i32_1 = arith.constant 0 : i32
    return %c0_i32, %c0_i32_0 : i32, i32
  }
  func.func @transform_3(%arg0: i32) -> (i32, i32) {
    %c0_i32 = arith.constant 0 : i32
    %c0_i32_0 = arith.constant 0 : i32
    %c0_i32_1 = arith.constant 0 : i32
    return %c0_i32, %c0_i32_0 : i32, i32
  }
  func.func @transform_4(%arg0: i32) -> (i32, i32) {
    %c0_i32 = arith.constant 0 : i32
    %c0_i32_0 = arith.constant 0 : i32
    %c0_i32_1 = arith.constant 0 : i32
    return %c0_i32, %c0_i32_0 : i32, i32
  }
  func.func @transform_5(%arg0: i32) -> (i32, i32) {
    %c0_i32 = arith.constant 0 : i32
    %c0_i32_0 = arith.constant 0 : i32
    %c0_i32_1 = arith.constant 0 : i32
    return %c0_i32, %c0_i32_0 : i32, i32
  }
  func.func @transform_6(%arg0: i32) -> (i32, i32) {
    %c0_i32 = arith.constant 0 : i32
    %c0_i32_0 = arith.constant 0 : i32
    %c0_i32_1 = arith.constant 0 : i32
    return %c0_i32, %c0_i32_0 : i32, i32
  }
  func.func @transform_7(%arg0: i32) -> (i32, i32) {
    %c0_i32 = arith.constant 0 : i32
    %c0_i32_0 = arith.constant 0 : i32
    %c0_i32_1 = arith.constant 0 : i32
    return %c0_i32, %c0_i32_0 : i32, i32
  }
  func.func @transform_8(%arg0: i32) -> (i32, i32) {
    %c0_i32 = arith.constant 0 : i32
    %c0_i32_0 = arith.constant 0 : i32
    %c0_i32_1 = arith.constant 0 : i32
    return %c0_i32, %c0_i32_0 : i32, i32
  }
  func.func @transform_9(%arg0: i32) -> (i32, i32) {
    %c0_i32 = arith.constant 0 : i32
    %c0_i32_0 = arith.constant 0 : i32
    %c0_i32_1 = arith.constant 0 : i32
    return %c0_i32, %c0_i32_0 : i32, i32
  }
  func.func @transform_10(%arg0: i32) -> (i32, i32) {
    %c0_i32 = arith.constant 0 : i32
    %c0_i32_0 = arith.constant 0 : i32
    %c0_i32_1 = arith.constant 0 : i32
    return %c0_i32, %c0_i32_0 : i32, i32
  }
  func.func @transform_11(%arg0: i32) -> (i32, i32) {
    %c0_i32 = arith.constant 0 : i32
    %c0_i32_0 = arith.constant 0 : i32
    %c0_i32_1 = arith.constant 0 : i32
    return %c0_i32, %c0_i32_0 : i32, i32
  }
  func.func @transform_12(%arg0: i32) -> (i32, i32, i32) {
    %c0_i32 = arith.constant 0 : i32
    %c0_i32_0 = arith.constant 0 : i32
    %c0_i32_1 = arith.constant 0 : i32
    return %arg0, %c0_i32, %c0_i32_0 : i32, i32, i32
  }
}

module attributes {stable_mosaic.version = 11 : i64} {
  func.func @_layer_kernel(%arg0: i32, %arg1: memref<1x24x128xf32, #tpu.memory_space<vmem>>, %arg2: memref<1x128xf32, #tpu.memory_space<vmem>>, %arg3: memref<1x128xf32, #tpu.memory_space<vmem>>, %arg4: memref<128x384xf32, #tpu.memory_space<vmem>>, %arg5: memref<128x128xf32, #tpu.memory_space<vmem>>, %arg6: memref<1x128xf32, #tpu.memory_space<vmem>>, %arg7: memref<1x128xf32, #tpu.memory_space<vmem>>, %arg8: memref<1x128xf32, #tpu.memory_space<vmem>>, %arg9: memref<128x512xf32, #tpu.memory_space<vmem>>, %arg10: memref<1x512xf32, #tpu.memory_space<vmem>>, %arg11: memref<512x128xf32, #tpu.memory_space<vmem>>, %arg12: memref<1x128xf32, #tpu.memory_space<vmem>>, %arg13: memref<1x24x128xf32, #tpu.memory_space<vmem>>) attributes {dimension_semantics = [#tpu.dimension_semantics<parallel>], iteration_bounds = array<i64: 2>, scalar_prefetch = 0 : i64, scratch_operands = 0 : i64, tpu.core_type = #tpu.core_type<tc>, window_params = [{transform_indices = @transform_0, window_bounds = array<i64: 1, 24, 128>}, {pipeline_mode = #tpu.pipeline_mode<synchronous>, transform_indices = @transform_1, window_bounds = array<i64: 1, 128>}, {pipeline_mode = #tpu.pipeline_mode<synchronous>, transform_indices = @transform_2, window_bounds = array<i64: 1, 128>}, {pipeline_mode = #tpu.pipeline_mode<synchronous>, transform_indices = @transform_3, window_bounds = array<i64: 128, 384>}, {pipeline_mode = #tpu.pipeline_mode<synchronous>, transform_indices = @transform_4, window_bounds = array<i64: 128, 128>}, {pipeline_mode = #tpu.pipeline_mode<synchronous>, transform_indices = @transform_5, window_bounds = array<i64: 1, 128>}, {pipeline_mode = #tpu.pipeline_mode<synchronous>, transform_indices = @transform_6, window_bounds = array<i64: 1, 128>}, {pipeline_mode = #tpu.pipeline_mode<synchronous>, transform_indices = @transform_7, window_bounds = array<i64: 1, 128>}, {pipeline_mode = #tpu.pipeline_mode<synchronous>, transform_indices = @transform_8, window_bounds = array<i64: 128, 512>}, {pipeline_mode = #tpu.pipeline_mode<synchronous>, transform_indices = @transform_9, window_bounds = array<i64: 1, 512>}, {pipeline_mode = #tpu.pipeline_mode<synchronous>, transform_indices = @transform_10, window_bounds = array<i64: 512, 128>}, {pipeline_mode = #tpu.pipeline_mode<synchronous>, transform_indices = @transform_11, window_bounds = array<i64: 1, 128>}, {transform_indices = @transform_12, window_bounds = array<i64: 1, 24, 128>}]} {
    %c0 = arith.constant 0 : index
    %c0_0 = arith.constant 0 : index
    %c0_1 = arith.constant 0 : index
    %0 = vector.load %arg1[%c0, %c0_0, %c0_1] : memref<1x24x128xf32, #tpu.memory_space<vmem>>, vector<1x24x128xf32>
    %1 = vector.shape_cast %0 : vector<1x24x128xf32> to vector<24x128xf32>
    %cst = arith.constant dense<0.000000e+00> : vector<24xf32>
    %2 = vector.multi_reduction <add>, %1, %cst [1] : vector<24x128xf32> to vector<24xf32>
    %3 = vector.shape_cast %2 : vector<24xf32> to vector<24x1xf32>
    %cst_2 = arith.constant 1.280000e+02 : f32
    %4 = vector.broadcast %cst_2 : f32 to vector<24x1xf32>
    %5 = arith.divf %3, %4 : vector<24x1xf32>
    %6 = vector.broadcast %5 : vector<24x1xf32> to vector<24x128xf32>
    %7 = arith.subf %1, %6 : vector<24x128xf32>
    %8 = arith.mulf %7, %7 : vector<24x128xf32>
    %cst_3 = arith.constant dense<0.000000e+00> : vector<24xf32>
    %9 = vector.multi_reduction <add>, %8, %cst_3 [1] : vector<24x128xf32> to vector<24xf32>
    %10 = vector.shape_cast %9 : vector<24xf32> to vector<24x1xf32>
    %cst_4 = arith.constant 1.280000e+02 : f32
    %11 = vector.broadcast %cst_4 : f32 to vector<24x1xf32>
    %12 = arith.divf %10, %11 : vector<24x1xf32>
    %13 = vector.broadcast %5 : vector<24x1xf32> to vector<24x128xf32>
    %14 = arith.subf %1, %13 : vector<24x128xf32>
    %cst_5 = arith.constant 9.99999974E-6 : f32
    %15 = vector.broadcast %cst_5 : f32 to vector<24x1xf32>
    %16 = arith.addf %12, %15 : vector<24x1xf32>
    %17 = math.rsqrt %16 : vector<24x1xf32>
    %18 = vector.broadcast %17 : vector<24x1xf32> to vector<24x128xf32>
    %19 = arith.mulf %14, %18 : vector<24x128xf32>
    %c0_6 = arith.constant 0 : index
    %c0_7 = arith.constant 0 : index
    %20 = vector.load %arg2[%c0_6, %c0_7] : memref<1x128xf32, #tpu.memory_space<vmem>>, vector<1x128xf32>
    %21 = vector.broadcast %20 : vector<1x128xf32> to vector<24x128xf32>
    %22 = arith.mulf %19, %21 : vector<24x128xf32>
    %c0_8 = arith.constant 0 : index
    %c0_9 = arith.constant 0 : index
    %23 = vector.load %arg3[%c0_8, %c0_9] : memref<1x128xf32, #tpu.memory_space<vmem>>, vector<1x128xf32>
    %24 = vector.broadcast %23 : vector<1x128xf32> to vector<24x128xf32>
    %25 = arith.addf %22, %24 : vector<24x128xf32>
    %c0_10 = arith.constant 0 : index
    %c0_11 = arith.constant 0 : index
    %26 = vector.load %arg4[%c0_10, %c0_11] : memref<128x384xf32, #tpu.memory_space<vmem>>, vector<128x384xf32>
    %cst_12 = arith.constant dense<0.000000e+00> : vector<24x384xf32>
    %27 = tpu.matmul %25, %26, %cst_12 {dimension_numbers = #tpu.dot_dimension_numbers<[1], [0], [0], [1], [0, 0, 1, 1], [], []>} : vector<24x128xf32>, vector<128x384xf32>, vector<24x384xf32> -> vector<24x384xf32>
    %28 = vector.extract_strided_slice %27 {offsets = [0, 0], sizes = [24, 128], strides = [1, 1]} : vector<24x384xf32> to vector<24x128xf32>
    %29 = vector.extract_strided_slice %27 {offsets = [0, 128], sizes = [24, 128], strides = [1, 1]} : vector<24x384xf32> to vector<24x128xf32>
    %30 = vector.extract_strided_slice %27 {offsets = [0, 256], sizes = [24, 128], strides = [1, 1]} : vector<24x384xf32> to vector<24x128xf32>
    %31 = vector.extract_strided_slice %28 {offsets = [0, 0], sizes = [24, 64], strides = [1, 1]} : vector<24x128xf32> to vector<24x64xf32>
    %32 = vector.extract_strided_slice %29 {offsets = [0, 0], sizes = [24, 64], strides = [1, 1]} : vector<24x128xf32> to vector<24x64xf32>
    %33 = vector.extract_strided_slice %30 {offsets = [0, 0], sizes = [24, 64], strides = [1, 1]} : vector<24x128xf32> to vector<24x64xf32>
    %cst_13 = arith.constant dense<0.000000e+00> : vector<24x24xf32>
    %34 = tpu.matmul %31, %32, %cst_13 {dimension_numbers = #tpu.dot_dimension_numbers<[1], [1], [0], [0], [0, 0, 1, 0], [], []>} : vector<24x64xf32>, vector<24x64xf32>, vector<24x24xf32> -> vector<24x24xf32>
    %cst_14 = arith.constant 1.250000e-01 : f32
    %35 = vector.broadcast %cst_14 : f32 to vector<24x24xf32>
    %36 = arith.mulf %34, %35 : vector<24x24xf32>
    %cst_15 = arith.constant dense<0xFF800000> : vector<24xf32>
    %37 = vector.multi_reduction <maximumf>, %36, %cst_15 [1] : vector<24x24xf32> to vector<24xf32>
    %38 = vector.shape_cast %37 : vector<24xf32> to vector<24x1xf32>
    %39 = vector.broadcast %38 : vector<24x1xf32> to vector<24x24xf32>
    %40 = arith.subf %36, %39 : vector<24x24xf32>
    %41 = math.exp %40 : vector<24x24xf32>
    %cst_16 = arith.constant dense<0.000000e+00> : vector<24xf32>
    %42 = vector.multi_reduction <add>, %41, %cst_16 [1] : vector<24x24xf32> to vector<24xf32>
    %43 = vector.shape_cast %42 : vector<24xf32> to vector<24x1xf32>
    %44 = tpu.reciprocal %43 {approx = true} : vector<24x1xf32> -> vector<24x1xf32>
    %45 = vector.broadcast %44 : vector<24x1xf32> to vector<24x24xf32>
    %46 = arith.mulf %41, %45 : vector<24x24xf32>
    %cst_17 = arith.constant dense<0.000000e+00> : vector<24x64xf32>
    %47 = tpu.matmul %46, %33, %cst_17 {dimension_numbers = #tpu.dot_dimension_numbers<[1], [0], [0], [1], [0, 0, 1, 1], [], []>} : vector<24x24xf32>, vector<24x64xf32>, vector<24x64xf32> -> vector<24x64xf32>
    %48 = vector.extract_strided_slice %28 {offsets = [0, 64], sizes = [24, 64], strides = [1, 1]} : vector<24x128xf32> to vector<24x64xf32>
    %49 = vector.extract_strided_slice %29 {offsets = [0, 64], sizes = [24, 64], strides = [1, 1]} : vector<24x128xf32> to vector<24x64xf32>
    %50 = vector.extract_strided_slice %30 {offsets = [0, 64], sizes = [24, 64], strides = [1, 1]} : vector<24x128xf32> to vector<24x64xf32>
    %cst_18 = arith.constant dense<0.000000e+00> : vector<24x24xf32>
    %51 = tpu.matmul %48, %49, %cst_18 {dimension_numbers = #tpu.dot_dimension_numbers<[1], [1], [0], [0], [0, 0, 1, 0], [], []>} : vector<24x64xf32>, vector<24x64xf32>, vector<24x24xf32> -> vector<24x24xf32>
    %cst_19 = arith.constant 1.250000e-01 : f32
    %52 = vector.broadcast %cst_19 : f32 to vector<24x24xf32>
    %53 = arith.mulf %51, %52 : vector<24x24xf32>
    %cst_20 = arith.constant dense<0xFF800000> : vector<24xf32>
    %54 = vector.multi_reduction <maximumf>, %53, %cst_20 [1] : vector<24x24xf32> to vector<24xf32>
    %55 = vector.shape_cast %54 : vector<24xf32> to vector<24x1xf32>
    %56 = vector.broadcast %55 : vector<24x1xf32> to vector<24x24xf32>
    %57 = arith.subf %53, %56 : vector<24x24xf32>
    %58 = math.exp %57 : vector<24x24xf32>
    %cst_21 = arith.constant dense<0.000000e+00> : vector<24xf32>
    %59 = vector.multi_reduction <add>, %58, %cst_21 [1] : vector<24x24xf32> to vector<24xf32>
    %60 = vector.shape_cast %59 : vector<24xf32> to vector<24x1xf32>
    %61 = tpu.reciprocal %60 {approx = true} : vector<24x1xf32> -> vector<24x1xf32>
    %62 = vector.broadcast %61 : vector<24x1xf32> to vector<24x24xf32>
    %63 = arith.mulf %58, %62 : vector<24x24xf32>
    %cst_22 = arith.constant dense<0.000000e+00> : vector<24x64xf32>
    %64 = tpu.matmul %63, %50, %cst_22 {dimension_numbers = #tpu.dot_dimension_numbers<[1], [0], [0], [1], [0, 0, 1, 1], [], []>} : vector<24x24xf32>, vector<24x64xf32>, vector<24x64xf32> -> vector<24x64xf32>
    %65 = tpu.concatenate %47, %64 in 1 : vector<24x64xf32>, vector<24x64xf32> -> vector<24x128xf32>
    %c0_23 = arith.constant 0 : index
    %c0_24 = arith.constant 0 : index
    %66 = vector.load %arg5[%c0_23, %c0_24] : memref<128x128xf32, #tpu.memory_space<vmem>>, vector<128x128xf32>
    %cst_25 = arith.constant dense<0.000000e+00> : vector<24x128xf32>
    %67 = tpu.matmul %65, %66, %cst_25 {dimension_numbers = #tpu.dot_dimension_numbers<[1], [0], [0], [1], [0, 0, 1, 1], [], []>} : vector<24x128xf32>, vector<128x128xf32>, vector<24x128xf32> -> vector<24x128xf32>
    %c0_26 = arith.constant 0 : index
    %c0_27 = arith.constant 0 : index
    %68 = vector.load %arg6[%c0_26, %c0_27] : memref<1x128xf32, #tpu.memory_space<vmem>>, vector<1x128xf32>
    %69 = vector.broadcast %68 : vector<1x128xf32> to vector<24x128xf32>
    %70 = arith.addf %67, %69 : vector<24x128xf32>
    %71 = arith.addf %1, %70 : vector<24x128xf32>
    %cst_28 = arith.constant dense<0.000000e+00> : vector<24xf32>
    %72 = vector.multi_reduction <add>, %71, %cst_28 [1] : vector<24x128xf32> to vector<24xf32>
    %73 = vector.shape_cast %72 : vector<24xf32> to vector<24x1xf32>
    %cst_29 = arith.constant 1.280000e+02 : f32
    %74 = vector.broadcast %cst_29 : f32 to vector<24x1xf32>
    %75 = arith.divf %73, %74 : vector<24x1xf32>
    %76 = vector.broadcast %75 : vector<24x1xf32> to vector<24x128xf32>
    %77 = arith.subf %71, %76 : vector<24x128xf32>
    %78 = arith.mulf %77, %77 : vector<24x128xf32>
    %cst_30 = arith.constant dense<0.000000e+00> : vector<24xf32>
    %79 = vector.multi_reduction <add>, %78, %cst_30 [1] : vector<24x128xf32> to vector<24xf32>
    %80 = vector.shape_cast %79 : vector<24xf32> to vector<24x1xf32>
    %cst_31 = arith.constant 1.280000e+02 : f32
    %81 = vector.broadcast %cst_31 : f32 to vector<24x1xf32>
    %82 = arith.divf %80, %81 : vector<24x1xf32>
    %83 = vector.broadcast %75 : vector<24x1xf32> to vector<24x128xf32>
    %84 = arith.subf %71, %83 : vector<24x128xf32>
    %cst_32 = arith.constant 9.99999974E-6 : f32
    %85 = vector.broadcast %cst_32 : f32 to vector<24x1xf32>
    %86 = arith.addf %82, %85 : vector<24x1xf32>
    %87 = math.rsqrt %86 : vector<24x1xf32>
    %88 = vector.broadcast %87 : vector<24x1xf32> to vector<24x128xf32>
    %89 = arith.mulf %84, %88 : vector<24x128xf32>
    %c0_33 = arith.constant 0 : index
    %c0_34 = arith.constant 0 : index
    %90 = vector.load %arg7[%c0_33, %c0_34] : memref<1x128xf32, #tpu.memory_space<vmem>>, vector<1x128xf32>
    %91 = vector.broadcast %90 : vector<1x128xf32> to vector<24x128xf32>
    %92 = arith.mulf %89, %91 : vector<24x128xf32>
    %c0_35 = arith.constant 0 : index
    %c0_36 = arith.constant 0 : index
    %93 = vector.load %arg8[%c0_35, %c0_36] : memref<1x128xf32, #tpu.memory_space<vmem>>, vector<1x128xf32>
    %94 = vector.broadcast %93 : vector<1x128xf32> to vector<24x128xf32>
    %95 = arith.addf %92, %94 : vector<24x128xf32>
    %c0_37 = arith.constant 0 : index
    %c0_38 = arith.constant 0 : index
    %96 = vector.load %arg9[%c0_37, %c0_38] : memref<128x512xf32, #tpu.memory_space<vmem>>, vector<128x512xf32>
    %cst_39 = arith.constant dense<0.000000e+00> : vector<24x512xf32>
    %97 = tpu.matmul %95, %96, %cst_39 {dimension_numbers = #tpu.dot_dimension_numbers<[1], [0], [0], [1], [0, 0, 1, 1], [], []>} : vector<24x128xf32>, vector<128x512xf32>, vector<24x512xf32> -> vector<24x512xf32>
    %c0_40 = arith.constant 0 : index
    %c0_41 = arith.constant 0 : index
    %98 = vector.load %arg10[%c0_40, %c0_41] : memref<1x512xf32, #tpu.memory_space<vmem>>, vector<1x512xf32>
    %99 = vector.broadcast %98 : vector<1x512xf32> to vector<24x512xf32>
    %100 = arith.addf %97, %99 : vector<24x512xf32>
    %cst_42 = arith.constant 5.000000e-01 : f32
    %101 = vector.broadcast %cst_42 : f32 to vector<24x512xf32>
    %102 = arith.mulf %101, %100 : vector<24x512xf32>
    %cst_43 = arith.constant 0.707106769 : f32
    %103 = vector.broadcast %cst_43 : f32 to vector<24x512xf32>
    %104 = arith.mulf %100, %103 : vector<24x512xf32>
    %105 = math.erf %104 : vector<24x512xf32>
    %cst_44 = arith.constant 1.000000e+00 : f32
    %106 = vector.broadcast %cst_44 : f32 to vector<24x512xf32>
    %107 = arith.addf %106, %105 : vector<24x512xf32>
    %108 = arith.mulf %102, %107 : vector<24x512xf32>
    %c0_45 = arith.constant 0 : index
    %c0_46 = arith.constant 0 : index
    %109 = vector.load %arg11[%c0_45, %c0_46] : memref<512x128xf32, #tpu.memory_space<vmem>>, vector<512x128xf32>
    %cst_47 = arith.constant dense<0.000000e+00> : vector<24x128xf32>
    %110 = tpu.matmul %108, %109, %cst_47 {dimension_numbers = #tpu.dot_dimension_numbers<[1], [0], [0], [1], [0, 0, 1, 1], [], []>} : vector<24x512xf32>, vector<512x128xf32>, vector<24x128xf32> -> vector<24x128xf32>
    %c0_48 = arith.constant 0 : index
    %c0_49 = arith.constant 0 : index
    %111 = vector.load %arg12[%c0_48, %c0_49] : memref<1x128xf32, #tpu.memory_space<vmem>>, vector<1x128xf32>
    %112 = vector.broadcast %111 : vector<1x128xf32> to vector<24x128xf32>
    %113 = arith.addf %110, %112 : vector<24x128xf32>
    %114 = arith.addf %71, %113 : vector<24x128xf32>
    %c0_50 = arith.constant 0 : index
    %c0_51 = arith.constant 0 : index
    %c0_52 = arith.constant 0 : index
    %115 = vector.load %arg13[%c0_50, %c0_51, %c0_52] : memref<1x24x128xf32, #tpu.memory_space<vmem>>, vector<1x24x128xf32>
    %116 = vector.shape_cast %115 : vector<1x24x128xf32> to vector<24x128xf32>
    %117 = vector.shape_cast %114 : vector<24x128xf32> to vector<1x24x128xf32>
    tpu.vector_store %arg13[%c0_50, %c0_51, %c0_52], %117 {strides = array<i32>} : memref<1x24x128xf32, #tpu.memory_space<vmem>>, vector<1x24x128xf32>,
    return
  }
  func.func @transform_0(%arg0: i32) -> (i32, i32, i32) {
    %c0_i32 = arith.constant 0 : i32
    %c0_i32_0 = arith.constant 0 : i32
    %c0_i32_1 = arith.constant 0 : i32
    return %arg0, %c0_i32, %c0_i32_0 : i32, i32, i32
  }
  func.func @transform_1(%arg0: i32) -> (i32, i32) {
    %c0_i32 = arith.constant 0 : i32
    %c0_i32_0 = arith.constant 0 : i32
    %c0_i32_1 = arith.constant 0 : i32
    return %c0_i32, %c0_i32_0 : i32, i32
  }
  func.func @transform_2(%arg0: i32) -> (i32, i32) {
    %c0_i32 = arith.constant 0 : i32
    %c0_i32_0 = arith.constant 0 : i32
    %c0_i32_1 = arith.constant 0 : i32
    return %c0_i32, %c0_i32_0 : i32, i32
  }
  func.func @transform_3(%arg0: i32) -> (i32, i32) {
    %c0_i32 = arith.constant 0 : i32
    %c0_i32_0 = arith.constant 0 : i32
    %c0_i32_1 = arith.constant 0 : i32
    return %c0_i32, %c0_i32_0 : i32, i32
  }
  func.func @transform_4(%arg0: i32) -> (i32, i32) {
    %c0_i32 = arith.constant 0 : i32
    %c0_i32_0 = arith.constant 0 : i32
    %c0_i32_1 = arith.constant 0 : i32
    return %c0_i32, %c0_i32_0 : i32, i32
  }
  func.func @transform_5(%arg0: i32) -> (i32, i32) {
    %c0_i32 = arith.constant 0 : i32
    %c0_i32_0 = arith.constant 0 : i32
    %c0_i32_1 = arith.constant 0 : i32
    return %c0_i32, %c0_i32_0 : i32, i32
  }
  func.func @transform_6(%arg0: i32) -> (i32, i32) {
    %c0_i32 = arith.constant 0 : i32
    %c0_i32_0 = arith.constant 0 : i32
    %c0_i32_1 = arith.constant 0 : i32
    return %c0_i32, %c0_i32_0 : i32, i32
  }
  func.func @transform_7(%arg0: i32) -> (i32, i32) {
    %c0_i32 = arith.constant 0 : i32
    %c0_i32_0 = arith.constant 0 : i32
    %c0_i32_1 = arith.constant 0 : i32
    return %c0_i32, %c0_i32_0 : i32, i32
  }
  func.func @transform_8(%arg0: i32) -> (i32, i32) {
    %c0_i32 = arith.constant 0 : i32
    %c0_i32_0 = arith.constant 0 : i32
    %c0_i32_1 = arith.constant 0 : i32
    return %c0_i32, %c0_i32_0 : i32, i32
  }
  func.func @transform_9(%arg0: i32) -> (i32, i32) {
    %c0_i32 = arith.constant 0 : i32
    %c0_i32_0 = arith.constant 0 : i32
    %c0_i32_1 = arith.constant 0 : i32
    return %c0_i32, %c0_i32_0 : i32, i32
  }
  func.func @transform_10(%arg0: i32) -> (i32, i32) {
    %c0_i32 = arith.constant 0 : i32
    %c0_i32_0 = arith.constant 0 : i32
    %c0_i32_1 = arith.constant 0 : i32
    return %c0_i32, %c0_i32_0 : i32, i32
  }
  func.func @transform_11(%arg0: i32) -> (i32, i32) {
    %c0_i32 = arith.constant 0 : i32
    %c0_i32_0 = arith.constant 0 : i32
    %c0_i32_1 = arith.constant 0 : i32
    return %c0_i32, %c0_i32_0 : i32, i32
  }
  func.func @transform_12(%arg0: i32) -> (i32, i32, i32) {
    %c0_i32 = arith.constant 0 : i32
    %c0_i32_0 = arith.constant 0 : i32
    %c0_i32_1 = arith.constant 0 : i32
    return %arg0, %c0_i32, %c0_i32_0 : i32, i32, i32
  }
}

</mosaic_0001>

<llo_original>
// kernel: trans_rtg_det_forward.5
$region0: #{trans_rtg_det_forward.5}
  #allocation0 [shape = 'u32[]', space=smem, size = 0x4, offset = 0x4, fixed_abs, tag = 'smem constant byte address 0x4 - core index']
  #allocation1 [shape = 'u32[144,128]{1,0:T(1,128)}', space=vmem, size = 0x12000, scoped, tag = 'internal scratch']
  %s0 = inlined_call_operand.vmem [shape: f32[48,128], index: 0, kind: input, shape index: {}]
  %s1 = inlined_call_operand.vmem [shape: f32[1,128], index: 1, kind: input, shape index: {}]
  %s2 = inlined_call_operand.vmem [shape: f32[1,128], index: 2, kind: input, shape index: {}]
  %s3 = inlined_call_operand.hbm [shape: f32[48,128], index: 3, kind: output, shape index: {}]
  %s4 = sld [smem:[#allocation0]]
  $region22: #{trans_rtg_det_forward.5} parent=0
    _
  %s6 = ssub.s32 1, %s4
  %s7 = scalar_select 0, %s6, %s4
  $region1: #{trans_rtg_det_forward.5} parent=0
    #allocation2 [shape = 'u8[24576]{0}', space=vmem, size = 0x6000, scoped, tag = 'output window, operand 0, single buffered']
    #allocation3 [shape = 's32[1]{0}', space=sflag, size = 0x4, scoped, tag = 'scoped memory for trans_rtg_det_forward.5']
    %8 = vsyncpa [#allocation3], 0
    // Predicated region
    $region2: #{trans_rtg_det_forward.5} parent=1 // pred_check
      _
    $region3: #{trans_rtg_det_forward.5} parent=1 // pred_check_branch
      %10 = sbr.rel (0) target = $region5
    $region4: #{trans_rtg_det_forward.5} parent=1 // pred_region
      _
    $region5: #{trans_rtg_det_forward.5} parent=1 // pred_fallthru
      _
    // Predicated region
    $region6: #{trans_rtg_det_forward.5} parent=1 // pred_check
      _
    $region7: #{trans_rtg_det_forward.5} parent=1 // pred_check_branch
      %12 = sbr.rel (0) target = $region9
    $region8: #{trans_rtg_det_forward.5} parent=1 // pred_region
      _
    $region9: #{trans_rtg_det_forward.5} parent=1 // pred_fallthru
      _
    // Predicated region
    $region10: #{trans_rtg_det_forward.5} parent=1 // pred_check
      _
    $region11: #{trans_rtg_det_forward.5} parent=1 // pred_check_branch
      %14 = sbr.rel (0) target = $region13
    $region12: #{trans_rtg_det_forward.5} parent=1 // pred_region
      _
    $region13: #{trans_rtg_det_forward.5} parent=1 // pred_fallthru
      _
    %v15 = vld [vmem:[%s0] sm:$0xff]
    %v16 = vld [vmem:[%s0 + $0x8] sm:$0xff]
    %v17 = vld [vmem:[%s0 + $0x10] sm:$0xff]
    %v18 = vld [vmem:[%s0 + $0x18] sm:$0xff]
    %v19 = vld [vmem:[%s0 + $0x20] sm:$0xff]
    %v20 = vld [vmem:[%s0 + $0x28] sm:$0xff]
    %21 = vadd.xlane.f32.xlu0 %v15
    %v22 = vpop.xlane.xlu0 %21
    %23 = vadd.xlane.f32.xlu0 %v16
    %v24 = vpop.xlane.xlu0 %23
    %25 = vadd.xlane.f32.xlu0 %v17
    %v26 = vpop.xlane.xlu0 %25
    %27 = vadd.xlane.f32.xlu0 %v18
    %v28 = vpop.xlane.xlu0 %27
    %29 = vadd.xlane.f32.xlu0 %v19
    %v30 = vpop.xlane.xlu0 %29
    %31 = vadd.xlane.f32.xlu0 %v20
    %v32 = vpop.xlane.xlu0 %31
    %v33 = vrcp.pop 128.0
    %v34 = vmul.f32 %v22, %v33
    %v35 = vmul.f32 %v24, %v33
    %v36 = vmul.f32 %v26, %v33
    %v37 = vmul.f32 %v28, %v33
    %v38 = vmul.f32 %v30, %v33
    %v39 = vmul.f32 %v32, %v33
    %v40 = vsub.f32 %v15, %v34
    %v41 = vsub.f32 %v16, %v35
    %v42 = vsub.f32 %v17, %v36
    %v43 = vsub.f32 %v18, %v37
    %v44 = vsub.f32 %v19, %v38
    %v45 = vsub.f32 %v20, %v39
    %v46 = vmul.f32 %v40, %v40
    %v47 = vmul.f32 %v41, %v41
    %v48 = vmul.f32 %v42, %v42
    %v49 = vmul.f32 %v43, %v43
    %v50 = vmul.f32 %v44, %v44
    %v51 = vmul.f32 %v45, %v45
    %52 = vadd.xlane.f32.xlu0 %v46
    %v53 = vpop.xlane.xlu0 %52
    %54 = vadd.xlane.f32.xlu0 %v47
    %v55 = vpop.xlane.xlu0 %54
    %56 = vadd.xlane.f32.xlu0 %v48
    %v57 = vpop.xlane.xlu0 %56
    %58 = vadd.xlane.f32.xlu0 %v49
    %v59 = vpop.xlane.xlu0 %58
    %60 = vadd.xlane.f32.xlu0 %v50
    %v61 = vpop.xlane.xlu0 %60
    %62 = vadd.xlane.f32.xlu0 %v51
    %v63 = vpop.xlane.xlu0 %62
    %v64 = vmul.f32 %v53, %v33
    %v65 = vmul.f32 %v55, %v33
    %v66 = vmul.f32 %v57, %v33
    %v67 = vmul.f32 %v59, %v33
    %v68 = vmul.f32 %v61, %v33
    %v69 = vmul.f32 %v63, %v33
    %v70 = vadd.f32 %v64, 1e-05
    %v71 = vadd.f32 %v65, 1e-05
    %v72 = vadd.f32 %v66, 1e-05
    %v73 = vadd.f32 %v67, 1e-05
    %v74 = vadd.f32 %v68, 1e-05
    %v75 = vadd.f32 %v69, 1e-05
    %v76 = vrsqrt.pop %v70
    %v77 = vrsqrt.pop %v71
    %v78 = vrsqrt.pop %v72
    %v79 = vrsqrt.pop %v73
    %v80 = vrsqrt.pop %v74
    %v81 = vrsqrt.pop %v75
    %v82 = vmul.f32 %v40, %v76
    %v83 = vmul.f32 %v41, %v77
    %v84 = vmul.f32 %v42, %v78
    %v85 = vmul.f32 %v43, %v79
    %v86 = vmul.f32 %v44, %v80
    %v87 = vmul.f32 %v45, %v81
    %v88 = vld [vmem:[%s1] sm:$0x1]
    %v90 = vlaneseq
    %v91 = vshrl.u32 %v90, 7
    %v92 = vsub.s32 0, %v91
    %v93 = vrot.slane %v88, %v92
    %v95 = vmul.f32 %v82, %v93
    %v96 = vmul.f32 %v83, %v93
    %v97 = vmul.f32 %v84, %v93
    %v98 = vmul.f32 %v85, %v93
    %v99 = vmul.f32 %v86, %v93
    %v100 = vmul.f32 %v87, %v93
    %v101 = vld [vmem:[%s2] sm:$0x1]
    %v103 = vlaneseq
    %v104 = vshrl.u32 %v103, 7
    %v105 = vsub.s32 0, %v104
    %v106 = vrot.slane %v101, %v105
    %v108 = vadd.f32 %v95, %v106
    %v109 = vadd.f32 %v96, %v106
    %v110 = vadd.f32 %v97, %v106
    %v111 = vadd.f32 %v98, %v106
    %v112 = vadd.f32 %v99, %v106
    %v113 = vadd.f32 %v100, %v106
    %114 = vst [vmem:[#allocation2] sm:$0xff] %v108
    %115 = vst [vmem:[#allocation2 + $0x8] sm:$0xff] %v109
    %116 = vst [vmem:[#allocation2 + $0x10] sm:$0xff] %v110
    %117 = vst [vmem:[#allocation2 + $0x18] sm:$0xff] %v111
    %118 = vst [vmem:[#allocation2 + $0x20] sm:$0xff] %v112
    %119 = vst [vmem:[#allocation2 + $0x28] sm:$0xff] %v113
    // Predicated region
    $region14: #{trans_rtg_det_forward.5} parent=1 // pred_check
      _
    $region15: #{trans_rtg_det_forward.5} parent=1 // pred_check_branch
      %121 = sbr.rel (0) target = $region17
    $region16: #{trans_rtg_det_forward.5} parent=1 // pred_region
      %s123 = ssub.s32 768, 768
      %124 = vsyncadd [#allocation3], %s123
      %s125 = sshll.u32 [#allocation2], 4
      %s126 = int_to_ptr.vmem [resolvable:$true] %s125
      %131 = dma.vmem_to_hbm [thread:$0]  %s126, 768, %s3, [#allocation3], 128, 128, 8
    $region17: #{trans_rtg_det_forward.5} parent=1 // pred_fallthru
      _
    // Predicated region
    $region18: #{trans_rtg_det_forward.5} parent=1 // pred_check
      _
    $region19: #{trans_rtg_det_forward.5} parent=1 // pred_check_branch
      %133 = sbr.rel (0) target = $region21
    $region20: #{trans_rtg_det_forward.5} parent=1 // pred_region
      %134 = dma.done [#allocation3], 768
    $region21: #{trans_rtg_det_forward.5} parent=1 // pred_fallthru
      _
    %135 = vsyncpa [#allocation3], 1

// kernel: trans_rtg_det_forward.3
$region0: #{trans_rtg_det_forward.3}
  #allocation0 [shape = 'u32[]', space=smem, size = 0x4, offset = 0x4, fixed_abs, tag = 'smem constant byte address 0x4 - core index']
  #allocation1 [shape = 'u32[144,128]{1,0:T(1,128)}', space=vmem, size = 0x12000, scoped, tag = 'internal scratch']
  %s0 = inlined_call_operand.vmem [shape: f32[2,24,128], index: 0, kind: input, shape index: {}]
  %s1 = inlined_call_operand.vmem [shape: f32[1,128], index: 1, kind: input, shape index: {}]
  %s2 = inlined_call_operand.vmem [shape: f32[1,128], index: 2, kind: input, shape index: {}]
  %s3 = inlined_call_operand.vmem [shape: f32[128,384], index: 3, kind: input, shape index: {}]
  %s4 = inlined_call_operand.hbm [shape: f32[128,128], index: 4, kind: input, shape index: {}]
  %s5 = inlined_call_operand.vmem [shape: f32[1,128], index: 5, kind: input, shape index: {}]
  %s6 = inlined_call_operand.vmem [shape: f32[1,128], index: 6, kind: input, shape index: {}]
  %s7 = inlined_call_operand.vmem [shape: f32[1,128], index: 7, kind: input, shape index: {}]
  %s8 = inlined_call_operand.hbm [shape: f32[128,512], index: 8, kind: input, shape index: {}]
  %s9 = inlined_call_operand.vmem [shape: f32[1,512], index: 9, kind: input, shape index: {}]
  %s10 = inlined_call_operand.hbm [shape: f32[512,128], index: 10, kind: input, shape index: {}]
  %s11 = inlined_call_operand.vmem [shape: f32[1,128], index: 11, kind: input, shape index: {}]
  %s12 = inlined_call_operand.vmem [shape: f32[2,24,128], index: 12, kind: output, shape index: {}]
  %s13 = sld [smem:[#allocation0]]
  $region93: #{trans_rtg_det_forward.3} parent=0
    _
  %s15 = ssub.s32 1, %s13
  %s16 = scalar_select 0, %s15, %s13
  $region1: #{trans_rtg_det_forward.3} parent=0
    #allocation2 [shape = 'u8[65536]{0}', space=vmem, size = 0x10000, scoped, tag = 'input window, operand 4, single buffered']
    #allocation3 [shape = 's32[2]{0}', space=sflag, size = 0x8, scoped, tag = 'scoped memory for trans_rtg_det_forward.3']
    #allocation4 [shape = 'u8[262144]{0}', space=vmem, size = 0x40000, scoped, tag = 'input window, operand 8, single buffered']
    #allocation5 [shape = 's32[1]{0}', space=sflag, size = 0x4, scoped, tag = 'scoped memory for trans_rtg_det_forward.3']
    #allocation6 [shape = 'u8[262144]{0}', space=vmem, size = 0x40000, scoped, tag = 'input window, operand 10, single buffered']
    %17 = vsyncpa [#allocation3], 0
    %18 = vsyncpa [#allocation5], 0
    loop: start=0, step=1, limit=4
    $region2: #{trans_rtg_det_forward.3} parent=1 // loop_pre_header
      _
    $region3: #{trans_rtg_det_forward.3} parent=1 // loop_header
      %s20 = sphi 0, %s24
      %p21 = scmp.ge.s32.totalorder %s20, 4
      %s30 = sphi 0, %s32
      %s33 = sphi 0, %s30
      %s34 = sphi 0, %s33
      %s50 = sphi 0, %s34
      %s54 = sphi 0, %s54
      %s56 = sphi 0, %s54
      %s57 = sphi 0, %s56
      %s71 = sphi 0, %s57
      %s75 = sphi 0, %s75
      %s77 = sphi 0, %s75
      %s78 = sphi 0, %s77
      %s92 = sphi 0, %s78
      %s96 = sphi 0, %s96
      %s98 = sphi 0, %s96
      %s99 = sphi 0, %s98
      %s113 = sphi 0, %s99
      %s117 = sphi 0, %s117
      %s119 = sphi 0, %s117
      %s120 = sphi 0, %s119
      %s134 = sphi 0, %s120
      %s138 = sphi 0, %s138
      %s140 = sphi 0, %s138
      %s141 = sphi 0, %s140
      %s155 = sphi 0, %s141
      %s159 = sphi 0, %s159
      %s161 = sphi 0, %s159
      %s162 = sphi 0, %s161
      %s176 = sphi 0, %s162
      %s180 = sphi 0, %s180
      %s182 = sphi 0, %s180
      %s183 = sphi 0, %s182
      %s197 = sphi 0, %s183
      %s201 = sphi 0, %s201
      %s203 = sphi 0, %s201
      %s204 = sphi 0, %s203
      %s218 = sphi 0, %s204
      %s222 = sphi 0, %s222
      %s224 = sphi 0, %s222
      %s225 = sphi 0, %s224
      %s239 = sphi 0, %s225
      %s243 = sphi 0, %s243
      %s245 = sphi 0, %s243
      %s246 = sphi 0, %s245
      %s260 = sphi 0, %s246
      %s264 = sphi 0, %s264
      %s266 = sphi 0, %s264
      %s267 = sphi 0, %s266
      %s281 = sphi 0, %s267
      %s287 = sphi 0, %s289
      %s290 = sphi 0, %s287
      %s291 = sphi 0, %s290
      %s307 = sphi 0, %s291
    $region4: #{trans_rtg_det_forward.3} parent=1 // loop_header_branch
      %23 = sbr.rel (%p21) target = $region8
    $region5: #{trans_rtg_det_forward.3} parent=1 // loop_body
      %s25 = ssub.s32 %s20, 1
      %s26 = ssub.s32 %s20, 2
      %s27 = sadd.s32 %s20, 1
      %s28 = ssub.s32 %s20, %s27
      %p29 = scmp.eq.s32.totalorder %s28, 0
      %s31 = sadd.s32 %s30, 1
      %s32 = scalar_select %p29, %s30, %s31
      %p35 = pneg %p29
      %p36 = scmp.eq.s32.totalorder %s20, 1
      %p37 = por %p35, %p36
      %p38 = scmp.ne.s32.totalorder %s30, %s33
      %p39 = scmp.eq.s32.totalorder %s20, 0
      %p40 = por %p38, %p39
      %p41 = scmp.ne.s32.totalorder %s30, %s33
      %p42 = scmp.eq.s32.totalorder %s25, 1
      %p43 = por %p41, %p42
      %p44 = scmp.ne.s32.totalorder %s33, %s34
      %p45 = scmp.eq.s32.totalorder %s25, 0
      %p46 = por %p44, %p45
      %p47 = scmp.ne.s32.totalorder %s33, %s34
      %p48 = scmp.eq.s32.totalorder %s26, 1
      %p49 = por %p47, %p48
      %p51 = scmp.ne.s32.totalorder %s34, %s50
      %p52 = scmp.eq.s32.totalorder %s26, 0
      %p53 = por %p51, %p52
      %s55 = sadd.s32 %s54, 1
      %p58 = scmp.eq.s32.totalorder %s20, 1
      %p59 = scmp.ne.s32.totalorder %s54, %s56
      %p60 = scmp.eq.s32.totalorder %s20, 0
      %p61 = por %p59, %p60
      %p62 = scmp.ne.s32.totalorder %s54, %s56
      %p63 = scmp.eq.s32.totalorder %s25, 1
      %p64 = por %p62, %p63
      %p65 = scmp.ne.s32.totalorder %s56, %s57
      %p66 = scmp.eq.s32.totalorder %s25, 0
      %p67 = por %p65, %p66
      %p68 = scmp.ne.s32.totalorder %s56, %s57
      %p69 = scmp.eq.s32.totalorder %s26, 1
      %p70 = por %p68, %p69
      %p72 = scmp.ne.s32.totalorder %s57, %s71
      %p73 = scmp.eq.s32.totalorder %s26, 0
      %p74 = por %p72, %p73
      %s76 = sadd.s32 %s75, 1
      %p79 = scmp.eq.s32.totalorder %s20, 1
      %p80 = scmp.ne.s32.totalorder %s75, %s77
      %p81 = scmp.eq.s32.totalorder %s20, 0
      %p82 = por %p80, %p81
      %p83 = scmp.ne.s32.totalorder %s75, %s77
      %p84 = scmp.eq.s32.totalorder %s25, 1
      %p85 = por %p83, %p84
      %p86 = scmp.ne.s32.totalorder %s77, %s78
      %p87 = scmp.eq.s32.totalorder %s25, 0
      %p88 = por %p86, %p87
      %p89 = scmp.ne.s32.totalorder %s77, %s78
      %p90 = scmp.eq.s32.totalorder %s26, 1
      %p91 = por %p89, %p90
      %p93 = scmp.ne.s32.totalorder %s78, %s92
      %p94 = scmp.eq.s32.totalorder %s26, 0
      %p95 = por %p93, %p94
      %s97 = sadd.s32 %s96, 1
      %p100 = scmp.eq.s32.totalorder %s20, 1
      %p101 = scmp.ne.s32.totalorder %s96, %s98
      %p102 = scmp.eq.s32.totalorder %s20, 0
      %p103 = por %p101, %p102
      %p104 = scmp.ne.s32.totalorder %s96, %s98
      %p105 = scmp.eq.s32.totalorder %s25, 1
      %p106 = por %p104, %p105
      %p107 = scmp.ne.s32.totalorder %s98, %s99
      %p108 = scmp.eq.s32.totalorder %s25, 0
      %p109 = por %p107, %p108
      %p110 = scmp.ne.s32.totalorder %s98, %s99
      %p111 = scmp.eq.s32.totalorder %s26, 1
      %p112 = por %p110, %p111
      %p114 = scmp.ne.s32.totalorder %s99, %s113
      %p115 = scmp.eq.s32.totalorder %s26, 0
      %p116 = por %p114, %p115
      %s118 = sadd.s32 %s117, 1
      %p121 = scmp.eq.s32.totalorder %s20, 1
      %p122 = scmp.ne.s32.totalorder %s117, %s119
      %p123 = scmp.eq.s32.totalorder %s20, 0
      %p124 = por %p122, %p123
      %p125 = scmp.ne.s32.totalorder %s117, %s119
      %p126 = scmp.eq.s32.totalorder %s25, 1
      %p127 = por %p125, %p126
      %p128 = scmp.ne.s32.totalorder %s119, %s120
      %p129 = scmp.eq.s32.totalorder %s25, 0
      %p130 = por %p128, %p129
      %p131 = scmp.ne.s32.totalorder %s119, %s120
      %p132 = scmp.eq.s32.totalorder %s26, 1
      %p133 = por %p131, %p132
      %p135 = scmp.ne.s32.totalorder %s120, %s134
      %p136 = scmp.eq.s32.totalorder %s26, 0
      %p137 = por %p135, %p136
      %s139 = sadd.s32 %s138, 1
      %p142 = scmp.eq.s32.totalorder %s20, 1
      %p143 = scmp.ne.s32.totalorder %s138, %s140
      %p144 = scmp.eq.s32.totalorder %s20, 0
      %p145 = por %p143, %p144
      %p146 = scmp.ne.s32.totalorder %s138, %s140
      %p147 = scmp.eq.s32.totalorder %s25, 1
      %p148 = por %p146, %p147
      %p149 = scmp.ne.s32.totalorder %s140, %s141
      %p150 = scmp.eq.s32.totalorder %s25, 0
      %p151 = por %p149, %p150
      %p152 = scmp.ne.s32.totalorder %s140, %s141
      %p153 = scmp.eq.s32.totalorder %s26, 1
      %p154 = por %p152, %p153
      %p156 = scmp.ne.s32.totalorder %s141, %s155
      %p157 = scmp.eq.s32.totalorder %s26, 0
      %p158 = por %p156, %p157
      %s160 = sadd.s32 %s159, 1
      %p163 = scmp.eq.s32.totalorder %s20, 1
      %p164 = scmp.ne.s32.totalorder %s159, %s161
      %p165 = scmp.eq.s32.totalorder %s20, 0
      %p166 = por %p164, %p165
      %p167 = scmp.ne.s32.totalorder %s159, %s161
      %p168 = scmp.eq.s32.totalorder %s25, 1
      %p169 = por %p167, %p168
      %p170 = scmp.ne.s32.totalorder %s161, %s162
      %p171 = scmp.eq.s32.totalorder %s25, 0
      %p172 = por %p170, %p171
      %p173 = scmp.ne.s32.totalorder %s161, %s162
      %p174 = scmp.eq.s32.totalorder %s26, 1
      %p175 = por %p173, %p174
      %p177 = scmp.ne.s32.totalorder %s162, %s176
      %p178 = scmp.eq.s32.totalorder %s26, 0
      %p179 = por %p177, %p178
      %s181 = sadd.s32 %s180, 1
      %p184 = scmp.eq.s32.totalorder %s20, 1
      %p185 = scmp.ne.s32.totalorder %s180, %s182
      %p186 = scmp.eq.s32.totalorder %s20, 0
      %p187 = por %p185, %p186
      %p188 = scmp.ne.s32.totalorder %s180, %s182
      %p189 = scmp.eq.s32.totalorder %s25, 1
      %p190 = por %p188, %p189
      %p191 = scmp.ne.s32.totalorder %s182, %s183
      %p192 = scmp.eq.s32.totalorder %s25, 0
      %p193 = por %p191, %p192
      %p194 = scmp.ne.s32.totalorder %s182, %s183
      %p195 = scmp.eq.s32.totalorder %s26, 1
      %p196 = por %p194, %p195
      %p198 = scmp.ne.s32.totalorder %s183, %s197
      %p199 = scmp.eq.s32.totalorder %s26, 0
      %p200 = por %p198, %p199
      %s202 = sadd.s32 %s201, 1
      %p205 = scmp.eq.s32.totalorder %s20, 1
      %p206 = scmp.ne.s32.totalorder %s201, %s203
      %p207 = scmp.eq.s32.totalorder %s20, 0
      %p208 = por %p206, %p207
      %p209 = scmp.ne.s32.totalorder %s201, %s203
      %p210 = scmp.eq.s32.totalorder %s25, 1
      %p211 = por %p209, %p210
      %p212 = scmp.ne.s32.totalorder %s203, %s204
      %p213 = scmp.eq.s32.totalorder %s25, 0
      %p214 = por %p212, %p213
      %p215 = scmp.ne.s32.totalorder %s203, %s204
      %p216 = scmp.eq.s32.totalorder %s26, 1
      %p217 = por %p215, %p216
      %p219 = scmp.ne.s32.totalorder %s204, %s218
      %p220 = scmp.eq.s32.totalorder %s26, 0
      %p221 = por %p219, %p220
      %s223 = sadd.s32 %s222, 1
      %p226 = scmp.eq.s32.totalorder %s20, 1
      %p227 = scmp.ne.s32.totalorder %s222, %s224
      %p228 = scmp.eq.s32.totalorder %s20, 0
      %p229 = por %p227, %p228
      %p230 = scmp.ne.s32.totalorder %s222, %s224
      %p231 = scmp.eq.s32.totalorder %s25, 1
      %p232 = por %p230, %p231
      %p233 = scmp.ne.s32.totalorder %s224, %s225
      %p234 = scmp.eq.s32.totalorder %s25, 0
      %p235 = por %p233, %p234
      %p236 = scmp.ne.s32.totalorder %s224, %s225
      %p237 = scmp.eq.s32.totalorder %s26, 1
      %p238 = por %p236, %p237
      %p240 = scmp.ne.s32.totalorder %s225, %s239
      %p241 = scmp.eq.s32.totalorder %s26, 0
      %p242 = por %p240, %p241
      %s244 = sadd.s32 %s243, 1
      %p247 = scmp.eq.s32.totalorder %s20, 1
      %p248 = scmp.ne.s32.totalorder %s243, %s245
      %p249 = scmp.eq.s32.totalorder %s20, 0
      %p250 = por %p248, %p249
      %p251 = scmp.ne.s32.totalorder %s243, %s245
      %p252 = scmp.eq.s32.totalorder %s25, 1
      %p253 = por %p251, %p252
      %p254 = scmp.ne.s32.totalorder %s245, %s246
      %p255 = scmp.eq.s32.totalorder %s25, 0
      %p256 = por %p254, %p255
      %p257 = scmp.ne.s32.totalorder %s245, %s246
      %p258 = scmp.eq.s32.totalorder %s26, 1
      %p259 = por %p257, %p258
      %p261 = scmp.ne.s32.totalorder %s246, %s260
      %p262 = scmp.eq.s32.totalorder %s26, 0
      %p263 = por %p261, %p262
      %s265 = sadd.s32 %s264, 1
      %p268 = scmp.eq.s32.totalorder %s20, 1
      %p269 = scmp.ne.s32.totalorder %s264, %s266
      %p270 = scmp.eq.s32.totalorder %s20, 0
      %p271 = por %p269, %p270
      %p272 = scmp.ne.s32.totalorder %s264, %s266
      %p273 = scmp.eq.s32.totalorder %s25, 1
      %p274 = por %p272, %p273
      %p275 = scmp.ne.s32.totalorder %s266, %s267
      %p276 = scmp.eq.s32.totalorder %s25, 0
      %p277 = por %p275, %p276
      %p278 = scmp.ne.s32.totalorder %s266, %s267
      %p279 = scmp.eq.s32.totalorder %s26, 1
      %p280 = por %p278, %p279
      %p282 = scmp.ne.s32.totalorder %s267, %s281
      %p283 = scmp.eq.s32.totalorder %s26, 0
      %p284 = por %p282, %p283
      %s285 = ssub.s32 %s20, %s27
      %p286 = scmp.eq.s32.totalorder %s285, 0
      %s288 = sadd.s32 %s287, 1
      %s289 = scalar_select %p286, %s287, %s288
      %p292 = pneg %p286
      %p293 = scmp.eq.s32.totalorder %s20, 1
      %p294 = por %p292, %p293
      %p295 = scmp.ne.s32.totalorder %s287, %s290
      %p296 = scmp.eq.s32.totalorder %s20, 0
      %p297 = por %p295, %p296
      %p298 = scmp.ne.s32.totalorder %s287, %s290
      %p299 = scmp.eq.s32.totalorder %s25, 1
      %p300 = por %p298, %p299
      %p301 = scmp.ne.s32.totalorder %s290, %s291
      %p302 = scmp.eq.s32.totalorder %s25, 0
      %p303 = por %p301, %p302
      %p304 = scmp.ne.s32.totalorder %s290, %s291
      %p305 = scmp.eq.s32.totalorder %s26, 1
      %p306 = por %p304, %p305
      %p308 = scmp.ne.s32.totalorder %s291, %s307
      %p309 = scmp.eq.s32.totalorder %s26, 0
      %p310 = por %p308, %p309
      %p311 = scmp.le.s32.totalorder 1, %s20
      %p312 = scmp.lt.s32.totalorder %s20, 3
      %p313 = pnand %p311, %p312
      %p314 = pneg %p313
      // Predicated region
      $region9: #{trans_rtg_det_forward.3} parent=5 // pred_check
        _
      $region10: #{trans_rtg_det_forward.3} parent=5 // pred_check_branch
        %316 = sbr.rel (%p313) target = $region12
      $region11: #{trans_rtg_det_forward.3} parent=5 // pred_region
        %s317 = ssub.s32 %s20, 1
        // Predicated region
        $region13: #{trans_rtg_det_forward.3} parent=11 // pred_check
          %p318 = pneg %p67
        $region14: #{trans_rtg_det_forward.3} parent=11 // pred_check_branch
          %320 = sbr.rel (%p318) target = $region16
        $region15: #{trans_rtg_det_forward.3} parent=11 // pred_region
          _
        $region16: #{trans_rtg_det_forward.3} parent=11 // pred_fallthru
          _
        // Predicated region
        $region17: #{trans_rtg_det_forward.3} parent=11 // pred_check
          %p321 = pneg %p88
        $region18: #{trans_rtg_det_forward.3} parent=11 // pred_check_branch
          %323 = sbr.rel (%p321) target = $region20
        $region19: #{trans_rtg_det_forward.3} parent=11 // pred_region
          _
        $region20: #{trans_rtg_det_forward.3} parent=11 // pred_fallthru
          _
        // Predicated region
        $region21: #{trans_rtg_det_forward.3} parent=11 // pred_check
          %p324 = pneg %p109
        $region22: #{trans_rtg_det_forward.3} parent=11 // pred_check_branch
          %326 = sbr.rel (%p324) target = $region24
        $region23: #{trans_rtg_det_forward.3} parent=11 // pred_region
          _
        $region24: #{trans_rtg_det_forward.3} parent=11 // pred_fallthru
          _
        // Predicated region
        $region25: #{trans_rtg_det_forward.3} parent=11 // pred_check
          %p327 = pneg %p130
        $region26: #{trans_rtg_det_forward.3} parent=11 // pred_check_branch
          %329 = sbr.rel (%p327) target = $region28
        $region27: #{trans_rtg_det_forward.3} parent=11 // pred_region
          %s331 = ssub.s32 2048, 2048
          %332 = vsyncadd [#allocation3], %s331
          %s333 = sshll.u32 [#allocation2], 4
          %s334 = int_to_ptr.vmem [resolvable:$true] %s333
          %339 = dma.hbm_to_vmem [thread:$0]  %s4, 2048, %s334, [#allocation3], 128, 128, 8
        $region28: #{trans_rtg_det_forward.3} parent=11 // pred_fallthru
          _
        // Predicated region
        $region29: #{trans_rtg_det_forward.3} parent=11 // pred_check
          %p340 = pneg %p151
        $region30: #{trans_rtg_det_forward.3} parent=11 // pred_check_branch
          %342 = sbr.rel (%p340) target = $region32
        $region31: #{trans_rtg_det_forward.3} parent=11 // pred_region
          _
        $region32: #{trans_rtg_det_forward.3} parent=11 // pred_fallthru
          _
        // Predicated region
        $region33: #{trans_rtg_det_forward.3} parent=11 // pred_check
          %p343 = pneg %p172
        $region34: #{trans_rtg_det_forward.3} parent=11 // pred_check_branch
          %345 = sbr.rel (%p343) target = $region36
        $region35: #{trans_rtg_det_forward.3} parent=11 // pred_region
          _
        $region36: #{trans_rtg_det_forward.3} parent=11 // pred_fallthru
          _
        // Predicated region
        $region37: #{trans_rtg_det_forward.3} parent=11 // pred_check
          %p346 = pneg %p193
        $region38: #{trans_rtg_det_forward.3} parent=11 // pred_check_branch
          %348 = sbr.rel (%p346) target = $region40
        $region39: #{trans_rtg_det_forward.3} parent=11 // pred_region
          _
        $region40: #{trans_rtg_det_forward.3} parent=11 // pred_fallthru
          _
        // Predicated region
        $region41: #{trans_rtg_det_forward.3} parent=11 // pred_check
          %p349 = pneg %p214
        $region42: #{trans_rtg_det_forward.3} parent=11 // pred_check_branch
          %351 = sbr.rel (%p349) target = $region44
        $region43: #{trans_rtg_det_forward.3} parent=11 // pred_region
          %s353 = ssub.s32 8192, 8192
          %354 = vsyncadd [#allocation5], %s353
          %s355 = sshll.u32 [#allocation4], 4
          %s356 = int_to_ptr.vmem [resolvable:$true] %s355
          %361 = dma.hbm_to_vmem [thread:$0]  %s8, 8192, %s356, [#allocation5], 512, 512, 32
        $region44: #{trans_rtg_det_forward.3} parent=11 // pred_fallthru
          _
        // Predicated region
        $region45: #{trans_rtg_det_forward.3} parent=11 // pred_check
          %p362 = pneg %p235
        $region46: #{trans_rtg_det_forward.3} parent=11 // pred_check_branch
          %364 = sbr.rel (%p362) target = $region48
        $region47: #{trans_rtg_det_forward.3} parent=11 // pred_region
          _
        $region48: #{trans_rtg_det_forward.3} parent=11 // pred_fallthru
          _
        // Predicated region
        $region49: #{trans_rtg_det_forward.3} parent=11 // pred_check
          %p365 = pneg %p256
        $region50: #{trans_rtg_det_forward.3} parent=11 // pred_check_branch
          %367 = sbr.rel (%p365) target = $region52
        $region51: #{trans_rtg_det_forward.3} parent=11 // pred_region
          %s369 = ssub.s32 8192, 8192
          %370 = vsyncadd [#allocation5], %s369
          %s371 = sshll.u32 [#allocation6], 4
          %s372 = int_to_ptr.vmem [resolvable:$true] %s371
          %377 = dma.hbm_to_vmem [thread:$0]  %s10, 8192, %s372, [#allocation5], 128, 128, 8
        $region52: #{trans_rtg_det_forward.3} parent=11 // pred_fallthru
          _
        // Predicated region
        $region53: #{trans_rtg_det_forward.3} parent=11 // pred_check
          %p378 = pneg %p277
        $region54: #{trans_rtg_det_forward.3} parent=11 // pred_check_branch
          %380 = sbr.rel (%p378) target = $region56
        $region55: #{trans_rtg_det_forward.3} parent=11 // pred_region
          _
        $region56: #{trans_rtg_det_forward.3} parent=11 // pred_fallthru
          _
      $region12: #{trans_rtg_det_forward.3} parent=5 // pred_fallthru
        _
      %p381 = scmp.lt.s32.totalorder %s20, 2
      // Predicated region
      $region57: #{trans_rtg_det_forward.3} parent=5 // pred_check
        %p382 = pneg %p381
      $region58: #{trans_rtg_det_forward.3} parent=5 // pred_check_branch
        %384 = sbr.rel (%p382) target = $region60
      $region59: #{trans_rtg_det_forward.3} parent=5 // pred_region
        // Predicated region
        $region61: #{trans_rtg_det_forward.3} parent=59 // pred_check
          %p385 = pneg %p40
        $region62: #{trans_rtg_det_forward.3} parent=59 // pred_check_branch
          %387 = sbr.rel (%p385) target = $region64
        $region63: #{trans_rtg_det_forward.3} parent=59 // pred_region
          %p388 = scmp.lt.s32.totalorder %s20, 1
          %s389 = scalar_select %p388, %s20, 1
          %s390 = smul.addr %s389, 3
          %s391 = smul.addr %s390, 8
          %s392 = scalar_lea.vmem %s0, %s391
        $region64: #{trans_rtg_det_forward.3} parent=59 // pred_fallthru
          _
      $region60: #{trans_rtg_det_forward.3} parent=5 // pred_fallthru
        _
      %p393 = scmp.le.s32.totalorder 1, %s20
      %p394 = scmp.lt.s32.totalorder %s20, 3
      %p395 = pnand %p393, %p394
      %p396 = pneg %p395
      // Predicated region
      $region65: #{trans_rtg_det_forward.3} parent=5 // pred_check
        _
      $region66: #{trans_rtg_det_forward.3} parent=5 // pred_check_branch
        %398 = sbr.rel (%p395) target = $region68
      $region67: #{trans_rtg_det_forward.3} parent=5 // pred_region
        %s399 = ssub.s32 %s20, 1
        // Predicated region
        $region69: #{trans_rtg_det_forward.3} parent=67 // pred_check
          %p400 = pneg %p130
        $region70: #{trans_rtg_det_forward.3} parent=67 // pred_check_branch
          %402 = sbr.rel (%p400) target = $region72
        $region71: #{trans_rtg_det_forward.3} parent=67 // pred_region
          %403 = dma.done [#allocation3], 2048
        $region72: #{trans_rtg_det_forward.3} parent=67 // pred_fallthru
          _
        // Predicated region
        $region73: #{trans_rtg_det_forward.3} parent=67 // pred_check
          %p404 = pneg %p214
        $region74: #{trans_rtg_det_forward.3} parent=67 // pred_check_branch
          %406 = sbr.rel (%p404) target = $region76
        $region75: #{trans_rtg_det_forward.3} parent=67 // pred_region
          %407 = dma.done [#allocation5], 8192
        $region76: #{trans_rtg_det_forward.3} parent=67 // pred_fallthru
          _
        // Predicated region
        $region77: #{trans_rtg_det_forward.3} parent=67 // pred_check
          %p408 = pneg %p256
        $region78: #{trans_rtg_det_forward.3} parent=67 // pred_check_branch
          %410 = sbr.rel (%p408) target = $region80
        $region79: #{trans_rtg_det_forward.3} parent=67 // pred_region
          %411 = dma.done [#allocation5], 8192
        $region80: #{trans_rtg_det_forward.3} parent=67 // pred_fallthru
          _
        %p412 = scmp.lt.s32.totalorder %s25, 1
        %s413 = scalar_select %p412, %s25, 1
        %s414 = smul.addr %s413, 3
        %s415 = smul.addr %s414, 8
        %s416 = scalar_lea.vmem %s0, %s415
        %p417 = pneg %p46
        %p418 = pneg %p43
        %p419 = pneg %p67
        %p420 = pneg %p64
        %p421 = pneg %p88
        %p422 = pneg %p85
        %p423 = pneg %p109
        %p424 = pneg %p106
        %p425 = pneg %p130
        %p426 = pneg %p127
        %p427 = pneg %p151
        %p428 = pneg %p148
        %p429 = pneg %p172
        %p430 = pneg %p169
        %p431 = pneg %p193
        %p432 = pneg %p190
        %p433 = pneg %p214
        %p434 = pneg %p211
        %p435 = pneg %p235
        %p436 = pneg %p232
        %p437 = pneg %p256
        %p438 = pneg %p253
        %p439 = pneg %p277
        %p440 = pneg %p274
        %p441 = pneg %p303
        %p442 = pneg %p300
        %p443 = scmp.lt.s32.totalorder %s25, 1
        %s444 = scalar_select %p443, %s25, 1
        %s445 = smul.addr %s444, 3
        %s446 = smul.addr %s445, 8
        %s447 = scalar_lea.vmem %s12, %s446
        %p448 = scmp.lt.s32.totalorder %s25, 1
        %s449 = scalar_select %p448, %s25, 1
        %s450 = smul.addr %s449, 3
        %s451 = smul.addr %s450, 8
        %s452 = scalar_lea.vmem %s0, %s451
        %p453 = scmp.lt.s32.totalorder %s25, 1
        %s454 = scalar_select %p453, %s25, 1
        %s455 = smul.addr %s454, 3
        %s456 = smul.addr %s455, 8
        %s457 = scalar_lea.vmem %s12, %s456
        %v458 = vld [vmem:[%s452] sm:$0xff]
        %v459 = vld [vmem:[%s452 + $0x8] sm:$0xff]
        %v460 = vld [vmem:[%s452 + $0x10] sm:$0xff]
        %461 = vadd.xlane.f32.xlu0 %v458
        %v462 = vpop.xlane.xlu0 %461
        %463 = vadd.xlane.f32.xlu0 %v459
        %v464 = vpop.xlane.xlu0 %463
        %465 = vadd.xlane.f32.xlu0 %v460
        %v466 = vpop.xlane.xlu0 %465
        %v467 = vrcp.pop 128.0
        %v468 = vmul.f32 %v462, %v467
        %v469 = vmul.f32 %v464, %v467
        %v470 = vmul.f32 %v466, %v467
        %v471 = vsub.f32 %v458, %v468
        %v472 = vsub.f32 %v459, %v469
        %v473 = vsub.f32 %v460, %v470
        %v474 = vmul.f32 %v471, %v471
        %v475 = vmul.f32 %v472, %v472
        %v476 = vmul.f32 %v473, %v473
        %477 = vadd.xlane.f32.xlu0 %v474
        %v478 = vpop.xlane.xlu0 %477
        %479 = vadd.xlane.f32.xlu0 %v475
        %v480 = vpop.xlane.xlu0 %479
        %481 = vadd.xlane.f32.xlu0 %v476
        %v482 = vpop.xlane.xlu0 %481
        %v483 = vmul.f32 %v478, %v467
        %v484 = vmul.f32 %v480, %v467
        %v485 = vmul.f32 %v482, %v467
        %v486 = vadd.f32 %v483, 1e-05
        %v487 = vadd.f32 %v484, 1e-05
        %v488 = vadd.f32 %v485, 1e-05
        %v489 = vrsqrt.pop %v486
        %v490 = vrsqrt.pop %v487
        %v491 = vrsqrt.pop %v488
        %v492 = vmul.f32 %v471, %v489
        %v493 = vmul.f32 %v472, %v490
        %v494 = vmul.f32 %v473, %v491
        %v495 = vld [vmem:[%s1] sm:$0x1]
        %v497 = vlaneseq
        %v498 = vshrl.u32 %v497, 7
        %v499 = vsub.s32 0, %v498
        %v500 = vrot.slane %v495, %v499
        %v502 = vmul.f32 %v492, %v500
        %v503 = vmul.f32 %v493, %v500
        %v504 = vmul.f32 %v494, %v500
        %v505 = vld [vmem:[%s2] sm:$0x1]
        %v507 = vlaneseq
        %v508 = vshrl.u32 %v507, 7
        %v509 = vsub.s32 0, %v508
        %v510 = vrot.slane %v505, %v509
        %v512 = vadd.f32 %v502, %v510
        %v513 = vadd.f32 %v503, %v510
        %v514 = vadd.f32 %v504, %v510
        %v515 = vld [vmem:[%s3] sm:$0xff]
        %v516 = vld [vmem:[%s3 + $0x8] sm:$0xff]
        %v517 = vld [vmem:[%s3 + $0x10] sm:$0xff]
        %v518 = vld [vmem:[%s3 + $0x18] sm:$0xff]
        %v519 = vld [vmem:[%s3 + $0x20] sm:$0xff]
        %v520 = vld [vmem:[%s3 + $0x28] sm:$0xff]
        %v521 = vld [vmem:[%s3 + $0x30] sm:$0xff]
        %v522 = vld [vmem:[%s3 + $0x38] sm:$0xff]
        %v523 = vld [vmem:[%s3 + $0x40] sm:$0xff]
        %v524 = vld [vmem:[%s3 + $0x48] sm:$0xff]
        %v525 = vld [vmem:[%s3 + $0x50] sm:$0xff]
        %v526 = vld [vmem:[%s3 + $0x58] sm:$0xff]
        %v527 = vld [vmem:[%s3 + $0x60] sm:$0xff]
        %v528 = vld [vmem:[%s3 + $0x68] sm:$0xff]
        %v529 = vld [vmem:[%s3 + $0x70] sm:$0xff]
        %v530 = vld [vmem:[%s3 + $0x78] sm:$0xff]
        %v531 = vld [vmem:[%s3 + $0x80] sm:$0xff]
        %v532 = vld [vmem:[%s3 + $0x88] sm:$0xff]
        %v533 = vld [vmem:[%s3 + $0x90] sm:$0xff]
        %v534 = vld [vmem:[%s3 + $0x98] sm:$0xff]
        %v535 = vld [vmem:[%s3 + $0xa0] sm:$0xff]
        %v536 = vld [vmem:[%s3 + $0xa8] sm:$0xff]
        %v537 = vld [vmem:[%s3 + $0xb0] sm:$0xff]
        %v538 = vld [vmem:[%s3 + $0xb8] sm:$0xff]
        %v539 = vld [vmem:[%s3 + $0xc0] sm:$0xff]
        %v540 = vld [vmem:[%s3 + $0xc8] sm:$0xff]
        %v541 = vld [vmem:[%s3 + $0xd0] sm:$0xff]
        %v542 = vld [vmem:[%s3 + $0xd8] sm:$0xff]
        %v543 = vld [vmem:[%s3 + $0xe0] sm:$0xff]
        %v544 = vld [vmem:[%s3 + $0xe8] sm:$0xff]
        %v545 = vld [vmem:[%s3 + $0xf0] sm:$0xff]
        %v546 = vld [vmem:[%s3 + $0xf8] sm:$0xff]
        %v547 = vld [vmem:[%s3 + $0x100] sm:$0xff]
        %v548 = vld [vmem:[%s3 + $0x108] sm:$0xff]
        %v549 = vld [vmem:[%s3 + $0x110] sm:$0xff]
        %v550 = vld [vmem:[%s3 + $0x118] sm:$0xff]
        %v551 = vld [vmem:[%s3 + $0x120] sm:$0xff]
        %v552 = vld [vmem:[%s3 + $0x128] sm:$0xff]
        %v553 = vld [vmem:[%s3 + $0x130] sm:$0xff]
        %v554 = vld [vmem:[%s3 + $0x138] sm:$0xff]
        %v555 = vld [vmem:[%s3 + $0x140] sm:$0xff]
        %v556 = vld [vmem:[%s3 + $0x148] sm:$0xff]
        %v557 = vld [vmem:[%s3 + $0x150] sm:$0xff]
        %v558 = vld [vmem:[%s3 + $0x158] sm:$0xff]
        %v559 = vld [vmem:[%s3 + $0x160] sm:$0xff]
        %v560 = vld [vmem:[%s3 + $0x168] sm:$0xff]
        %v561 = vld [vmem:[%s3 + $0x170] sm:$0xff]
        %v562 = vld [vmem:[%s3 + $0x178] sm:$0xff]
        %563 = vmatprep.subr.mxu0 %v561
        %564 = vmatpush1.msra.mxu0 %v560
        %565 = vmatprep.subr.mxu0 %v558
        %566 = vmatpush1.msra.mxu0 %v557
        %567 = vmatprep.subr.mxu0 %v555
        %568 = vmatpush1.msra.mxu0 %v554
        %569 = vmatprep.subr.mxu0 %v552
        %570 = vmatpush1.msra.mxu0 %v551
        %571 = vmatprep.subr.mxu0 %v549
        %572 = vmatpush1.msra.mxu0 %v548
        %573 = vmatprep.subr.mxu0 %v546
        %574 = vmatpush1.msra.mxu0 %v545
        %575 = vmatprep.subr.mxu0 %v543
        %576 = vmatpush1.msra.mxu0 %v542
        %577 = vmatprep.subr.mxu0 %v540
        %578 = vmatpush1.msra.mxu0 %v539
        %579 = vmatprep.subr.mxu0 %v537
        %580 = vmatpush1.msra.mxu0 %v536
        %581 = vmatprep.subr.mxu0 %v534
        %582 = vmatpush1.msra.mxu0 %v533
        %583 = vmatprep.subr.mxu0 %v531
        %584 = vmatpush1.msra.mxu0 %v530
        %585 = vmatprep.subr.mxu0 %v528
        %586 = vmatpush1.msra.mxu0 %v527
        %587 = vmatprep.subr.mxu0 %v525
        %588 = vmatpush1.msra.mxu0 %v524
        %589 = vmatprep.subr.mxu0 %v522
        %590 = vmatpush1.msra.mxu0 %v521
        %591 = vmatprep.subr.mxu0 %v519
        %592 = vmatpush1.msra.mxu0 %v518
        %593 = vmatprep.subr.mxu0 %v516
        %594 = vmatpush1.msra.mxu0 %v515
        %595 = vmatprep.subr.mxu0 0.0
        %596 = vmatpush2.msra.mxu0 0.0
        %597 = vmatprep.subr.mxu0 0.0
        %598 = vmatpush2.msra.mxu0 0.0
        %599 = vmatprep.subr.mxu0 0.0
        %600 = vmatpush2.msra.mxu0 0.0
        %601 = vmatprep.subr.mxu0 0.0
        %602 = vmatpush2.msra.mxu0 0.0
        %603 = vmatprep.subr.mxu0 0.0
        %604 = vmatpush2.msra.mxu0 0.0
        %605 = vmatprep.subr.mxu0 0.0
        %606 = vmatpush2.msra.mxu0 0.0
        %607 = vmatprep.subr.mxu0 0.0
        %608 = vmatpush2.msra.mxu0 0.0
        %609 = vmatprep.subr.mxu0 0.0
        %610 = vmatpush2.msra.mxu0 0.0
        %611 = vmatprep.subr.mxu0 0.0
        %612 = vmatpush2.msra.mxu0 0.0
        %613 = vmatprep.subr.mxu0 0.0
        %614 = vmatpush2.msra.mxu0 0.0
        %615 = vmatprep.subr.mxu0 0.0
        %616 = vmatpush2.msra.mxu0 0.0
        %617 = vmatprep.subr.mxu0 0.0
        %618 = vmatpush2.msra.mxu0 0.0
        %619 = vmatprep.subr.mxu0 0.0
        %620 = vmatpush2.msra.mxu0 0.0
        %621 = vmatprep.subr.mxu0 0.0
        %622 = vmatpush2.msra.mxu0 0.0
        %623 = vmatprep.subr.mxu0 0.0
        %624 = vmatpush2.msra.mxu0 0.0
        %625 = vmatprep.subr.mxu0 0.0
        %626 = vmatpush2.msra.mxu0 0.0
        %627 = vmatprep.mubr.f32.mxu0 0.0
        %628 = vmatmul.mubr.f32.gmra.mxu0 %v512
        %v629 = vpop.f32.mrf.mxu0
        %v630 = vadd.f32 0.0, %v629
        %v631 = vpop.f32.mrf.mxu0
        %v632 = vadd.f32 0.0, %v631
        %633 = vmatprep.mubr.f32.mxu0 0.0
        %634 = vmatmul.mubr.f32.gmra.mxu0 %v513
        %v635 = vpop.f32.mrf.mxu0
        %v636 = vadd.f32 0.0, %v635
        %v637 = vpop.f32.mrf.mxu0
        %v638 = vadd.f32 0.0, %v637
        %639 = vmatprep.mubr.f32.mxu0 0.0
        %640 = vmatmul.mubr.f32.gmra.mxu0 %v514
        %v641 = vpop.f32.mrf.mxu0
        %v642 = vadd.f32 0.0, %v641
        %v643 = vpop.f32.mrf.mxu0
        %v644 = vadd.f32 0.0, %v643
        %645 = vdwg.mxu0
        %646 = vmatprep.subr.mxu0 0.0
        %647 = vmatpush1.msra.mxu0 %v562
        %648 = vmatprep.subr.mxu0 0.0
        %649 = vmatpush1.msra.mxu0 %v559
        %650 = vmatprep.subr.mxu0 0.0
        %651 = vmatpush1.msra.mxu0 %v556
        %652 = vmatprep.subr.mxu0 0.0
        %653 = vmatpush1.msra.mxu0 %v553
        %654 = vmatprep.subr.mxu0 0.0
        %655 = vmatpush1.msra.mxu0 %v550
        %656 = vmatprep.subr.mxu0 0.0
        %657 = vmatpush1.msra.mxu0 %v547
        %658 = vmatprep.subr.mxu0 0.0
        %659 = vmatpush1.msra.mxu0 %v544
        %660 = vmatprep.subr.mxu0 0.0
        %661 = vmatpush1.msra.mxu0 %v541
        %662 = vmatprep.subr.mxu0 0.0
        %663 = vmatpush1.msra.mxu0 %v538
        %664 = vmatprep.subr.mxu0 0.0
        %665 = vmatpush1.msra.mxu0 %v535
        %666 = vmatprep.subr.mxu0 0.0
        %667 = vmatpush1.msra.mxu0 %v532
        %668 = vmatprep.subr.mxu0 0.0
        %669 = vmatpush1.msra.mxu0 %v529
        %670 = vmatprep.subr.mxu0 0.0
        %671 = vmatpush1.msra.mxu0 %v526
        %672 = vmatprep.subr.mxu0 0.0
        %673 = vmatpush1.msra.mxu0 %v523
        %674 = vmatprep.subr.mxu0 0.0
        %675 = vmatpush1.msra.mxu0 %v520
        %676 = vmatprep.subr.mxu0 0.0
        %677 = vmatpush1.msra.mxu0 %v517
        %678 = vmatprep.subr.mxu0 0.0
        %679 = vmatpush2.msra.mxu0 0.0
        %680 = vmatprep.subr.mxu0 0.0
        %681 = vmatpush2.msra.mxu0 0.0
        %682 = vmatprep.subr.mxu0 0.0
        %683 = vmatpush2.msra.mxu0 0.0
        %684 = vmatprep.subr.mxu0 0.0
        %685 = vmatpush2.msra.mxu0 0.0
        %686 = vmatprep.subr.mxu0 0.0
        %687 = vmatpush2.msra.mxu0 0.0
        %688 = vmatprep.subr.mxu0 0.0
        %689 = vmatpush2.msra.mxu0 0.0
        %690 = vmatprep.subr.mxu0 0.0
        %691 = vmatpush2.msra.mxu0 0.0
        %692 = vmatprep.subr.mxu0 0.0
        %693 = vmatpush2.msra.mxu0 0.0
        %694 = vmatprep.subr.mxu0 0.0
        %695 = vmatpush2.msra.mxu0 0.0
        %696 = vmatprep.subr.mxu0 0.0
        %697 = vmatpush2.msra.mxu0 0.0
        %698 = vmatprep.subr.mxu0 0.0
        %699 = vmatpush2.msra.mxu0 0.0
        %700 = vmatprep.subr.mxu0 0.0
        %701 = vmatpush2.msra.mxu0 0.0
        %702 = vmatprep.subr.mxu0 0.0
        %703 = vmatpush2.msra.mxu0 0.0
        %704 = vmatprep.subr.mxu0 0.0
        %705 = vmatpush2.msra.mxu0 0.0
        %706 = vmatprep.subr.mxu0 0.0
        %707 = vmatpush2.msra.mxu0 0.0
        %708 = vmatprep.subr.mxu0 0.0
        %709 = vmatpush2.msra.mxu0 0.0
        %710 = vmatprep.mubr.f32.mxu0 0.0
        %711 = vmatmul.mubr.f32.gmra.mxu0 %v512
        %v712 = vpop.f32.mrf.mxu0
        %v713 = vadd.f32 0.0, %v712
        %v714 = vpop.f32.mrf.mxu0
        %715 = vmatprep.mubr.f32.mxu0 0.0
        %716 = vmatmul.mubr.f32.gmra.mxu0 %v513
        %v717 = vpop.f32.mrf.mxu0
        %v718 = vadd.f32 0.0, %v717
        %v719 = vpop.f32.mrf.mxu0
        %720 = vmatprep.mubr.f32.mxu0 0.0
        %721 = vmatmul.mubr.f32.gmra.mxu0 %v514
        %v722 = vpop.f32.mrf.mxu0
        %v723 = vadd.f32 0.0, %v722
        %v724 = vpop.f32.mrf.mxu0
        %725 = vdwg.mxu0
        %vm726 = vcmask 523264
        %v728 = vsel %vm726, %v630, 0
        %v731 = vsel %vm726, %v636, 0
        %v734 = vsel %vm726, %v642, 0
        %v737 = vsel %vm726, %v632, 0
        %v740 = vsel %vm726, %v638, 0
        %v743 = vsel %vm726, %v644, 0
        %745 = vmatprep.subr.mxu0 0.0
        %746 = vmatpush1.xpose.msra.mxu0 0.0
        %747 = vmatprep.subr.mxu0 0.0
        %748 = vmatpush1.xpose.msra.mxu0 0.0
        %749 = vmatprep.subr.mxu0 0.0
        %750 = vmatpush1.xpose.msra.mxu0 0.0
        %751 = vmatprep.subr.mxu0 0.0
        %752 = vmatpush1.xpose.msra.mxu0 0.0
        %753 = vmatprep.subr.mxu0 0.0
        %754 = vmatpush1.xpose.msra.mxu0 0.0
        %755 = vmatprep.subr.mxu0 0.0
        %756 = vmatpush1.xpose.msra.mxu0 0.0
        %757 = vmatprep.subr.mxu0 0.0
        %758 = vmatpush1.xpose.msra.mxu0 0.0
        %759 = vmatprep.subr.mxu0 0.0
        %760 = vmatpush1.xpose.msra.mxu0 0.0
        %761 = vmatprep.subr.mxu0 0.0
        %762 = vmatpush1.xpose.msra.mxu0 0.0
        %763 = vmatprep.subr.mxu0 0.0
        %764 = vmatpush1.xpose.msra.mxu0 0.0
        %765 = vmatprep.subr.mxu0 0.0
        %766 = vmatpush1.xpose.msra.mxu0 0.0
        %767 = vmatprep.subr.mxu0 0.0
        %768 = vmatpush1.xpose.msra.mxu0 0.0
        %769 = vmatprep.subr.mxu0 0.0
        %770 = vmatpush1.xpose.msra.mxu0 0.0
        %771 = vmatprep.subr.mxu0 0.0
        %772 = vmatpush1.xpose.msra.mxu0 %v743
        %773 = vmatprep.subr.mxu0 0.0
        %774 = vmatpush1.xpose.msra.mxu0 %v740
        %775 = vmatprep.subr.mxu0 0.0
        %776 = vmatpush1.xpose.msra.mxu0 %v737
        %777 = vmatprep.subr.mxu0 0.0
        %778 = vmatpush2.xpose.msra.mxu0 0.0
        %779 = vmatprep.subr.mxu0 0.0
        %780 = vmatpush2.xpose.msra.mxu0 0.0
        %781 = vmatprep.subr.mxu0 0.0
        %782 = vmatpush2.xpose.msra.mxu0 0.0
        %783 = vmatprep.subr.mxu0 0.0
        %784 = vmatpush2.xpose.msra.mxu0 0.0
        %785 = vmatprep.subr.mxu0 0.0
        %786 = vmatpush2.xpose.msra.mxu0 0.0
        %787 = vmatprep.subr.mxu0 0.0
        %788 = vmatpush2.xpose.msra.mxu0 0.0
        %789 = vmatprep.subr.mxu0 0.0
        %790 = vmatpush2.xpose.msra.mxu0 0.0
        %791 = vmatprep.subr.mxu0 0.0
        %792 = vmatpush2.xpose.msra.mxu0 0.0
        %793 = vmatprep.subr.mxu0 0.0
        %794 = vmatpush2.xpose.msra.mxu0 0.0
        %795 = vmatprep.subr.mxu0 0.0
        %796 = vmatpush2.xpose.msra.mxu0 0.0
        %797 = vmatprep.subr.mxu0 0.0
        %798 = vmatpush2.xpose.msra.mxu0 0.0
        %799 = vmatprep.subr.mxu0 0.0
        %800 = vmatpush2.xpose.msra.mxu0 0.0
        %801 = vmatprep.subr.mxu0 0.0
        %802 = vmatpush2.xpose.msra.mxu0 0.0
        %803 = vmatprep.subr.mxu0 0.0
        %804 = vmatpush2.xpose.msra.mxu0 0.0
        %805 = vmatprep.subr.mxu0 0.0
        %806 = vmatpush2.xpose.msra.mxu0 0.0
        %807 = vmatprep.subr.mxu0 0.0
        %808 = vmatpush2.xpose.msra.mxu0 0.0
        %809 = vmatprep.mubr.f32.mxu0 0.0
        %810 = vmatmul.mubr.f32.gmra.mxu0 %v728
        %v811 = vpop.f32.mrf.mxu0
        %v812 = vadd.f32 0.0, %v811
        %v813 = vpop.f32.mrf.mxu0
        %814 = vmatprep.mubr.f32.mxu0 0.0
        %815 = vmatmul.mubr.f32.gmra.mxu0 %v731
        %v816 = vpop.f32.mrf.mxu0
        %v817 = vadd.f32 0.0, %v816
        %v818 = vpop.f32.mrf.mxu0
        %819 = vmatprep.mubr.f32.mxu0 0.0
        %820 = vmatmul.mubr.f32.gmra.mxu0 %v734
        %v821 = vpop.f32.mrf.mxu0
        %v822 = vadd.f32 0.0, %v821
        %v823 = vpop.f32.mrf.mxu0
        %824 = vdwg.mxu0
        %v825 = vmul.f32 %v812, 0.125
        %v826 = vmul.f32 %v817, 0.125
        %v827 = vmul.f32 %v822, 0.125
        %vm828 = vcmask 195584
        %v829 = vsel %vm828, %v825, -inf
        %830 = vmax.xlane.f32.xlu0 %v829
        %v831 = vpop.xlane.xlu0 %830
        %v832 = vsel %vm828, %v826, -inf
        %833 = vmax.xlane.f32.xlu0 %v832
        %v834 = vpop.xlane.xlu0 %833
        %v835 = vsel %vm828, %v827, -inf
        %836 = vmax.xlane.f32.xlu0 %v835
        %v837 = vpop.xlane.xlu0 %836
        %v838 = vsub.f32 %v825, %v831
        %v839 = vsub.f32 %v826, %v834
        %v840 = vsub.f32 %v827, %v837
        %v841 = vmul.f32 %v838, 1.442695
        %v842 = vpow.pop %v841
        %v843 = vmul.f32 %v839, 1.442695
        %v844 = vpow.pop %v843
        %v845 = vmul.f32 %v840, 1.442695
        %v846 = vpow.pop %v845
        %v847 = vsel %vm828, %v842, 0.0
        %848 = vadd.xlane.f32.xlu0 %v847
        %v849 = vpop.xlane.xlu0 %848
        %v850 = vsel %vm828, %v844, 0.0
        %851 = vadd.xlane.f32.xlu0 %v850
        %v852 = vpop.xlane.xlu0 %851
        %v853 = vsel %vm828, %v846, 0.0
        %854 = vadd.xlane.f32.xlu0 %v853
        %v855 = vpop.xlane.xlu0 %854
        %v856 = vrcp.pop %v849
        %v857 = vrcp.pop %v852
        %v858 = vrcp.pop %v855
        %v859 = vmul.f32 %v842, %v856
        %v860 = vmul.f32 %v844, %v857
        %v861 = vmul.f32 %v846, %v858
        %v863 = vsel %vm828, %v859, 0
        %v866 = vsel %vm828, %v860, 0
        %v869 = vsel %vm828, %v861, 0
        %871 = vmatprep.subr.mxu0 0.0
        %872 = vmatpush1.msra.mxu0 0.0
        %873 = vmatprep.subr.mxu0 0.0
        %874 = vmatpush1.msra.mxu0 0.0
        %875 = vmatprep.subr.mxu0 0.0
        %876 = vmatpush1.msra.mxu0 0.0
        %877 = vmatprep.subr.mxu0 0.0
        %878 = vmatpush1.msra.mxu0 0.0
        %879 = vmatprep.subr.mxu0 0.0
        %880 = vmatpush1.msra.mxu0 0.0
        %881 = vmatprep.subr.mxu0 0.0
        %882 = vmatpush1.msra.mxu0 0.0
        %883 = vmatprep.subr.mxu0 0.0
        %884 = vmatpush1.msra.mxu0 0.0
        %885 = vmatprep.subr.mxu0 0.0
        %886 = vmatpush1.msra.mxu0 0.0
        %887 = vmatprep.subr.mxu0 0.0
        %888 = vmatpush1.msra.mxu0 0.0
        %889 = vmatprep.subr.mxu0 0.0
        %890 = vmatpush1.msra.mxu0 0.0
        %891 = vmatprep.subr.mxu0 0.0
        %892 = vmatpush1.msra.mxu0 0.0
        %893 = vmatprep.subr.mxu0 0.0
        %894 = vmatpush1.msra.mxu0 0.0
        %895 = vmatprep.subr.mxu0 0.0
        %896 = vmatpush1.msra.mxu0 0.0
        %897 = vmatprep.subr.mxu0 0.0
        %898 = vmatpush1.msra.mxu0 %v723
        %899 = vmatprep.subr.mxu0 0.0
        %900 = vmatpush1.msra.mxu0 %v718
        %901 = vmatprep.subr.mxu0 0.0
        %902 = vmatpush1.msra.mxu0 %v713
        %903 = vmatprep.subr.mxu0 0.0
        %904 = vmatpush2.msra.mxu0 0.0
        %905 = vmatprep.subr.mxu0 0.0
        %906 = vmatpush2.msra.mxu0 0.0
        %907 = vmatprep.subr.mxu0 0.0
        %908 = vmatpush2.msra.mxu0 0.0
        %909 = vmatprep.subr.mxu0 0.0
        %910 = vmatpush2.msra.mxu0 0.0
        %911 = vmatprep.subr.mxu0 0.0
        %912 = vmatpush2.msra.mxu0 0.0
        %913 = vmatprep.subr.mxu0 0.0
        %914 = vmatpush2.msra.mxu0 0.0
        %915 = vmatprep.subr.mxu0 0.0
        %916 = vmatpush2.msra.mxu0 0.0
        %917 = vmatprep.subr.mxu0 0.0
        %918 = vmatpush2.msra.mxu0 0.0
        %919 = vmatprep.subr.mxu0 0.0
        %920 = vmatpush2.msra.mxu0 0.0
        %921 = vmatprep.subr.mxu0 0.0
        %922 = vmatpush2.msra.mxu0 0.0
        %923 = vmatprep.subr.mxu0 0.0
        %924 = vmatpush2.msra.mxu0 0.0
        %925 = vmatprep.subr.mxu0 0.0
        %926 = vmatpush2.msra.mxu0 0.0
        %927 = vmatprep.subr.mxu0 0.0
        %928 = vmatpush2.msra.mxu0 0.0
        %929 = vmatprep.subr.mxu0 0.0
        %930 = vmatpush2.msra.mxu0 0.0
        %931 = vmatprep.subr.mxu0 0.0
        %932 = vmatpush2.msra.mxu0 0.0
        %933 = vmatprep.subr.mxu0 0.0
        %934 = vmatpush2.msra.mxu0 0.0
        %935 = vmatprep.mubr.f32.mxu0 0.0
        %936 = vmatmul.mubr.f32.gmra.mxu0 %v863
        %v937 = vpop.f32.mrf.mxu0
        %v938 = vadd.f32 0.0, %v937
        %v939 = vpop.f32.mrf.mxu0
        %940 = vmatprep.mubr.f32.mxu0 0.0
        %941 = vmatmul.mubr.f32.gmra.mxu0 %v866
        %v942 = vpop.f32.mrf.mxu0
        %v943 = vadd.f32 0.0, %v942
        %v944 = vpop.f32.mrf.mxu0
        %945 = vmatprep.mubr.f32.mxu0 0.0
        %946 = vmatmul.mubr.f32.gmra.mxu0 %v869
        %v947 = vpop.f32.mrf.mxu0
        %v948 = vadd.f32 0.0, %v947
        %v949 = vpop.f32.mrf.mxu0
        %950 = vdwg.mxu0
        %951 = vrot.lane.b32.xlu0 %v630, 64
        %v952 = vpop.permute.xlu0 %951
        %953 = vrot.lane.b32.xlu0 %v636, 64
        %v954 = vpop.permute.xlu0 %953
        %955 = vrot.lane.b32.xlu0 %v642, 64
        %v956 = vpop.permute.xlu0 %955
        %957 = vrot.lane.b32.xlu0 %v632, 64
        %v958 = vpop.permute.xlu0 %957
        %959 = vrot.lane.b32.xlu0 %v638, 64
        %v960 = vpop.permute.xlu0 %959
        %961 = vrot.lane.b32.xlu0 %v644, 64
        %v962 = vpop.permute.xlu0 %961
        %v963 = vsel %vm726, %v952, 0
        %v965 = vsel %vm726, %v954, 0
        %v967 = vsel %vm726, %v956, 0
        %v969 = vsel %vm726, %v958, 0
        %v971 = vsel %vm726, %v960, 0
        %v973 = vsel %vm726, %v962, 0
        %975 = vmatprep.subr.mxu0 0.0
        %976 = vmatpush1.xpose.msra.mxu0 0.0
        %977 = vmatprep.subr.mxu0 0.0
        %978 = vmatpush1.xpose.msra.mxu0 0.0
        %979 = vmatprep.subr.mxu0 0.0
        %980 = vmatpush1.xpose.msra.mxu0 0.0
        %981 = vmatprep.subr.mxu0 0.0
        %982 = vmatpush1.xpose.msra.mxu0 0.0
        %983 = vmatprep.subr.mxu0 0.0
        %984 = vmatpush1.xpose.msra.mxu0 0.0
        %985 = vmatprep.subr.mxu0 0.0
        %986 = vmatpush1.xpose.msra.mxu0 0.0
        %987 = vmatprep.subr.mxu0 0.0
        %988 = vmatpush1.xpose.msra.mxu0 0.0
        %989 = vmatprep.subr.mxu0 0.0
        %990 = vmatpush1.xpose.msra.mxu0 0.0
        %991 = vmatprep.subr.mxu0 0.0
        %992 = vmatpush1.xpose.msra.mxu0 0.0
        %993 = vmatprep.subr.mxu0 0.0
        %994 = vmatpush1.xpose.msra.mxu0 0.0
        %995 = vmatprep.subr.mxu0 0.0
        %996 = vmatpush1.xpose.msra.mxu0 0.0
        %997 = vmatprep.subr.mxu0 0.0
        %998 = vmatpush1.xpose.msra.mxu0 0.0
        %999 = vmatprep.subr.mxu0 0.0
        %1000 = vmatpush1.xpose.msra.mxu0 0.0
        %1001 = vmatprep.subr.mxu0 0.0
        %1002 = vmatpush1.xpose.msra.mxu0 %v973
        %1003 = vmatprep.subr.mxu0 0.0
        %1004 = vmatpush1.xpose.msra.mxu0 %v971
        %1005 = vmatprep.subr.mxu0 0.0
        %1006 = vmatpush1.xpose.msra.mxu0 %v969
        %1007 = vmatprep.subr.mxu0 0.0
        %1008 = vmatpush2.xpose.msra.mxu0 0.0
        %1009 = vmatprep.subr.mxu0 0.0
        %1010 = vmatpush2.xpose.msra.mxu0 0.0
        %1011 = vmatprep.subr.mxu0 0.0
        %1012 = vmatpush2.xpose.msra.mxu0 0.0
        %1013 = vmatprep.subr.mxu0 0.0
        %1014 = vmatpush2.xpose.msra.mxu0 0.0
        %1015 = vmatprep.subr.mxu0 0.0
        %1016 = vmatpush2.xpose.msra.mxu0 0.0
        %1017 = vmatprep.subr.mxu0 0.0
        %1018 = vmatpush2.xpose.msra.mxu0 0.0
        %1019 = vmatprep.subr.mxu0 0.0
        %1020 = vmatpush2.xpose.msra.mxu0 0.0
        %1021 = vmatprep.subr.mxu0 0.0
        %1022 = vmatpush2.xpose.msra.mxu0 0.0
        %1023 = vmatprep.subr.mxu0 0.0
        %1024 = vmatpush2.xpose.msra.mxu0 0.0
        %1025 = vmatprep.subr.mxu0 0.0
        %1026 = vmatpush2.xpose.msra.mxu0 0.0
        %1027 = vmatprep.subr.mxu0 0.0
        %1028 = vmatpush2.xpose.msra.mxu0 0.0
        %1029 = vmatprep.subr.mxu0 0.0
        %1030 = vmatpush2.xpose.msra.mxu0 0.0
        %1031 = vmatprep.subr.mxu0 0.0
        %1032 = vmatpush2.xpose.msra.mxu0 0.0
        %1033 = vmatprep.subr.mxu0 0.0
        %1034 = vmatpush2.xpose.msra.mxu0 0.0
        %1035 = vmatprep.subr.mxu0 0.0
        %1036 = vmatpush2.xpose.msra.mxu0 0.0
        %1037 = vmatprep.subr.mxu0 0.0
        %1038 = vmatpush2.xpose.msra.mxu0 0.0
        %1039 = vmatprep.mubr.f32.mxu0 0.0
        %1040 = vmatmul.mubr.f32.gmra.mxu0 %v963
        %v1041 = vpop.f32.mrf.mxu0
        %v1042 = vadd.f32 0.0, %v1041
        %v1043 = vpop.f32.mrf.mxu0
        %1044 = vmatprep.mubr.f32.mxu0 0.0
        %1045 = vmatmul.mubr.f32.gmra.mxu0 %v965
        %v1046 = vpop.f32.mrf.mxu0
        %v1047 = vadd.f32 0.0, %v1046
        %v1048 = vpop.f32.mrf.mxu0
        %1049 = vmatprep.mubr.f32.mxu0 0.0
        %1050 = vmatmul.mubr.f32.gmra.mxu0 %v967
        %v1051 = vpop.f32.mrf.mxu0
        %v1052 = vadd.f32 0.0, %v1051
        %v1053 = vpop.f32.mrf.mxu0
        %1054 = vdwg.mxu0
        %v1055 = vmul.f32 %v1042, 0.125
        %v1056 = vmul.f32 %v1047, 0.125
        %v1057 = vmul.f32 %v1052, 0.125
        %v1058 = vsel %vm828, %v1055, -inf
        %1059 = vmax.xlane.f32.xlu0 %v1058
        %v1060 = vpop.xlane.xlu0 %1059
        %v1061 = vsel %vm828, %v1056, -inf
        %1062 = vmax.xlane.f32.xlu0 %v1061
        %v1063 = vpop.xlane.xlu0 %1062
        %v1064 = vsel %vm828, %v1057, -inf
        %1065 = vmax.xlane.f32.xlu0 %v1064
        %v1066 = vpop.xlane.xlu0 %1065
        %v1067 = vsub.f32 %v1055, %v1060
        %v1068 = vsub.f32 %v1056, %v1063
        %v1069 = vsub.f32 %v1057, %v1066
        %v1070 = vmul.f32 %v1067, 1.442695
        %v1071 = vpow.pop %v1070
        %v1072 = vmul.f32 %v1068, 1.442695
        %v1073 = vpow.pop %v1072
        %v1074 = vmul.f32 %v1069, 1.442695
        %v1075 = vpow.pop %v1074
        %v1076 = vsel %vm828, %v1071, 0.0
        %1077 = vadd.xlane.f32.xlu0 %v1076
        %v1078 = vpop.xlane.xlu0 %1077
        %v1079 = vsel %vm828, %v1073, 0.0
        %1080 = vadd.xlane.f32.xlu0 %v1079
        %v1081 = vpop.xlane.xlu0 %1080
        %v1082 = vsel %vm828, %v1075, 0.0
        %1083 = vadd.xlane.f32.xlu0 %v1082
        %v1084 = vpop.xlane.xlu0 %1083
        %v1085 = vrcp.pop %v1078
        %v1086 = vrcp.pop %v1081
        %v1087 = vrcp.pop %v1084
        %v1088 = vmul.f32 %v1071, %v1085
        %v1089 = vmul.f32 %v1073, %v1086
        %v1090 = vmul.f32 %v1075, %v1087
        %1094 = vrot.lane.b32.xlu0 %v713, 64
        %v1095 = vpop.permute.xlu0 %1094
        %1096 = vrot.lane.b32.xlu0 %v718, 64
        %v1097 = vpop.permute.xlu0 %1096
        %1098 = vrot.lane.b32.xlu0 %v723, 64
        %v1099 = vpop.permute.xlu0 %1098
        %v1104 = vsel %vm828, %v1088, 0
        %v1107 = vsel %vm828, %v1089, 0
        %v1110 = vsel %vm828, %v1090, 0
        %1112 = vmatprep.subr.mxu0 0.0
        %1113 = vmatpush1.msra.mxu0 0.0
        %1114 = vmatprep.subr.mxu0 0.0
        %1115 = vmatpush1.msra.mxu0 0.0
        %1116 = vmatprep.subr.mxu0 0.0
        %1117 = vmatpush1.msra.mxu0 0.0
        %1118 = vmatprep.subr.mxu0 0.0
        %1119 = vmatpush1.msra.mxu0 0.0
        %1120 = vmatprep.subr.mxu0 0.0
        %1121 = vmatpush1.msra.mxu0 0.0
        %1122 = vmatprep.subr.mxu0 0.0
        %1123 = vmatpush1.msra.mxu0 0.0
        %1124 = vmatprep.subr.mxu0 0.0
        %1125 = vmatpush1.msra.mxu0 0.0
        %1126 = vmatprep.subr.mxu0 0.0
        %1127 = vmatpush1.msra.mxu0 0.0
        %1128 = vmatprep.subr.mxu0 0.0
        %1129 = vmatpush1.msra.mxu0 0.0
        %1130 = vmatprep.subr.mxu0 0.0
        %1131 = vmatpush1.msra.mxu0 0.0
        %1132 = vmatprep.subr.mxu0 0.0
        %1133 = vmatpush1.msra.mxu0 0.0
        %1134 = vmatprep.subr.mxu0 0.0
        %1135 = vmatpush1.msra.mxu0 0.0
        %1136 = vmatprep.subr.mxu0 0.0
        %1137 = vmatpush1.msra.mxu0 0.0
        %1138 = vmatprep.subr.mxu0 0.0
        %1139 = vmatpush1.msra.mxu0 %v1099
        %1140 = vmatprep.subr.mxu0 0.0
        %1141 = vmatpush1.msra.mxu0 %v1097
        %1142 = vmatprep.subr.mxu0 0.0
        %1143 = vmatpush1.msra.mxu0 %v1095
        %1144 = vmatprep.subr.mxu0 0.0
        %1145 = vmatpush2.msra.mxu0 0.0
        %1146 = vmatprep.subr.mxu0 0.0
        %1147 = vmatpush2.msra.mxu0 0.0
        %1148 = vmatprep.subr.mxu0 0.0
        %1149 = vmatpush2.msra.mxu0 0.0
        %1150 = vmatprep.subr.mxu0 0.0
        %1151 = vmatpush2.msra.mxu0 0.0
        %1152 = vmatprep.subr.mxu0 0.0
        %1153 = vmatpush2.msra.mxu0 0.0
        %1154 = vmatprep.subr.mxu0 0.0
        %1155 = vmatpush2.msra.mxu0 0.0
        %1156 = vmatprep.subr.mxu0 0.0
        %1157 = vmatpush2.msra.mxu0 0.0
        %1158 = vmatprep.subr.mxu0 0.0
        %1159 = vmatpush2.msra.mxu0 0.0
        %1160 = vmatprep.subr.mxu0 0.0
        %1161 = vmatpush2.msra.mxu0 0.0
        %1162 = vmatprep.subr.mxu0 0.0
        %1163 = vmatpush2.msra.mxu0 0.0
        %1164 = vmatprep.subr.mxu0 0.0
        %1165 = vmatpush2.msra.mxu0 0.0
        %1166 = vmatprep.subr.mxu0 0.0
        %1167 = vmatpush2.msra.mxu0 0.0
        %1168 = vmatprep.subr.mxu0 0.0
        %1169 = vmatpush2.msra.mxu0 0.0
        %1170 = vmatprep.subr.mxu0 0.0
        %1171 = vmatpush2.msra.mxu0 0.0
        %1172 = vmatprep.subr.mxu0 0.0
        %1173 = vmatpush2.msra.mxu0 0.0
        %1174 = vmatprep.subr.mxu0 0.0
        %1175 = vmatpush2.msra.mxu0 0.0
        %1176 = vmatprep.mubr.f32.mxu0 0.0
        %1177 = vmatmul.mubr.f32.gmra.mxu0 %v1104
        %v1178 = vpop.f32.mrf.mxu0
        %v1179 = vadd.f32 0.0, %v1178
        %v1180 = vpop.f32.mrf.mxu0
        %1181 = vmatprep.mubr.f32.mxu0 0.0
        %1182 = vmatmul.mubr.f32.gmra.mxu0 %v1107
        %v1183 = vpop.f32.mrf.mxu0
        %v1184 = vadd.f32 0.0, %v1183
        %v1185 = vpop.f32.mrf.mxu0
        %1186 = vmatprep.mubr.f32.mxu0 0.0
        %1187 = vmatmul.mubr.f32.gmra.mxu0 %v1110
        %v1188 = vpop.f32.mrf.mxu0
        %v1189 = vadd.f32 0.0, %v1188
        %v1190 = vpop.f32.mrf.mxu0
        %1191 = vdwg.mxu0
        %1195 = vrot.lane.b32.xlu0 %v1179, 64
        %v1196 = vpop.permute.xlu0 %1195
        %1197 = vrot.lane.b32.xlu0 %v1184, 64
        %v1198 = vpop.permute.xlu0 %1197
        %1199 = vrot.lane.b32.xlu0 %v1189, 64
        %v1200 = vpop.permute.xlu0 %1199
        %v1204 = vsel %vm726, %v938, %v1196
        %v1205 = vsel %vm726, %v943, %v1198
        %v1206 = vsel %vm726, %v948, %v1200
        %v1207 = vld [vmem:[#allocation2] sm:$0xff]
        %v1208 = vld [vmem:[#allocation2 + $0x8] sm:$0xff]
        %v1209 = vld [vmem:[#allocation2 + $0x10] sm:$0xff]
        %v1210 = vld [vmem:[#allocation2 + $0x18] sm:$0xff]
        %v1211 = vld [vmem:[#allocation2 + $0x20] sm:$0xff]
        %v1212 = vld [vmem:[#allocation2 + $0x28] sm:$0xff]
        %v1213 = vld [vmem:[#allocation2 + $0x30] sm:$0xff]
        %v1214 = vld [vmem:[#allocation2 + $0x38] sm:$0xff]
        %v1215 = vld [vmem:[#allocation2 + $0x40] sm:$0xff]
        %v1216 = vld [vmem:[#allocation2 + $0x48] sm:$0xff]
        %v1217 = vld [vmem:[#allocation2 + $0x50] sm:$0xff]
        %v1218 = vld [vmem:[#allocation2 + $0x58] sm:$0xff]
        %v1219 = vld [vmem:[#allocation2 + $0x60] sm:$0xff]
        %v1220 = vld [vmem:[#allocation2 + $0x68] sm:$0xff]
        %v1221 = vld [vmem:[#allocation2 + $0x70] sm:$0xff]
        %v1222 = vld [vmem:[#allocation2 + $0x78] sm:$0xff]
        %v1223 = vld [vmem:[%s5] sm:$0x1]
        %v1225 = vlaneseq
        %v1226 = vshrl.u32 %v1225, 7
        %v1227 = vsub.s32 0, %v1226
        %v1228 = vrot.slane %v1223, %v1227
        %1230 = vmatprep.subr.mxu0 0.0
        %1231 = vmatpush1.msra.mxu0 %v1222
        %1232 = vmatprep.subr.mxu0 0.0
        %1233 = vmatpush1.msra.mxu0 %v1221
        %1234 = vmatprep.subr.mxu0 0.0
        %1235 = vmatpush1.msra.mxu0 %v1220
        %1236 = vmatprep.subr.mxu0 0.0
        %1237 = vmatpush1.msra.mxu0 %v1219
        %1238 = vmatprep.subr.mxu0 0.0
        %1239 = vmatpush1.msra.mxu0 %v1218
        %1240 = vmatprep.subr.mxu0 0.0
        %1241 = vmatpush1.msra.mxu0 %v1217
        %1242 = vmatprep.subr.mxu0 0.0
        %1243 = vmatpush1.msra.mxu0 %v1216
        %1244 = vmatprep.subr.mxu0 0.0
        %1245 = vmatpush1.msra.mxu0 %v1215
        %1246 = vmatprep.subr.mxu0 0.0
        %1247 = vmatpush1.msra.mxu0 %v1214
        %1248 = vmatprep.subr.mxu0 0.0
        %1249 = vmatpush1.msra.mxu0 %v1213
        %1250 = vmatprep.subr.mxu0 0.0
        %1251 = vmatpush1.msra.mxu0 %v1212
        %1252 = vmatprep.subr.mxu0 0.0
        %1253 = vmatpush1.msra.mxu0 %v1211
        %1254 = vmatprep.subr.mxu0 0.0
        %1255 = vmatpush1.msra.mxu0 %v1210
        %1256 = vmatprep.subr.mxu0 0.0
        %1257 = vmatpush1.msra.mxu0 %v1209
        %1258 = vmatprep.subr.mxu0 0.0
        %1259 = vmatpush1.msra.mxu0 %v1208
        %1260 = vmatprep.subr.mxu0 0.0
        %1261 = vmatpush1.msra.mxu0 %v1207
        %1262 = vmatprep.subr.mxu0 0.0
        %1263 = vmatpush2.msra.mxu0 0.0
        %1264 = vmatprep.subr.mxu0 0.0
        %1265 = vmatpush2.msra.mxu0 0.0
        %1266 = vmatprep.subr.mxu0 0.0
        %1267 = vmatpush2.msra.mxu0 0.0
        %1268 = vmatprep.subr.mxu0 0.0
        %1269 = vmatpush2.msra.mxu0 0.0
        %1270 = vmatprep.subr.mxu0 0.0
        %1271 = vmatpush2.msra.mxu0 0.0
        %1272 = vmatprep.subr.mxu0 0.0
        %1273 = vmatpush2.msra.mxu0 0.0
        %1274 = vmatprep.subr.mxu0 0.0
        %1275 = vmatpush2.msra.mxu0 0.0
        %1276 = vmatprep.subr.mxu0 0.0
        %1277 = vmatpush2.msra.mxu0 0.0
        %1278 = vmatprep.subr.mxu0 0.0
        %1279 = vmatpush2.msra.mxu0 0.0
        %1280 = vmatprep.subr.mxu0 0.0
        %1281 = vmatpush2.msra.mxu0 0.0
        %1282 = vmatprep.subr.mxu0 0.0
        %1283 = vmatpush2.msra.mxu0 0.0
        %1284 = vmatprep.subr.mxu0 0.0
        %1285 = vmatpush2.msra.mxu0 0.0
        %1286 = vmatprep.subr.mxu0 0.0
        %1287 = vmatpush2.msra.mxu0 0.0
        %1288 = vmatprep.subr.mxu0 0.0
        %1289 = vmatpush2.msra.mxu0 0.0
        %1290 = vmatprep.subr.mxu0 0.0
        %1291 = vmatpush2.msra.mxu0 0.0
        %1292 = vmatprep.subr.mxu0 0.0
        %1293 = vmatpush2.msra.mxu0 0.0
        %1294 = vmatprep.mubr.f32.mxu0 0.0
        %1295 = vmatmul.mubr.f32.gmra.mxu0 %v1204
        %v1296 = vpop.f32.mrf.mxu0
        %v1297 = vadd.f32 %v1228, %v1296
        %v1298 = vpop.f32.mrf.mxu0
        %1299 = vmatprep.mubr.f32.mxu0 0.0
        %1300 = vmatmul.mubr.f32.gmra.mxu0 %v1205
        %v1301 = vpop.f32.mrf.mxu0
        %v1302 = vadd.f32 %v1228, %v1301
        %v1303 = vpop.f32.mrf.mxu0
        %1304 = vmatprep.mubr.f32.mxu0 0.0
        %1305 = vmatmul.mubr.f32.gmra.mxu0 %v1206
        %v1306 = vpop.f32.mrf.mxu0
        %v1307 = vadd.f32 %v1228, %v1306
        %v1308 = vpop.f32.mrf.mxu0
        %1309 = vdwg.mxu0
        %v1310 = vadd.f32 %v458, %v1297
        %v1311 = vadd.f32 %v459, %v1302
        %v1312 = vadd.f32 %v460, %v1307
        %1313 = vadd.xlane.f32.xlu0 %v1310
        %v1314 = vpop.xlane.xlu0 %1313
        %1315 = vadd.xlane.f32.xlu0 %v1311
        %v1316 = vpop.xlane.xlu0 %1315
        %1317 = vadd.xlane.f32.xlu0 %v1312
        %v1318 = vpop.xlane.xlu0 %1317
        %v1319 = vmul.f32 %v1314, %v467
        %v1320 = vmul.f32 %v1316, %v467
        %v1321 = vmul.f32 %v1318, %v467
        %v1322 = vsub.f32 %v1310, %v1319
        %v1323 = vsub.f32 %v1311, %v1320
        %v1324 = vsub.f32 %v1312, %v1321
        %v1325 = vmul.f32 %v1322, %v1322
        %v1326 = vmul.f32 %v1323, %v1323
        %v1327 = vmul.f32 %v1324, %v1324
        %1328 = vadd.xlane.f32.xlu0 %v1325
        %v1329 = vpop.xlane.xlu0 %1328
        %1330 = vadd.xlane.f32.xlu0 %v1326
        %v1331 = vpop.xlane.xlu0 %1330
        %1332 = vadd.xlane.f32.xlu0 %v1327
        %v1333 = vpop.xlane.xlu0 %1332
        %v1334 = vmul.f32 %v1329, %v467
        %v1335 = vmul.f32 %v1331, %v467
        %v1336 = vmul.f32 %v1333, %v467
        %v1337 = vadd.f32 %v1334, 1e-05
        %v1338 = vadd.f32 %v1335, 1e-05
        %v1339 = vadd.f32 %v1336, 1e-05
        %v1340 = vrsqrt.pop %v1337
        %v1341 = vrsqrt.pop %v1338
        %v1342 = vrsqrt.pop %v1339
        %v1343 = vmul.f32 %v1322, %v1340
        %v1344 = vmul.f32 %v1323, %v1341
        %v1345 = vmul.f32 %v1324, %v1342
        %v1346 = vld [vmem:[%s6] sm:$0x1]
        %v1348 = vlaneseq
        %v1349 = vshrl.u32 %v1348, 7
        %v1350 = vsub.s32 0, %v1349
        %v1351 = vrot.slane %v1346, %v1350
        %v1353 = vmul.f32 %v1343, %v1351
        %v1354 = vmul.f32 %v1344, %v1351
        %v1355 = vmul.f32 %v1345, %v1351
        %v1356 = vld [vmem:[%s7] sm:$0x1]
        %v1358 = vlaneseq
        %v1359 = vshrl.u32 %v1358, 7
        %v1360 = vsub.s32 0, %v1359
        %v1361 = vrot.slane %v1356, %v1360
        %v1363 = vadd.f32 %v1353, %v1361
        %v1364 = vadd.f32 %v1354, %v1361
        %v1365 = vadd.f32 %v1355, %v1361
        %v1366 = vld [vmem:[#allocation4] sm:$0xff]
        %v1367 = vld [vmem:[#allocation4 + $0x8] sm:$0xff]
        %v1368 = vld [vmem:[#allocation4 + $0x10] sm:$0xff]
        %v1369 = vld [vmem:[#allocation4 + $0x18] sm:$0xff]
        %v1370 = vld [vmem:[#allocation4 + $0x20] sm:$0xff]
        %v1371 = vld [vmem:[#allocation4 + $0x28] sm:$0xff]
        %v1372 = vld [vmem:[#allocation4 + $0x30] sm:$0xff]
        %v1373 = vld [vmem:[#allocation4 + $0x38] sm:$0xff]
        %v1374 = vld [vmem:[#allocation4 + $0x40] sm:$0xff]
        %v1375 = vld [vmem:[#allocation4 + $0x48] sm:$0xff]
        %v1376 = vld [vmem:[#allocation4 + $0x50] sm:$0xff]
        %v1377 = vld [vmem:[#allocation4 + $0x58] sm:$0xff]
        %v1378 = vld [vmem:[#allocation4 + $0x60] sm:$0xff]
        %v1379 = vld [vmem:[#allocation4 + $0x68] sm:$0xff]
        %v1380 = vld [vmem:[#allocation4 + $0x70] sm:$0xff]
        %v1381 = vld [vmem:[#allocation4 + $0x78] sm:$0xff]
        %v1382 = vld [vmem:[#allocation4 + $0x80] sm:$0xff]
        %v1383 = vld [vmem:[#allocation4 + $0x88] sm:$0xff]
        %v1384 = vld [vmem:[#allocation4 + $0x90] sm:$0xff]
        %v1385 = vld [vmem:[#allocation4 + $0x98] sm:$0xff]
        %v1386 = vld [vmem:[#allocation4 + $0xa0] sm:$0xff]
        %v1387 = vld [vmem:[#allocation4 + $0xa8] sm:$0xff]
        %v1388 = vld [vmem:[#allocation4 + $0xb0] sm:$0xff]
        %v1389 = vld [vmem:[#allocation4 + $0xb8] sm:$0xff]
        %v1390 = vld [vmem:[#allocation4 + $0xc0] sm:$0xff]
        %v1391 = vld [vmem:[#allocation4 + $0xc8] sm:$0xff]
        %v1392 = vld [vmem:[#allocation4 + $0xd0] sm:$0xff]
        %v1393 = vld [vmem:[#allocation4 + $0xd8] sm:$0xff]
        %v1394 = vld [vmem:[#allocation4 + $0xe0] sm:$0xff]
        %v1395 = vld [vmem:[#allocation4 + $0xe8] sm:$0xff]
        %v1396 = vld [vmem:[#allocation4 + $0xf0] sm:$0xff]
        %v1397 = vld [vmem:[#allocation4 + $0xf8] sm:$0xff]
        %v1398 = vld [vmem:[#allocation4 + $0x100] sm:$0xff]
        %v1399 = vld [vmem:[#allocation4 + $0x108] sm:$0xff]
        %v1400 = vld [vmem:[#allocation4 + $0x110] sm:$0xff]
        %v1401 = vld [vmem:[#allocation4 + $0x118] sm:$0xff]
        %v1402 = vld [vmem:[#allocation4 + $0x120] sm:$0xff]
        %v1403 = vld [vmem:[#allocation4 + $0x128] sm:$0xff]
        %v1404 = vld [vmem:[#allocation4 + $0x130] sm:$0xff]
        %v1405 = vld [vmem:[#allocation4 + $0x138] sm:$0xff]
        %v1406 = vld [vmem:[#allocation4 + $0x140] sm:$0xff]
        %v1407 = vld [vmem:[#allocation4 + $0x148] sm:$0xff]
        %v1408 = vld [vmem:[#allocation4 + $0x150] sm:$0xff]
        %v1409 = vld [vmem:[#allocation4 + $0x158] sm:$0xff]
        %v1410 = vld [vmem:[#allocation4 + $0x160] sm:$0xff]
        %v1411 = vld [vmem:[#allocation4 + $0x168] sm:$0xff]
        %v1412 = vld [vmem:[#allocation4 + $0x170] sm:$0xff]
        %v1413 = vld [vmem:[#allocation4 + $0x178] sm:$0xff]
        %v1414 = vld [vmem:[#allocation4 + $0x180] sm:$0xff]
        %v1415 = vld [vmem:[#allocation4 + $0x188] sm:$0xff]
        %v1416 = vld [vmem:[#allocation4 + $0x190] sm:$0xff]
        %v1417 = vld [vmem:[#allocation4 + $0x198] sm:$0xff]
        %v1418 = vld [vmem:[#allocation4 + $0x1a0] sm:$0xff]
        %v1419 = vld [vmem:[#allocation4 + $0x1a8] sm:$0xff]
        %v1420 = vld [vmem:[#allocation4 + $0x1b0] sm:$0xff]
        %v1421 = vld [vmem:[#allocation4 + $0x1b8] sm:$0xff]
        %v1422 = vld [vmem:[#allocation4 + $0x1c0] sm:$0xff]
        %v1423 = vld [vmem:[#allocation4 + $0x1c8] sm:$0xff]
        %v1424 = vld [vmem:[#allocation4 + $0x1d0] sm:$0xff]
        %v1425 = vld [vmem:[#allocation4 + $0x1d8] sm:$0xff]
        %v1426 = vld [vmem:[#allocation4 + $0x1e0] sm:$0xff]
        %v1427 = vld [vmem:[#allocation4 + $0x1e8] sm:$0xff]
        %v1428 = vld [vmem:[#allocation4 + $0x1f0] sm:$0xff]
        %v1429 = vld [vmem:[#allocation4 + $0x1f8] sm:$0xff]
        %v1430 = vld [vmem:[%s9] sm:$0xf]
        %v1432 = vlaneseq
        %v1433 = vshrl.u32 %v1432, 7
        %v1434 = vsub.s32 0, %v1433
        %v1435 = vrot.slane %v1430, %v1434
        %v1436 = vlaneseq
        %v1437 = vshrl.u32 %v1436, 7
        %v1438 = vsub.s32 1, %v1437
        %v1439 = vrot.slane %v1430, %v1438
        %v1440 = vlaneseq
        %v1441 = vshrl.u32 %v1440, 7
        %v1442 = vsub.s32 2, %v1441
        %v1443 = vrot.slane %v1430, %v1442
        %v1444 = vlaneseq
        %v1445 = vshrl.u32 %v1444, 7
        %v1446 = vsub.s32 3, %v1445
        %v1447 = vrot.slane %v1430, %v1446
        %1452 = vmatprep.subr.mxu0 %v1427
        %1453 = vmatpush1.msra.mxu0 %v1426
        %1454 = vmatprep.subr.mxu0 %v1423
        %1455 = vmatpush1.msra.mxu0 %v1422
        %1456 = vmatprep.subr.mxu0 %v1419
        %1457 = vmatpush1.msra.mxu0 %v1418
        %1458 = vmatprep.subr.mxu0 %v1415
        %1459 = vmatpush1.msra.mxu0 %v1414
        %1460 = vmatprep.subr.mxu0 %v1411
        %1461 = vmatpush1.msra.mxu0 %v1410
        %1462 = vmatprep.subr.mxu0 %v1407
        %1463 = vmatpush1.msra.mxu0 %v1406
        %1464 = vmatprep.subr.mxu0 %v1403
        %1465 = vmatpush1.msra.mxu0 %v1402
        %1466 = vmatprep.subr.mxu0 %v1399
        %1467 = vmatpush1.msra.mxu0 %v1398
        %1468 = vmatprep.subr.mxu0 %v1395
        %1469 = vmatpush1.msra.mxu0 %v1394
        %1470 = vmatprep.subr.mxu0 %v1391
        %1471 = vmatpush1.msra.mxu0 %v1390
        %1472 = vmatprep.subr.mxu0 %v1387
        %1473 = vmatpush1.msra.mxu0 %v1386
        %1474 = vmatprep.subr.mxu0 %v1383
        %1475 = vmatpush1.msra.mxu0 %v1382
        %1476 = vmatprep.subr.mxu0 %v1379
        %1477 = vmatpush1.msra.mxu0 %v1378
        %1478 = vmatprep.subr.mxu0 %v1375
        %1479 = vmatpush1.msra.mxu0 %v1374
        %1480 = vmatprep.subr.mxu0 %v1371
        %1481 = vmatpush1.msra.mxu0 %v1370
        %1482 = vmatprep.subr.mxu0 %v1367
        %1483 = vmatpush1.msra.mxu0 %v1366
        %1484 = vmatprep.subr.mxu0 0.0
        %1485 = vmatpush2.msra.mxu0 0.0
        %1486 = vmatprep.subr.mxu0 0.0
        %1487 = vmatpush2.msra.mxu0 0.0
        %1488 = vmatprep.subr.mxu0 0.0
        %1489 = vmatpush2.msra.mxu0 0.0
        %1490 = vmatprep.subr.mxu0 0.0
        %1491 = vmatpush2.msra.mxu0 0.0
        %1492 = vmatprep.subr.mxu0 0.0
        %1493 = vmatpush2.msra.mxu0 0.0
        %1494 = vmatprep.subr.mxu0 0.0
        %1495 = vmatpush2.msra.mxu0 0.0
        %1496 = vmatprep.subr.mxu0 0.0
        %1497 = vmatpush2.msra.mxu0 0.0
        %1498 = vmatprep.subr.mxu0 0.0
        %1499 = vmatpush2.msra.mxu0 0.0
        %1500 = vmatprep.subr.mxu0 0.0
        %1501 = vmatpush2.msra.mxu0 0.0
        %1502 = vmatprep.subr.mxu0 0.0
        %1503 = vmatpush2.msra.mxu0 0.0
        %1504 = vmatprep.subr.mxu0 0.0
        %1505 = vmatpush2.msra.mxu0 0.0
        %1506 = vmatprep.subr.mxu0 0.0
        %1507 = vmatpush2.msra.mxu0 0.0
        %1508 = vmatprep.subr.mxu0 0.0
        %1509 = vmatpush2.msra.mxu0 0.0
        %1510 = vmatprep.subr.mxu0 0.0
        %1511 = vmatpush2.msra.mxu0 0.0
        %1512 = vmatprep.subr.mxu0 0.0
        %1513 = vmatpush2.msra.mxu0 0.0
        %1514 = vmatprep.subr.mxu0 0.0
        %1515 = vmatpush2.msra.mxu0 0.0
        %1516 = vmatprep.mubr.f32.mxu0 0.0
        %1517 = vmatmul.mubr.f32.gmra.mxu0 %v1363
        %v1518 = vpop.f32.mrf.mxu0
        %v1519 = vadd.f32 %v1435, %v1518
        %v1520 = vpop.f32.mrf.mxu0
        %v1521 = vadd.f32 %v1439, %v1520
        %1522 = vmatprep.mubr.f32.mxu0 0.0
        %1523 = vmatmul.mubr.f32.gmra.mxu0 %v1364
        %v1524 = vpop.f32.mrf.mxu0
        %v1525 = vadd.f32 %v1435, %v1524
        %v1526 = vpop.f32.mrf.mxu0
        %v1527 = vadd.f32 %v1439, %v1526
        %1528 = vmatprep.mubr.f32.mxu0 0.0
        %1529 = vmatmul.mubr.f32.gmra.mxu0 %v1365
        %v1530 = vpop.f32.mrf.mxu0
        %v1531 = vadd.f32 %v1435, %v1530
        %v1532 = vpop.f32.mrf.mxu0
        %v1533 = vadd.f32 %v1439, %v1532
        %1534 = vdwg.mxu0
        %1535 = vmatprep.subr.mxu0 %v1429
        %1536 = vmatpush1.msra.mxu0 %v1428
        %1537 = vmatprep.subr.mxu0 %v1425
        %1538 = vmatpush1.msra.mxu0 %v1424
        %1539 = vmatprep.subr.mxu0 %v1421
        %1540 = vmatpush1.msra.mxu0 %v1420
        %1541 = vmatprep.subr.mxu0 %v1417
        %1542 = vmatpush1.msra.mxu0 %v1416
        %1543 = vmatprep.subr.mxu0 %v1413
        %1544 = vmatpush1.msra.mxu0 %v1412
        %1545 = vmatprep.subr.mxu0 %v1409
        %1546 = vmatpush1.msra.mxu0 %v1408
        %1547 = vmatprep.subr.mxu0 %v1405
        %1548 = vmatpush1.msra.mxu0 %v1404
        %1549 = vmatprep.subr.mxu0 %v1401
        %1550 = vmatpush1.msra.mxu0 %v1400
        %1551 = vmatprep.subr.mxu0 %v1397
        %1552 = vmatpush1.msra.mxu0 %v1396
        %1553 = vmatprep.subr.mxu0 %v1393
        %1554 = vmatpush1.msra.mxu0 %v1392
        %1555 = vmatprep.subr.mxu0 %v1389
        %1556 = vmatpush1.msra.mxu0 %v1388
        %1557 = vmatprep.subr.mxu0 %v1385
        %1558 = vmatpush1.msra.mxu0 %v1384
        %1559 = vmatprep.subr.mxu0 %v1381
        %1560 = vmatpush1.msra.mxu0 %v1380
        %1561 = vmatprep.subr.mxu0 %v1377
        %1562 = vmatpush1.msra.mxu0 %v1376
        %1563 = vmatprep.subr.mxu0 %v1373
        %1564 = vmatpush1.msra.mxu0 %v1372
        %1565 = vmatprep.subr.mxu0 %v1369
        %1566 = vmatpush1.msra.mxu0 %v1368
        %1567 = vmatprep.subr.mxu0 0.0
        %1568 = vmatpush2.msra.mxu0 0.0
        %1569 = vmatprep.subr.mxu0 0.0
        %1570 = vmatpush2.msra.mxu0 0.0
        %1571 = vmatprep.subr.mxu0 0.0
        %1572 = vmatpush2.msra.mxu0 0.0
        %1573 = vmatprep.subr.mxu0 0.0
        %1574 = vmatpush2.msra.mxu0 0.0
        %1575 = vmatprep.subr.mxu0 0.0
        %1576 = vmatpush2.msra.mxu0 0.0
        %1577 = vmatprep.subr.mxu0 0.0
        %1578 = vmatpush2.msra.mxu0 0.0
        %1579 = vmatprep.subr.mxu0 0.0
        %1580 = vmatpush2.msra.mxu0 0.0
        %1581 = vmatprep.subr.mxu0 0.0
        %1582 = vmatpush2.msra.mxu0 0.0
        %1583 = vmatprep.subr.mxu0 0.0
        %1584 = vmatpush2.msra.mxu0 0.0
        %1585 = vmatprep.subr.mxu0 0.0
        %1586 = vmatpush2.msra.mxu0 0.0
        %1587 = vmatprep.subr.mxu0 0.0
        %1588 = vmatpush2.msra.mxu0 0.0
        %1589 = vmatprep.subr.mxu0 0.0
        %1590 = vmatpush2.msra.mxu0 0.0
        %1591 = vmatprep.subr.mxu0 0.0
        %1592 = vmatpush2.msra.mxu0 0.0
        %1593 = vmatprep.subr.mxu0 0.0
        %1594 = vmatpush2.msra.mxu0 0.0
        %1595 = vmatprep.subr.mxu0 0.0
        %1596 = vmatpush2.msra.mxu0 0.0
        %1597 = vmatprep.subr.mxu0 0.0
        %1598 = vmatpush2.msra.mxu0 0.0
        %1599 = vmatprep.mubr.f32.mxu0 0.0
        %1600 = vmatmul.mubr.f32.gmra.mxu0 %v1363
        %v1601 = vpop.f32.mrf.mxu0
        %v1602 = vadd.f32 %v1443, %v1601
        %v1603 = vpop.f32.mrf.mxu0
        %v1604 = vadd.f32 %v1447, %v1603
        %1605 = vmatprep.mubr.f32.mxu0 0.0
        %1606 = vmatmul.mubr.f32.gmra.mxu0 %v1364
        %v1607 = vpop.f32.mrf.mxu0
        %v1608 = vadd.f32 %v1443, %v1607
        %v1609 = vpop.f32.mrf.mxu0
        %v1610 = vadd.f32 %v1447, %v1609
        %1611 = vmatprep.mubr.f32.mxu0 0.0
        %1612 = vmatmul.mubr.f32.gmra.mxu0 %v1365
        %v1613 = vpop.f32.mrf.mxu0
        %v1614 = vadd.f32 %v1443, %v1613
        %v1615 = vpop.f32.mrf.mxu0
        %v1616 = vadd.f32 %v1447, %v1615
        %1617 = vdwg.mxu0
        %v1618 = vmul.f32 %v1519, 0.5
        %v1619 = vmul.f32 %v1521, 0.5
        %v1620 = vmul.f32 %v1602, 0.5
        %v1621 = vmul.f32 %v1604, 0.5
        %v1622 = vmul.f32 %v1525, 0.5
        %v1623 = vmul.f32 %v1527, 0.5
        %v1624 = vmul.f32 %v1608, 0.5
        %v1625 = vmul.f32 %v1610, 0.5
        %v1626 = vmul.f32 %v1531, 0.5
        %v1627 = vmul.f32 %v1533, 0.5
        %v1628 = vmul.f32 %v1614, 0.5
        %v1629 = vmul.f32 %v1616, 0.5
        %v1630 = vmul.f32 %v1519, 0.70710677
        %v1631 = vmul.f32 %v1521, 0.70710677
        %v1632 = vmul.f32 %v1602, 0.70710677
        %v1633 = vmul.f32 %v1604, 0.70710677
        %v1634 = vmul.f32 %v1525, 0.70710677
        %v1635 = vmul.f32 %v1527, 0.70710677
        %v1636 = vmul.f32 %v1608, 0.70710677
        %v1637 = vmul.f32 %v1610, 0.70710677
        %v1638 = vmul.f32 %v1531, 0.70710677
        %v1639 = vmul.f32 %v1533, 0.70710677
        %v1640 = vmul.f32 %v1614, 0.70710677
        %v1641 = vmul.f32 %v1616, 0.70710677
        %v1642 = verf.f32.pop %v1630
        %v1643 = verf.f32.pop %v1631
        %v1644 = verf.f32.pop %v1632
        %v1645 = verf.f32.pop %v1633
        %v1646 = verf.f32.pop %v1634
        %v1647 = verf.f32.pop %v1635
        %v1648 = verf.f32.pop %v1636
        %v1649 = verf.f32.pop %v1637
        %v1650 = verf.f32.pop %v1638
        %v1651 = verf.f32.pop %v1639
        %v1652 = verf.f32.pop %v1640
        %v1653 = verf.f32.pop %v1641
        %v1654 = vadd.f32 %v1642, 1.0
        %v1655 = vadd.f32 %v1643, 1.0
        %v1656 = vadd.f32 %v1644, 1.0
        %v1657 = vadd.f32 %v1645, 1.0
        %v1658 = vadd.f32 %v1646, 1.0
        %v1659 = vadd.f32 %v1647, 1.0
        %v1660 = vadd.f32 %v1648, 1.0
        %v1661 = vadd.f32 %v1649, 1.0
        %v1662 = vadd.f32 %v1650, 1.0
        %v1663 = vadd.f32 %v1651, 1.0
        %v1664 = vadd.f32 %v1652, 1.0
        %v1665 = vadd.f32 %v1653, 1.0
        %v1666 = vmul.f32 %v1618, %v1654
        %v1667 = vmul.f32 %v1619, %v1655
        %v1668 = vmul.f32 %v1620, %v1656
        %v1669 = vmul.f32 %v1621, %v1657
        %v1670 = vmul.f32 %v1622, %v1658
        %v1671 = vmul.f32 %v1623, %v1659
        %v1672 = vmul.f32 %v1624, %v1660
        %v1673 = vmul.f32 %v1625, %v1661
        %v1674 = vmul.f32 %v1626, %v1662
        %v1675 = vmul.f32 %v1627, %v1663
        %v1676 = vmul.f32 %v1628, %v1664
        %v1677 = vmul.f32 %v1629, %v1665
        %v1678 = vld [vmem:[#allocation6] sm:$0xff]
        %v1679 = vld [vmem:[#allocation6 + $0x8] sm:$0xff]
        %v1680 = vld [vmem:[#allocation6 + $0x10] sm:$0xff]
        %v1681 = vld [vmem:[#allocation6 + $0x18] sm:$0xff]
        %v1682 = vld [vmem:[#allocation6 + $0x20] sm:$0xff]
        %v1683 = vld [vmem:[#allocation6 + $0x28] sm:$0xff]
        %v1684 = vld [vmem:[#allocation6 + $0x30] sm:$0xff]
        %v1685 = vld [vmem:[#allocation6 + $0x38] sm:$0xff]
        %v1686 = vld [vmem:[#allocation6 + $0x40] sm:$0xff]
        %v1687 = vld [vmem:[#allocation6 + $0x48] sm:$0xff]
        %v1688 = vld [vmem:[#allocation6 + $0x50] sm:$0xff]
        %v1689 = vld [vmem:[#allocation6 + $0x58] sm:$0xff]
        %v1690 = vld [vmem:[#allocation6 + $0x60] sm:$0xff]
        %v1691 = vld [vmem:[#allocation6 + $0x68] sm:$0xff]
        %v1692 = vld [vmem:[#allocation6 + $0x70] sm:$0xff]
        %v1693 = vld [vmem:[#allocation6 + $0x78] sm:$0xff]
        %v1694 = vld [vmem:[#allocation6 + $0x80] sm:$0xff]
        %v1695 = vld [vmem:[#allocation6 + $0x88] sm:$0xff]
        %v1696 = vld [vmem:[#allocation6 + $0x90] sm:$0xff]
        %v1697 = vld [vmem:[#allocation6 + $0x98] sm:$0xff]
        %v1698 = vld [vmem:[#allocation6 + $0xa0] sm:$0xff]
        %v1699 = vld [vmem:[#allocation6 + $0xa8] sm:$0xff]
        %v1700 = vld [vmem:[#allocation6 + $0xb0] sm:$0xff]
        %v1701 = vld [vmem:[#allocation6 + $0xb8] sm:$0xff]
        %v1702 = vld [vmem:[#allocation6 + $0xc0] sm:$0xff]
        %v1703 = vld [vmem:[#allocation6 + $0xc8] sm:$0xff]
        %v1704 = vld [vmem:[#allocation6 + $0xd0] sm:$0xff]
        %v1705 = vld [vmem:[#allocation6 + $0xd8] sm:$0xff]
        %v1706 = vld [vmem:[#allocation6 + $0xe0] sm:$0xff]
        %v1707 = vld [vmem:[#allocation6 + $0xe8] sm:$0xff]
        %v1708 = vld [vmem:[#allocation6 + $0xf0] sm:$0xff]
        %v1709 = vld [vmem:[#allocation6 + $0xf8] sm:$0xff]
        %v1710 = vld [vmem:[#allocation6 + $0x100] sm:$0xff]
        %v1711 = vld [vmem:[#allocation6 + $0x108] sm:$0xff]
        %v1712 = vld [vmem:[#allocation6 + $0x110] sm:$0xff]
        %v1713 = vld [vmem:[#allocation6 + $0x118] sm:$0xff]
        %v1714 = vld [vmem:[#allocation6 + $0x120] sm:$0xff]
        %v1715 = vld [vmem:[#allocation6 + $0x128] sm:$0xff]
        %v1716 = vld [vmem:[#allocation6 + $0x130] sm:$0xff]
        %v1717 = vld [vmem:[#allocation6 + $0x138] sm:$0xff]
        %v1718 = vld [vmem:[#allocation6 + $0x140] sm:$0xff]
        %v1719 = vld [vmem:[#allocation6 + $0x148] sm:$0xff]
        %v1720 = vld [vmem:[#allocation6 + $0x150] sm:$0xff]
        %v1721 = vld [vmem:[#allocation6 + $0x158] sm:$0xff]
        %v1722 = vld [vmem:[#allocation6 + $0x160] sm:$0xff]
        %v1723 = vld [vmem:[#allocation6 + $0x168] sm:$0xff]
        %v1724 = vld [vmem:[#allocation6 + $0x170] sm:$0xff]
        %v1725 = vld [vmem:[#allocation6 + $0x178] sm:$0xff]
        %v1726 = vld [vmem:[#allocation6 + $0x180] sm:$0xff]
        %v1727 = vld [vmem:[#allocation6 + $0x188] sm:$0xff]
        %v1728 = vld [vmem:[#allocation6 + $0x190] sm:$0xff]
        %v1729 = vld [vmem:[#allocation6 + $0x198] sm:$0xff]
        %v1730 = vld [vmem:[#allocation6 + $0x1a0] sm:$0xff]
        %v1731 = vld [vmem:[#allocation6 + $0x1a8] sm:$0xff]
        %v1732 = vld [vmem:[#allocation6 + $0x1b0] sm:$0xff]
        %v1733 = vld [vmem:[#allocation6 + $0x1b8] sm:$0xff]
        %v1734 = vld [vmem:[#allocation6 + $0x1c0] sm:$0xff]
        %v1735 = vld [vmem:[#allocation6 + $0x1c8] sm:$0xff]
        %v1736 = vld [vmem:[#allocation6 + $0x1d0] sm:$0xff]
        %v1737 = vld [vmem:[#allocation6 + $0x1d8] sm:$0xff]
        %v1738 = vld [vmem:[#allocation6 + $0x1e0] sm:$0xff]
        %v1739 = vld [vmem:[#allocation6 + $0x1e8] sm:$0xff]
        %v1740 = vld [vmem:[#allocation6 + $0x1f0] sm:$0xff]
        %v1741 = vld [vmem:[#allocation6 + $0x1f8] sm:$0xff]
        %v1742 = vld [vmem:[%s11] sm:$0x1]
        %v1744 = vlaneseq
        %v1745 = vshrl.u32 %v1744, 7
        %v1746 = vsub.s32 0, %v1745
        %v1747 = vrot.slane %v1742, %v1746
        %1749 = vmatprep.subr.mxu0 0.0
        %1750 = vmatpush1.msra.mxu0 %v1693
        %1751 = vmatprep.subr.mxu0 0.0
        %1752 = vmatpush1.msra.mxu0 %v1692
        %1753 = vmatprep.subr.mxu0 0.0
        %1754 = vmatpush1.msra.mxu0 %v1691
        %1755 = vmatprep.subr.mxu0 0.0
        %1756 = vmatpush1.msra.mxu0 %v1690
        %1757 = vmatprep.subr.mxu0 0.0
        %1758 = vmatpush1.msra.mxu0 %v1689
        %1759 = vmatprep.subr.mxu0 0.0
        %1760 = vmatpush1.msra.mxu0 %v1688
        %1761 = vmatprep.subr.mxu0 0.0
        %1762 = vmatpush1.msra.mxu0 %v1687
        %1763 = vmatprep.subr.mxu0 0.0
        %1764 = vmatpush1.msra.mxu0 %v1686
        %1765 = vmatprep.subr.mxu0 0.0
        %1766 = vmatpush1.msra.mxu0 %v1685
        %1767 = vmatprep.subr.mxu0 0.0
        %1768 = vmatpush1.msra.mxu0 %v1684
        %1769 = vmatprep.subr.mxu0 0.0
        %1770 = vmatpush1.msra.mxu0 %v1683
        %1771 = vmatprep.subr.mxu0 0.0
        %1772 = vmatpush1.msra.mxu0 %v1682
        %1773 = vmatprep.subr.mxu0 0.0
        %1774 = vmatpush1.msra.mxu0 %v1681
        %1775 = vmatprep.subr.mxu0 0.0
        %1776 = vmatpush1.msra.mxu0 %v1680
        %1777 = vmatprep.subr.mxu0 0.0
        %1778 = vmatpush1.msra.mxu0 %v1679
        %1779 = vmatprep.subr.mxu0 0.0
        %1780 = vmatpush1.msra.mxu0 %v1678
        %1781 = vmatprep.subr.mxu0 0.0
        %1782 = vmatpush2.msra.mxu0 %v1709
        %1783 = vmatprep.subr.mxu0 0.0
        %1784 = vmatpush2.msra.mxu0 %v1708
        %1785 = vmatprep.subr.mxu0 0.0
        %1786 = vmatpush2.msra.mxu0 %v1707
        %1787 = vmatprep.subr.mxu0 0.0
        %1788 = vmatpush2.msra.mxu0 %v1706
        %1789 = vmatprep.subr.mxu0 0.0
        %1790 = vmatpush2.msra.mxu0 %v1705
        %1791 = vmatprep.subr.mxu0 0.0
        %1792 = vmatpush2.msra.mxu0 %v1704
        %1793 = vmatprep.subr.mxu0 0.0
        %1794 = vmatpush2.msra.mxu0 %v1703
        %1795 = vmatprep.subr.mxu0 0.0
        %1796 = vmatpush2.msra.mxu0 %v1702
        %1797 = vmatprep.subr.mxu0 0.0
        %1798 = vmatpush2.msra.mxu0 %v1701
        %1799 = vmatprep.subr.mxu0 0.0
        %1800 = vmatpush2.msra.mxu0 %v1700
        %1801 = vmatprep.subr.mxu0 0.0
        %1802 = vmatpush2.msra.mxu0 %v1699
        %1803 = vmatprep.subr.mxu0 0.0
        %1804 = vmatpush2.msra.mxu0 %v1698
        %1805 = vmatprep.subr.mxu0 0.0
        %1806 = vmatpush2.msra.mxu0 %v1697
        %1807 = vmatprep.subr.mxu0 0.0
        %1808 = vmatpush2.msra.mxu0 %v1696
        %1809 = vmatprep.subr.mxu0 0.0
        %1810 = vmatpush2.msra.mxu0 %v1695
        %1811 = vmatprep.subr.mxu0 0.0
        %1812 = vmatpush2.msra.mxu0 %v1694
        %1813 = vmatprep.mubr.f32.mxu0 %v1667
        %1814 = vmatmul.mubr.f32.gmra.mxu0 %v1666
        %v1815 = vpop.f32.mrf.mxu0
        %v1816 = vadd.f32 %v1747, %v1815
        %v1817 = vpop.f32.mrf.mxu0
        %1818 = vmatprep.mubr.f32.mxu0 %v1671
        %1819 = vmatmul.mubr.f32.gmra.mxu0 %v1670
        %v1820 = vpop.f32.mrf.mxu0
        %v1821 = vadd.f32 %v1747, %v1820
        %v1822 = vpop.f32.mrf.mxu0
        %1823 = vmatprep.mubr.f32.mxu0 %v1675
        %1824 = vmatmul.mubr.f32.gmra.mxu0 %v1674
        %v1825 = vpop.f32.mrf.mxu0
        %v1826 = vadd.f32 %v1747, %v1825
        %v1827 = vpop.f32.mrf.mxu0
        %1828 = vdwg.mxu0
        %1829 = vmatprep.subr.mxu0 0.0
        %1830 = vmatpush1.msra.mxu0 %v1725
        %1831 = vmatprep.subr.mxu0 0.0
        %1832 = vmatpush1.msra.mxu0 %v1724
        %1833 = vmatprep.subr.mxu0 0.0
        %1834 = vmatpush1.msra.mxu0 %v1723
        %1835 = vmatprep.subr.mxu0 0.0
        %1836 = vmatpush1.msra.mxu0 %v1722
        %1837 = vmatprep.subr.mxu0 0.0
        %1838 = vmatpush1.msra.mxu0 %v1721
        %1839 = vmatprep.subr.mxu0 0.0
        %1840 = vmatpush1.msra.mxu0 %v1720
        %1841 = vmatprep.subr.mxu0 0.0
        %1842 = vmatpush1.msra.mxu0 %v1719
        %1843 = vmatprep.subr.mxu0 0.0
        %1844 = vmatpush1.msra.mxu0 %v1718
        %1845 = vmatprep.subr.mxu0 0.0
        %1846 = vmatpush1.msra.mxu0 %v1717
        %1847 = vmatprep.subr.mxu0 0.0
        %1848 = vmatpush1.msra.mxu0 %v1716
        %1849 = vmatprep.subr.mxu0 0.0
        %1850 = vmatpush1.msra.mxu0 %v1715
        %1851 = vmatprep.subr.mxu0 0.0
        %1852 = vmatpush1.msra.mxu0 %v1714
        %1853 = vmatprep.subr.mxu0 0.0
        %1854 = vmatpush1.msra.mxu0 %v1713
        %1855 = vmatprep.subr.mxu0 0.0
        %1856 = vmatpush1.msra.mxu0 %v1712
        %1857 = vmatprep.subr.mxu0 0.0
        %1858 = vmatpush1.msra.mxu0 %v1711
        %1859 = vmatprep.subr.mxu0 0.0
        %1860 = vmatpush1.msra.mxu0 %v1710
        %1861 = vmatprep.subr.mxu0 0.0
        %1862 = vmatpush2.msra.mxu0 %v1741
        %1863 = vmatprep.subr.mxu0 0.0
        %1864 = vmatpush2.msra.mxu0 %v1740
        %1865 = vmatprep.subr.mxu0 0.0
        %1866 = vmatpush2.msra.mxu0 %v1739
        %1867 = vmatprep.subr.mxu0 0.0
        %1868 = vmatpush2.msra.mxu0 %v1738
        %1869 = vmatprep.subr.mxu0 0.0
        %1870 = vmatpush2.msra.mxu0 %v1737
        %1871 = vmatprep.subr.mxu0 0.0
        %1872 = vmatpush2.msra.mxu0 %v1736
        %1873 = vmatprep.subr.mxu0 0.0
        %1874 = vmatpush2.msra.mxu0 %v1735
        %1875 = vmatprep.subr.mxu0 0.0
        %1876 = vmatpush2.msra.mxu0 %v1734
        %1877 = vmatprep.subr.mxu0 0.0
        %1878 = vmatpush2.msra.mxu0 %v1733
        %1879 = vmatprep.subr.mxu0 0.0
        %1880 = vmatpush2.msra.mxu0 %v1732
        %1881 = vmatprep.subr.mxu0 0.0
        %1882 = vmatpush2.msra.mxu0 %v1731
        %1883 = vmatprep.subr.mxu0 0.0
        %1884 = vmatpush2.msra.mxu0 %v1730
        %1885 = vmatprep.subr.mxu0 0.0
        %1886 = vmatpush2.msra.mxu0 %v1729
        %1887 = vmatprep.subr.mxu0 0.0
        %1888 = vmatpush2.msra.mxu0 %v1728
        %1889 = vmatprep.subr.mxu0 0.0
        %1890 = vmatpush2.msra.mxu0 %v1727
        %1891 = vmatprep.subr.mxu0 0.0
        %1892 = vmatpush2.msra.mxu0 %v1726
        %1893 = vmatprep.mubr.f32.mxu0 %v1669
        %1894 = vmatmul.mubr.f32.gmra.mxu0 %v1668
        %v1895 = vpop.f32.mrf.mxu0
        %v1896 = vadd.f32 %v1816, %v1895
        %v1897 = vpop.f32.mrf.mxu0
        %1898 = vmatprep.mubr.f32.mxu0 %v1673
        %1899 = vmatmul.mubr.f32.gmra.mxu0 %v1672
        %v1900 = vpop.f32.mrf.mxu0
        %v1901 = vadd.f32 %v1821, %v1900
        %v1902 = vpop.f32.mrf.mxu0
        %1903 = vmatprep.mubr.f32.mxu0 %v1677
        %1904 = vmatmul.mubr.f32.gmra.mxu0 %v1676
        %v1905 = vpop.f32.mrf.mxu0
        %v1906 = vadd.f32 %v1826, %v1905
        %v1907 = vpop.f32.mrf.mxu0
        %1908 = vdwg.mxu0
        %v1909 = vadd.f32 %v1310, %v1896
        %v1910 = vadd.f32 %v1311, %v1901
        %v1911 = vadd.f32 %v1312, %v1906
        %1912 = vst [vmem:[%s457] sm:$0xff] %v1909
        %1913 = vst [vmem:[%s457 + $0x8] sm:$0xff] %v1910
        %1914 = vst [vmem:[%s457 + $0x10] sm:$0xff] %v1911
        %p1915 = scmp.lt.s32.totalorder %s25, 1
        %s1916 = scalar_select %p1915, %s25, 1
        %s1917 = smul.addr %s1916, 3
        %s1918 = smul.addr %s1917, 8
        %s1919 = scalar_lea.vmem %s12, %s1918
        // Predicated region
        $region81: #{trans_rtg_det_forward.3} parent=67 // pred_check
          %p1920 = pneg %p300
        $region82: #{trans_rtg_det_forward.3} parent=67 // pred_check_branch
          %1922 = sbr.rel (%p1920) target = $region84
        $region83: #{trans_rtg_det_forward.3} parent=67 // pred_region
          _
        $region84: #{trans_rtg_det_forward.3} parent=67 // pred_fallthru
          _
      $region68: #{trans_rtg_det_forward.3} parent=5 // pred_fallthru
        _
      %p1923 = scmp.le.s32.totalorder 2, %s20
      // Predicated region
      $region85: #{trans_rtg_det_forward.3} parent=5 // pred_check
        %p1924 = pneg %p1923
      $region86: #{trans_rtg_det_forward.3} parent=5 // pred_check_branch
        %1926 = sbr.rel (%p1924) target = $region88
      $region87: #{trans_rtg_det_forward.3} parent=5 // pred_region
        %s1927 = ssub.s32 %s20, 2
        // Predicated region
        $region89: #{trans_rtg_det_forward.3} parent=87 // pred_check
          %p1928 = pneg %p306
        $region90: #{trans_rtg_det_forward.3} parent=87 // pred_check_branch
          %1930 = sbr.rel (%p1928) target = $region92
        $region91: #{trans_rtg_det_forward.3} parent=87 // pred_region
          %p1931 = scmp.lt.s32.totalorder %s26, 1
          %s1932 = scalar_select %p1931, %s26, 1
          %s1933 = smul.addr %s1932, 3
          %s1934 = smul.addr %s1933, 8
          %s1935 = scalar_lea.vmem %s12, %s1934
        $region92: #{trans_rtg_det_forward.3} parent=87 // pred_fallthru
          _
      $region88: #{trans_rtg_det_forward.3} parent=5 // pred_fallthru
        _
    $region6: #{trans_rtg_det_forward.3} parent=1 // loop_footer
      %s24 = sadd.s32 1, %s20
    $region7: #{trans_rtg_det_forward.3} parent=1 // loop_footer_branch
      %19 = sbr.rel target = $region3
    $region8: #{trans_rtg_det_forward.3} parent=1 // loop_exit
      _
    %1936 = vsyncpa [#allocation3], 1
    %s1937 = scalar_lea.sflag [#allocation3], 1
    %1938 = vsyncpa %s1937, 1
    %1939 = vsyncpa [#allocation5], 1

// kernel: trans_rtg_det_forward.4
$region0: #{trans_rtg_det_forward.4}
  #allocation0 [shape = 'u32[]', space=smem, size = 0x4, offset = 0x4, fixed_abs, tag = 'smem constant byte address 0x4 - core index']
  #allocation1 [shape = 'u32[144,128]{1,0:T(1,128)}', space=vmem, size = 0x12000, scoped, tag = 'internal scratch']
  %s0 = inlined_call_operand.vmem [shape: f32[2,24,128], index: 0, kind: input, shape index: {}]
  %s1 = inlined_call_operand.vmem [shape: f32[1,128], index: 1, kind: input, shape index: {}]
  %s2 = inlined_call_operand.vmem [shape: f32[1,128], index: 2, kind: input, shape index: {}]
  %s3 = inlined_call_operand.vmem [shape: f32[128,384], index: 3, kind: input, shape index: {}]
  %s4 = inlined_call_operand.vmem [shape: f32[128,128], index: 4, kind: input, shape index: {}]
  %s5 = inlined_call_operand.vmem [shape: f32[1,128], index: 5, kind: input, shape index: {}]
  %s6 = inlined_call_operand.vmem [shape: f32[1,128], index: 6, kind: input, shape index: {}]
  %s7 = inlined_call_operand.vmem [shape: f32[1,128], index: 7, kind: input, shape index: {}]
  %s8 = inlined_call_operand.vmem [shape: f32[128,512], index: 8, kind: input, shape index: {}]
  %s9 = inlined_call_operand.vmem [shape: f32[1,512], index: 9, kind: input, shape index: {}]
  %s10 = inlined_call_operand.vmem [shape: f32[512,128], index: 10, kind: input, shape index: {}]
  %s11 = inlined_call_operand.vmem [shape: f32[1,128], index: 11, kind: input, shape index: {}]
  %s12 = inlined_call_operand.vmem [shape: f32[2,24,128], index: 12, kind: output, shape index: {}]
  %s13 = sld [smem:[#allocation0]]
  $region81: #{trans_rtg_det_forward.4} parent=0
    _
  %s15 = ssub.s32 1, %s13
  %s16 = scalar_select 0, %s15, %s13
  loop: start=0, step=1, limit=4
  $region2: #{trans_rtg_det_forward.4} parent=0 // loop_pre_header
    _
  $region3: #{trans_rtg_det_forward.4} parent=0 // loop_header
    %s18 = sphi 0, %s22
    %p19 = scmp.ge.s32.totalorder %s18, 4
    %s28 = sphi 0, %s30
    %s31 = sphi 0, %s28
    %s32 = sphi 0, %s31
    %s48 = sphi 0, %s32
    %s52 = sphi 0, %s52
    %s54 = sphi 0, %s52
    %s55 = sphi 0, %s54
    %s69 = sphi 0, %s55
    %s73 = sphi 0, %s73
    %s75 = sphi 0, %s73
    %s76 = sphi 0, %s75
    %s90 = sphi 0, %s76
    %s94 = sphi 0, %s94
    %s96 = sphi 0, %s94
    %s97 = sphi 0, %s96
    %s111 = sphi 0, %s97
    %s115 = sphi 0, %s115
    %s117 = sphi 0, %s115
    %s118 = sphi 0, %s117
    %s132 = sphi 0, %s118
    %s136 = sphi 0, %s136
    %s138 = sphi 0, %s136
    %s139 = sphi 0, %s138
    %s153 = sphi 0, %s139
    %s157 = sphi 0, %s157
    %s159 = sphi 0, %s157
    %s160 = sphi 0, %s159
    %s174 = sphi 0, %s160
    %s178 = sphi 0, %s178
    %s180 = sphi 0, %s178
    %s181 = sphi 0, %s180
    %s195 = sphi 0, %s181
    %s199 = sphi 0, %s199
    %s201 = sphi 0, %s199
    %s202 = sphi 0, %s201
    %s216 = sphi 0, %s202
    %s220 = sphi 0, %s220
    %s222 = sphi 0, %s220
    %s223 = sphi 0, %s222
    %s237 = sphi 0, %s223
    %s241 = sphi 0, %s241
    %s243 = sphi 0, %s241
    %s244 = sphi 0, %s243
    %s258 = sphi 0, %s244
    %s262 = sphi 0, %s262
    %s264 = sphi 0, %s262
    %s265 = sphi 0, %s264
    %s279 = sphi 0, %s265
    %s285 = sphi 0, %s287
    %s288 = sphi 0, %s285
    %s289 = sphi 0, %s288
    %s305 = sphi 0, %s289
  $region4: #{trans_rtg_det_forward.4} parent=0 // loop_header_branch
    %21 = sbr.rel (%p19) target = $region8
  $region5: #{trans_rtg_det_forward.4} parent=0 // loop_body
    %s23 = ssub.s32 %s18, 1
    %s24 = ssub.s32 %s18, 2
    %s25 = sadd.s32 %s18, 1
    %s26 = ssub.s32 %s18, %s25
    %p27 = scmp.eq.s32.totalorder %s26, 0
    %s29 = sadd.s32 %s28, 1
    %s30 = scalar_select %p27, %s28, %s29
    %p33 = pneg %p27
    %p34 = scmp.eq.s32.totalorder %s18, 1
    %p35 = por %p33, %p34
    %p36 = scmp.ne.s32.totalorder %s28, %s31
    %p37 = scmp.eq.s32.totalorder %s18, 0
    %p38 = por %p36, %p37
    %p39 = scmp.ne.s32.totalorder %s28, %s31
    %p40 = scmp.eq.s32.totalorder %s23, 1
    %p41 = por %p39, %p40
    %p42 = scmp.ne.s32.totalorder %s31, %s32
    %p43 = scmp.eq.s32.totalorder %s23, 0
    %p44 = por %p42, %p43
    %p45 = scmp.ne.s32.totalorder %s31, %s32
    %p46 = scmp.eq.s32.totalorder %s24, 1
    %p47 = por %p45, %p46
    %p49 = scmp.ne.s32.totalorder %s32, %s48
    %p50 = scmp.eq.s32.totalorder %s24, 0
    %p51 = por %p49, %p50
    %s53 = sadd.s32 %s52, 1
    %p56 = scmp.eq.s32.totalorder %s18, 1
    %p57 = scmp.ne.s32.totalorder %s52, %s54
    %p58 = scmp.eq.s32.totalorder %s18, 0
    %p59 = por %p57, %p58
    %p60 = scmp.ne.s32.totalorder %s52, %s54
    %p61 = scmp.eq.s32.totalorder %s23, 1
    %p62 = por %p60, %p61
    %p63 = scmp.ne.s32.totalorder %s54, %s55
    %p64 = scmp.eq.s32.totalorder %s23, 0
    %p65 = por %p63, %p64
    %p66 = scmp.ne.s32.totalorder %s54, %s55
    %p67 = scmp.eq.s32.totalorder %s24, 1
    %p68 = por %p66, %p67
    %p70 = scmp.ne.s32.totalorder %s55, %s69
    %p71 = scmp.eq.s32.totalorder %s24, 0
    %p72 = por %p70, %p71
    %s74 = sadd.s32 %s73, 1
    %p77 = scmp.eq.s32.totalorder %s18, 1
    %p78 = scmp.ne.s32.totalorder %s73, %s75
    %p79 = scmp.eq.s32.totalorder %s18, 0
    %p80 = por %p78, %p79
    %p81 = scmp.ne.s32.totalorder %s73, %s75
    %p82 = scmp.eq.s32.totalorder %s23, 1
    %p83 = por %p81, %p82
    %p84 = scmp.ne.s32.totalorder %s75, %s76
    %p85 = scmp.eq.s32.totalorder %s23, 0
    %p86 = por %p84, %p85
    %p87 = scmp.ne.s32.totalorder %s75, %s76
    %p88 = scmp.eq.s32.totalorder %s24, 1
    %p89 = por %p87, %p88
    %p91 = scmp.ne.s32.totalorder %s76, %s90
    %p92 = scmp.eq.s32.totalorder %s24, 0
    %p93 = por %p91, %p92
    %s95 = sadd.s32 %s94, 1
    %p98 = scmp.eq.s32.totalorder %s18, 1
    %p99 = scmp.ne.s32.totalorder %s94, %s96
    %p100 = scmp.eq.s32.totalorder %s18, 0
    %p101 = por %p99, %p100
    %p102 = scmp.ne.s32.totalorder %s94, %s96
    %p103 = scmp.eq.s32.totalorder %s23, 1
    %p104 = por %p102, %p103
    %p105 = scmp.ne.s32.totalorder %s96, %s97
    %p106 = scmp.eq.s32.totalorder %s23, 0
    %p107 = por %p105, %p106
    %p108 = scmp.ne.s32.totalorder %s96, %s97
    %p109 = scmp.eq.s32.totalorder %s24, 1
    %p110 = por %p108, %p109
    %p112 = scmp.ne.s32.totalorder %s97, %s111
    %p113 = scmp.eq.s32.totalorder %s24, 0
    %p114 = por %p112, %p113
    %s116 = sadd.s32 %s115, 1
    %p119 = scmp.eq.s32.totalorder %s18, 1
    %p120 = scmp.ne.s32.totalorder %s115, %s117
    %p121 = scmp.eq.s32.totalorder %s18, 0
    %p122 = por %p120, %p121
    %p123 = scmp.ne.s32.totalorder %s115, %s117
    %p124 = scmp.eq.s32.totalorder %s23, 1
    %p125 = por %p123, %p124
    %p126 = scmp.ne.s32.totalorder %s117, %s118
    %p127 = scmp.eq.s32.totalorder %s23, 0
    %p128 = por %p126, %p127
    %p129 = scmp.ne.s32.totalorder %s117, %s118
    %p130 = scmp.eq.s32.totalorder %s24, 1
    %p131 = por %p129, %p130
    %p133 = scmp.ne.s32.totalorder %s118, %s132
    %p134 = scmp.eq.s32.totalorder %s24, 0
    %p135 = por %p133, %p134
    %s137 = sadd.s32 %s136, 1
    %p140 = scmp.eq.s32.totalorder %s18, 1
    %p141 = scmp.ne.s32.totalorder %s136, %s138
    %p142 = scmp.eq.s32.totalorder %s18, 0
    %p143 = por %p141, %p142
    %p144 = scmp.ne.s32.totalorder %s136, %s138
    %p145 = scmp.eq.s32.totalorder %s23, 1
    %p146 = por %p144, %p145
    %p147 = scmp.ne.s32.totalorder %s138, %s139
    %p148 = scmp.eq.s32.totalorder %s23, 0
    %p149 = por %p147, %p148
    %p150 = scmp.ne.s32.totalorder %s138, %s139
    %p151 = scmp.eq.s32.totalorder %s24, 1
    %p152 = por %p150, %p151
    %p154 = scmp.ne.s32.totalorder %s139, %s153
    %p155 = scmp.eq.s32.totalorder %s24, 0
    %p156 = por %p154, %p155
    %s158 = sadd.s32 %s157, 1
    %p161 = scmp.eq.s32.totalorder %s18, 1
    %p162 = scmp.ne.s32.totalorder %s157, %s159
    %p163 = scmp.eq.s32.totalorder %s18, 0
    %p164 = por %p162, %p163
    %p165 = scmp.ne.s32.totalorder %s157, %s159
    %p166 = scmp.eq.s32.totalorder %s23, 1
    %p167 = por %p165, %p166
    %p168 = scmp.ne.s32.totalorder %s159, %s160
    %p169 = scmp.eq.s32.totalorder %s23, 0
    %p170 = por %p168, %p169
    %p171 = scmp.ne.s32.totalorder %s159, %s160
    %p172 = scmp.eq.s32.totalorder %s24, 1
    %p173 = por %p171, %p172
    %p175 = scmp.ne.s32.totalorder %s160, %s174
    %p176 = scmp.eq.s32.totalorder %s24, 0
    %p177 = por %p175, %p176
    %s179 = sadd.s32 %s178, 1
    %p182 = scmp.eq.s32.totalorder %s18, 1
    %p183 = scmp.ne.s32.totalorder %s178, %s180
    %p184 = scmp.eq.s32.totalorder %s18, 0
    %p185 = por %p183, %p184
    %p186 = scmp.ne.s32.totalorder %s178, %s180
    %p187 = scmp.eq.s32.totalorder %s23, 1
    %p188 = por %p186, %p187
    %p189 = scmp.ne.s32.totalorder %s180, %s181
    %p190 = scmp.eq.s32.totalorder %s23, 0
    %p191 = por %p189, %p190
    %p192 = scmp.ne.s32.totalorder %s180, %s181
    %p193 = scmp.eq.s32.totalorder %s24, 1
    %p194 = por %p192, %p193
    %p196 = scmp.ne.s32.totalorder %s181, %s195
    %p197 = scmp.eq.s32.totalorder %s24, 0
    %p198 = por %p196, %p197
    %s200 = sadd.s32 %s199, 1
    %p203 = scmp.eq.s32.totalorder %s18, 1
    %p204 = scmp.ne.s32.totalorder %s199, %s201
    %p205 = scmp.eq.s32.totalorder %s18, 0
    %p206 = por %p204, %p205
    %p207 = scmp.ne.s32.totalorder %s199, %s201
    %p208 = scmp.eq.s32.totalorder %s23, 1
    %p209 = por %p207, %p208
    %p210 = scmp.ne.s32.totalorder %s201, %s202
    %p211 = scmp.eq.s32.totalorder %s23, 0
    %p212 = por %p210, %p211
    %p213 = scmp.ne.s32.totalorder %s201, %s202
    %p214 = scmp.eq.s32.totalorder %s24, 1
    %p215 = por %p213, %p214
    %p217 = scmp.ne.s32.totalorder %s202, %s216
    %p218 = scmp.eq.s32.totalorder %s24, 0
    %p219 = por %p217, %p218
    %s221 = sadd.s32 %s220, 1
    %p224 = scmp.eq.s32.totalorder %s18, 1
    %p225 = scmp.ne.s32.totalorder %s220, %s222
    %p226 = scmp.eq.s32.totalorder %s18, 0
    %p227 = por %p225, %p226
    %p228 = scmp.ne.s32.totalorder %s220, %s222
    %p229 = scmp.eq.s32.totalorder %s23, 1
    %p230 = por %p228, %p229
    %p231 = scmp.ne.s32.totalorder %s222, %s223
    %p232 = scmp.eq.s32.totalorder %s23, 0
    %p233 = por %p231, %p232
    %p234 = scmp.ne.s32.totalorder %s222, %s223
    %p235 = scmp.eq.s32.totalorder %s24, 1
    %p236 = por %p234, %p235
    %p238 = scmp.ne.s32.totalorder %s223, %s237
    %p239 = scmp.eq.s32.totalorder %s24, 0
    %p240 = por %p238, %p239
    %s242 = sadd.s32 %s241, 1
    %p245 = scmp.eq.s32.totalorder %s18, 1
    %p246 = scmp.ne.s32.totalorder %s241, %s243
    %p247 = scmp.eq.s32.totalorder %s18, 0
    %p248 = por %p246, %p247
    %p249 = scmp.ne.s32.totalorder %s241, %s243
    %p250 = scmp.eq.s32.totalorder %s23, 1
    %p251 = por %p249, %p250
    %p252 = scmp.ne.s32.totalorder %s243, %s244
    %p253 = scmp.eq.s32.totalorder %s23, 0
    %p254 = por %p252, %p253
    %p255 = scmp.ne.s32.totalorder %s243, %s244
    %p256 = scmp.eq.s32.totalorder %s24, 1
    %p257 = por %p255, %p256
    %p259 = scmp.ne.s32.totalorder %s244, %s258
    %p260 = scmp.eq.s32.totalorder %s24, 0
    %p261 = por %p259, %p260
    %s263 = sadd.s32 %s262, 1
    %p266 = scmp.eq.s32.totalorder %s18, 1
    %p267 = scmp.ne.s32.totalorder %s262, %s264
    %p268 = scmp.eq.s32.totalorder %s18, 0
    %p269 = por %p267, %p268
    %p270 = scmp.ne.s32.totalorder %s262, %s264
    %p271 = scmp.eq.s32.totalorder %s23, 1
    %p272 = por %p270, %p271
    %p273 = scmp.ne.s32.totalorder %s264, %s265
    %p274 = scmp.eq.s32.totalorder %s23, 0
    %p275 = por %p273, %p274
    %p276 = scmp.ne.s32.totalorder %s264, %s265
    %p277 = scmp.eq.s32.totalorder %s24, 1
    %p278 = por %p276, %p277
    %p280 = scmp.ne.s32.totalorder %s265, %s279
    %p281 = scmp.eq.s32.totalorder %s24, 0
    %p282 = por %p280, %p281
    %s283 = ssub.s32 %s18, %s25
    %p284 = scmp.eq.s32.totalorder %s283, 0
    %s286 = sadd.s32 %s285, 1
    %s287 = scalar_select %p284, %s285, %s286
    %p290 = pneg %p284
    %p291 = scmp.eq.s32.totalorder %s18, 1
    %p292 = por %p290, %p291
    %p293 = scmp.ne.s32.totalorder %s285, %s288
    %p294 = scmp.eq.s32.totalorder %s18, 0
    %p295 = por %p293, %p294
    %p296 = scmp.ne.s32.totalorder %s285, %s288
    %p297 = scmp.eq.s32.totalorder %s23, 1
    %p298 = por %p296, %p297
    %p299 = scmp.ne.s32.totalorder %s288, %s289
    %p300 = scmp.eq.s32.totalorder %s23, 0
    %p301 = por %p299, %p300
    %p302 = scmp.ne.s32.totalorder %s288, %s289
    %p303 = scmp.eq.s32.totalorder %s24, 1
    %p304 = por %p302, %p303
    %p306 = scmp.ne.s32.totalorder %s289, %s305
    %p307 = scmp.eq.s32.totalorder %s24, 0
    %p308 = por %p306, %p307
    %p309 = scmp.le.s32.totalorder 1, %s18
    %p310 = scmp.lt.s32.totalorder %s18, 3
    %p311 = pnand %p309, %p310
    %p312 = pneg %p311
    // Predicated region
    $region9: #{trans_rtg_det_forward.4} parent=5 // pred_check
      _
    $region10: #{trans_rtg_det_forward.4} parent=5 // pred_check_branch
      %314 = sbr.rel (%p311) target = $region12
    $region11: #{trans_rtg_det_forward.4} parent=5 // pred_region
      %s315 = ssub.s32 %s18, 1
      // Predicated region
      $region13: #{trans_rtg_det_forward.4} parent=11 // pred_check
        %p316 = pneg %p65
      $region14: #{trans_rtg_det_forward.4} parent=11 // pred_check_branch
        %318 = sbr.rel (%p316) target = $region16
      $region15: #{trans_rtg_det_forward.4} parent=11 // pred_region
        _
      $region16: #{trans_rtg_det_forward.4} parent=11 // pred_fallthru
        _
      // Predicated region
      $region17: #{trans_rtg_det_forward.4} parent=11 // pred_check
        %p319 = pneg %p86
      $region18: #{trans_rtg_det_forward.4} parent=11 // pred_check_branch
        %321 = sbr.rel (%p319) target = $region20
      $region19: #{trans_rtg_det_forward.4} parent=11 // pred_region
        _
      $region20: #{trans_rtg_det_forward.4} parent=11 // pred_fallthru
        _
      // Predicated region
      $region21: #{trans_rtg_det_forward.4} parent=11 // pred_check
        %p322 = pneg %p107
      $region22: #{trans_rtg_det_forward.4} parent=11 // pred_check_branch
        %324 = sbr.rel (%p322) target = $region24
      $region23: #{trans_rtg_det_forward.4} parent=11 // pred_region
        _
      $region24: #{trans_rtg_det_forward.4} parent=11 // pred_fallthru
        _
      // Predicated region
      $region25: #{trans_rtg_det_forward.4} parent=11 // pred_check
        %p325 = pneg %p128
      $region26: #{trans_rtg_det_forward.4} parent=11 // pred_check_branch
        %327 = sbr.rel (%p325) target = $region28
      $region27: #{trans_rtg_det_forward.4} parent=11 // pred_region
        _
      $region28: #{trans_rtg_det_forward.4} parent=11 // pred_fallthru
        _
      // Predicated region
      $region29: #{trans_rtg_det_forward.4} parent=11 // pred_check
        %p328 = pneg %p149
      $region30: #{trans_rtg_det_forward.4} parent=11 // pred_check_branch
        %330 = sbr.rel (%p328) target = $region32
      $region31: #{trans_rtg_det_forward.4} parent=11 // pred_region
        _
      $region32: #{trans_rtg_det_forward.4} parent=11 // pred_fallthru
        _
      // Predicated region
      $region33: #{trans_rtg_det_forward.4} parent=11 // pred_check
        %p331 = pneg %p170
      $region34: #{trans_rtg_det_forward.4} parent=11 // pred_check_branch
        %333 = sbr.rel (%p331) target = $region36
      $region35: #{trans_rtg_det_forward.4} parent=11 // pred_region
        _
      $region36: #{trans_rtg_det_forward.4} parent=11 // pred_fallthru
        _
      // Predicated region
      $region37: #{trans_rtg_det_forward.4} parent=11 // pred_check
        %p334 = pneg %p191
      $region38: #{trans_rtg_det_forward.4} parent=11 // pred_check_branch
        %336 = sbr.rel (%p334) target = $region40
      $region39: #{trans_rtg_det_forward.4} parent=11 // pred_region
        _
      $region40: #{trans_rtg_det_forward.4} parent=11 // pred_fallthru
        _
      // Predicated region
      $region41: #{trans_rtg_det_forward.4} parent=11 // pred_check
        %p337 = pneg %p212
      $region42: #{trans_rtg_det_forward.4} parent=11 // pred_check_branch
        %339 = sbr.rel (%p337) target = $region44
      $region43: #{trans_rtg_det_forward.4} parent=11 // pred_region
        _
      $region44: #{trans_rtg_det_forward.4} parent=11 // pred_fallthru
        _
      // Predicated region
      $region45: #{trans_rtg_det_forward.4} parent=11 // pred_check
        %p340 = pneg %p233
      $region46: #{trans_rtg_det_forward.4} parent=11 // pred_check_branch
        %342 = sbr.rel (%p340) target = $region48
      $region47: #{trans_rtg_det_forward.4} parent=11 // pred_region
        _
      $region48: #{trans_rtg_det_forward.4} parent=11 // pred_fallthru
        _
      // Predicated region
      $region49: #{trans_rtg_det_forward.4} parent=11 // pred_check
        %p343 = pneg %p254
      $region50: #{trans_rtg_det_forward.4} parent=11 // pred_check_branch
        %345 = sbr.rel (%p343) target = $region52
      $region51: #{trans_rtg_det_forward.4} parent=11 // pred_region
        _
      $region52: #{trans_rtg_det_forward.4} parent=11 // pred_fallthru
        _
      // Predicated region
      $region53: #{trans_rtg_det_forward.4} parent=11 // pred_check
        %p346 = pneg %p275
      $region54: #{trans_rtg_det_forward.4} parent=11 // pred_check_branch
        %348 = sbr.rel (%p346) target = $region56
      $region55: #{trans_rtg_det_forward.4} parent=11 // pred_region
        _
      $region56: #{trans_rtg_det_forward.4} parent=11 // pred_fallthru
        _
    $region12: #{trans_rtg_det_forward.4} parent=5 // pred_fallthru
      _
    %p349 = scmp.lt.s32.totalorder %s18, 2
    // Predicated region
    $region57: #{trans_rtg_det_forward.4} parent=5 // pred_check
      %p350 = pneg %p349
    $region58: #{trans_rtg_det_forward.4} parent=5 // pred_check_branch
      %352 = sbr.rel (%p350) target = $region60
    $region59: #{trans_rtg_det_forward.4} parent=5 // pred_region
      // Predicated region
      $region61: #{trans_rtg_det_forward.4} parent=59 // pred_check
        %p353 = pneg %p38
      $region62: #{trans_rtg_det_forward.4} parent=59 // pred_check_branch
        %355 = sbr.rel (%p353) target = $region64
      $region63: #{trans_rtg_det_forward.4} parent=59 // pred_region
        %p356 = scmp.lt.s32.totalorder %s18, 1
        %s357 = scalar_select %p356, %s18, 1
        %s358 = smul.addr %s357, 3
        %s359 = smul.addr %s358, 8
        %s360 = scalar_lea.vmem %s0, %s359
      $region64: #{trans_rtg_det_forward.4} parent=59 // pred_fallthru
        _
    $region60: #{trans_rtg_det_forward.4} parent=5 // pred_fallthru
      _
    %p361 = scmp.le.s32.totalorder 1, %s18
    %p362 = scmp.lt.s32.totalorder %s18, 3
    %p363 = pnand %p361, %p362
    %p364 = pneg %p363
    // Predicated region
    $region65: #{trans_rtg_det_forward.4} parent=5 // pred_check
      _
    $region66: #{trans_rtg_det_forward.4} parent=5 // pred_check_branch
      %366 = sbr.rel (%p363) target = $region68
    $region67: #{trans_rtg_det_forward.4} parent=5 // pred_region
      %s367 = ssub.s32 %s18, 1
      %p368 = scmp.lt.s32.totalorder %s23, 1
      %s369 = scalar_select %p368, %s23, 1
      %s370 = smul.addr %s369, 3
      %s371 = smul.addr %s370, 8
      %s372 = scalar_lea.vmem %s0, %s371
      %p373 = pneg %p44
      %p374 = pneg %p41
      %p375 = pneg %p65
      %p376 = pneg %p62
      %p377 = pneg %p86
      %p378 = pneg %p83
      %p379 = pneg %p107
      %p380 = pneg %p104
      %p381 = pneg %p128
      %p382 = pneg %p125
      %p383 = pneg %p149
      %p384 = pneg %p146
      %p385 = pneg %p170
      %p386 = pneg %p167
      %p387 = pneg %p191
      %p388 = pneg %p188
      %p389 = pneg %p212
      %p390 = pneg %p209
      %p391 = pneg %p233
      %p392 = pneg %p230
      %p393 = pneg %p254
      %p394 = pneg %p251
      %p395 = pneg %p275
      %p396 = pneg %p272
      %p397 = pneg %p301
      %p398 = pneg %p298
      %p399 = scmp.lt.s32.totalorder %s23, 1
      %s400 = scalar_select %p399, %s23, 1
      %s401 = smul.addr %s400, 3
      %s402 = smul.addr %s401, 8
      %s403 = scalar_lea.vmem %s12, %s402
      %p404 = scmp.lt.s32.totalorder %s23, 1
      %s405 = scalar_select %p404, %s23, 1
      %s406 = smul.addr %s405, 3
      %s407 = smul.addr %s406, 8
      %s408 = scalar_lea.vmem %s0, %s407
      %p409 = scmp.lt.s32.totalorder %s23, 1
      %s410 = scalar_select %p409, %s23, 1
      %s411 = smul.addr %s410, 3
      %s412 = smul.addr %s411, 8
      %s413 = scalar_lea.vmem %s12, %s412
      %v414 = vld [vmem:[%s408] sm:$0xff]
      %v415 = vld [vmem:[%s408 + $0x8] sm:$0xff]
      %v416 = vld [vmem:[%s408 + $0x10] sm:$0xff]
      %417 = vadd.xlane.f32.xlu0 %v414
      %v418 = vpop.xlane.xlu0 %417
      %419 = vadd.xlane.f32.xlu0 %v415
      %v420 = vpop.xlane.xlu0 %419
      %421 = vadd.xlane.f32.xlu0 %v416
      %v422 = vpop.xlane.xlu0 %421
      %v423 = vrcp.pop 128.0
      %v424 = vmul.f32 %v418, %v423
      %v425 = vmul.f32 %v420, %v423
      %v426 = vmul.f32 %v422, %v423
      %v427 = vsub.f32 %v414, %v424
      %v428 = vsub.f32 %v415, %v425
      %v429 = vsub.f32 %v416, %v426
      %v430 = vmul.f32 %v427, %v427
      %v431 = vmul.f32 %v428, %v428
      %v432 = vmul.f32 %v429, %v429
      %433 = vadd.xlane.f32.xlu0 %v430
      %v434 = vpop.xlane.xlu0 %433
      %435 = vadd.xlane.f32.xlu0 %v431
      %v436 = vpop.xlane.xlu0 %435
      %437 = vadd.xlane.f32.xlu0 %v432
      %v438 = vpop.xlane.xlu0 %437
      %v439 = vmul.f32 %v434, %v423
      %v440 = vmul.f32 %v436, %v423
      %v441 = vmul.f32 %v438, %v423
      %v442 = vadd.f32 %v439, 1e-05
      %v443 = vadd.f32 %v440, 1e-05
      %v444 = vadd.f32 %v441, 1e-05
      %v445 = vrsqrt.pop %v442
      %v446 = vrsqrt.pop %v443
      %v447 = vrsqrt.pop %v444
      %v448 = vmul.f32 %v427, %v445
      %v449 = vmul.f32 %v428, %v446
      %v450 = vmul.f32 %v429, %v447
      %v451 = vld [vmem:[%s1] sm:$0x1]
      %v453 = vlaneseq
      %v454 = vshrl.u32 %v453, 7
      %v455 = vsub.s32 0, %v454
      %v456 = vrot.slane %v451, %v455
      %v458 = vmul.f32 %v448, %v456
      %v459 = vmul.f32 %v449, %v456
      %v460 = vmul.f32 %v450, %v456
      %v461 = vld [vmem:[%s2] sm:$0x1]
      %v463 = vlaneseq
      %v464 = vshrl.u32 %v463, 7
      %v465 = vsub.s32 0, %v464
      %v466 = vrot.slane %v461, %v465
      %v468 = vadd.f32 %v458, %v466
      %v469 = vadd.f32 %v459, %v466
      %v470 = vadd.f32 %v460, %v466
      %v471 = vld [vmem:[%s3] sm:$0xff]
      %v472 = vld [vmem:[%s3 + $0x8] sm:$0xff]
      %v473 = vld [vmem:[%s3 + $0x10] sm:$0xff]
      %v474 = vld [vmem:[%s3 + $0x18] sm:$0xff]
      %v475 = vld [vmem:[%s3 + $0x20] sm:$0xff]
      %v476 = vld [vmem:[%s3 + $0x28] sm:$0xff]
      %v477 = vld [vmem:[%s3 + $0x30] sm:$0xff]
      %v478 = vld [vmem:[%s3 + $0x38] sm:$0xff]
      %v479 = vld [vmem:[%s3 + $0x40] sm:$0xff]
      %v480 = vld [vmem:[%s3 + $0x48] sm:$0xff]
      %v481 = vld [vmem:[%s3 + $0x50] sm:$0xff]
      %v482 = vld [vmem:[%s3 + $0x58] sm:$0xff]
      %v483 = vld [vmem:[%s3 + $0x60] sm:$0xff]
      %v484 = vld [vmem:[%s3 + $0x68] sm:$0xff]
      %v485 = vld [vmem:[%s3 + $0x70] sm:$0xff]
      %v486 = vld [vmem:[%s3 + $0x78] sm:$0xff]
      %v487 = vld [vmem:[%s3 + $0x80] sm:$0xff]
      %v488 = vld [vmem:[%s3 + $0x88] sm:$0xff]
      %v489 = vld [vmem:[%s3 + $0x90] sm:$0xff]
      %v490 = vld [vmem:[%s3 + $0x98] sm:$0xff]
      %v491 = vld [vmem:[%s3 + $0xa0] sm:$0xff]
      %v492 = vld [vmem:[%s3 + $0xa8] sm:$0xff]
      %v493 = vld [vmem:[%s3 + $0xb0] sm:$0xff]
      %v494 = vld [vmem:[%s3 + $0xb8] sm:$0xff]
      %v495 = vld [vmem:[%s3 + $0xc0] sm:$0xff]
      %v496 = vld [vmem:[%s3 + $0xc8] sm:$0xff]
      %v497 = vld [vmem:[%s3 + $0xd0] sm:$0xff]
      %v498 = vld [vmem:[%s3 + $0xd8] sm:$0xff]
      %v499 = vld [vmem:[%s3 + $0xe0] sm:$0xff]
      %v500 = vld [vmem:[%s3 + $0xe8] sm:$0xff]
      %v501 = vld [vmem:[%s3 + $0xf0] sm:$0xff]
      %v502 = vld [vmem:[%s3 + $0xf8] sm:$0xff]
      %v503 = vld [vmem:[%s3 + $0x100] sm:$0xff]
      %v504 = vld [vmem:[%s3 + $0x108] sm:$0xff]
      %v505 = vld [vmem:[%s3 + $0x110] sm:$0xff]
      %v506 = vld [vmem:[%s3 + $0x118] sm:$0xff]
      %v507 = vld [vmem:[%s3 + $0x120] sm:$0xff]
      %v508 = vld [vmem:[%s3 + $0x128] sm:$0xff]
      %v509 = vld [vmem:[%s3 + $0x130] sm:$0xff]
      %v510 = vld [vmem:[%s3 + $0x138] sm:$0xff]
      %v511 = vld [vmem:[%s3 + $0x140] sm:$0xff]
      %v512 = vld [vmem:[%s3 + $0x148] sm:$0xff]
      %v513 = vld [vmem:[%s3 + $0x150] sm:$0xff]
      %v514 = vld [vmem:[%s3 + $0x158] sm:$0xff]
      %v515 = vld [vmem:[%s3 + $0x160] sm:$0xff]
      %v516 = vld [vmem:[%s3 + $0x168] sm:$0xff]
      %v517 = vld [vmem:[%s3 + $0x170] sm:$0xff]
      %v518 = vld [vmem:[%s3 + $0x178] sm:$0xff]
      %519 = vmatprep.subr.mxu0 %v517
      %520 = vmatpush1.msra.mxu0 %v516
      %521 = vmatprep.subr.mxu0 %v514
      %522 = vmatpush1.msra.mxu0 %v513
      %523 = vmatprep.subr.mxu0 %v511
      %524 = vmatpush1.msra.mxu0 %v510
      %525 = vmatprep.subr.mxu0 %v508
      %526 = vmatpush1.msra.mxu0 %v507
      %527 = vmatprep.subr.mxu0 %v505
      %528 = vmatpush1.msra.mxu0 %v504
      %529 = vmatprep.subr.mxu0 %v502
      %530 = vmatpush1.msra.mxu0 %v501
      %531 = vmatprep.subr.mxu0 %v499
      %532 = vmatpush1.msra.mxu0 %v498
      %533 = vmatprep.subr.mxu0 %v496
      %534 = vmatpush1.msra.mxu0 %v495
      %535 = vmatprep.subr.mxu0 %v493
      %536 = vmatpush1.msra.mxu0 %v492
      %537 = vmatprep.subr.mxu0 %v490
      %538 = vmatpush1.msra.mxu0 %v489
      %539 = vmatprep.subr.mxu0 %v487
      %540 = vmatpush1.msra.mxu0 %v486
      %541 = vmatprep.subr.mxu0 %v484
      %542 = vmatpush1.msra.mxu0 %v483
      %543 = vmatprep.subr.mxu0 %v481
      %544 = vmatpush1.msra.mxu0 %v480
      %545 = vmatprep.subr.mxu0 %v478
      %546 = vmatpush1.msra.mxu0 %v477
      %547 = vmatprep.subr.mxu0 %v475
      %548 = vmatpush1.msra.mxu0 %v474
      %549 = vmatprep.subr.mxu0 %v472
      %550 = vmatpush1.msra.mxu0 %v471
      %551 = vmatprep.subr.mxu0 0.0
      %552 = vmatpush2.msra.mxu0 0.0
      %553 = vmatprep.subr.mxu0 0.0
      %554 = vmatpush2.msra.mxu0 0.0
      %555 = vmatprep.subr.mxu0 0.0
      %556 = vmatpush2.msra.mxu0 0.0
      %557 = vmatprep.subr.mxu0 0.0
      %558 = vmatpush2.msra.mxu0 0.0
      %559 = vmatprep.subr.mxu0 0.0
      %560 = vmatpush2.msra.mxu0 0.0
      %561 = vmatprep.subr.mxu0 0.0
      %562 = vmatpush2.msra.mxu0 0.0
      %563 = vmatprep.subr.mxu0 0.0
      %564 = vmatpush2.msra.mxu0 0.0
      %565 = vmatprep.subr.mxu0 0.0
      %566 = vmatpush2.msra.mxu0 0.0
      %567 = vmatprep.subr.mxu0 0.0
      %568 = vmatpush2.msra.mxu0 0.0
      %569 = vmatprep.subr.mxu0 0.0
      %570 = vmatpush2.msra.mxu0 0.0
      %571 = vmatprep.subr.mxu0 0.0
      %572 = vmatpush2.msra.mxu0 0.0
      %573 = vmatprep.subr.mxu0 0.0
      %574 = vmatpush2.msra.mxu0 0.0
      %575 = vmatprep.subr.mxu0 0.0
      %576 = vmatpush2.msra.mxu0 0.0
      %577 = vmatprep.subr.mxu0 0.0
      %578 = vmatpush2.msra.mxu0 0.0
      %579 = vmatprep.subr.mxu0 0.0
      %580 = vmatpush2.msra.mxu0 0.0
      %581 = vmatprep.subr.mxu0 0.0
      %582 = vmatpush2.msra.mxu0 0.0
      %583 = vmatprep.mubr.f32.mxu0 0.0
      %584 = vmatmul.mubr.f32.gmra.mxu0 %v468
      %v585 = vpop.f32.mrf.mxu0
      %v586 = vadd.f32 0.0, %v585
      %v587 = vpop.f32.mrf.mxu0
      %v588 = vadd.f32 0.0, %v587
      %589 = vmatprep.mubr.f32.mxu0 0.0
      %590 = vmatmul.mubr.f32.gmra.mxu0 %v469
      %v591 = vpop.f32.mrf.mxu0
      %v592 = vadd.f32 0.0, %v591
      %v593 = vpop.f32.mrf.mxu0
      %v594 = vadd.f32 0.0, %v593
      %595 = vmatprep.mubr.f32.mxu0 0.0
      %596 = vmatmul.mubr.f32.gmra.mxu0 %v470
      %v597 = vpop.f32.mrf.mxu0
      %v598 = vadd.f32 0.0, %v597
      %v599 = vpop.f32.mrf.mxu0
      %v600 = vadd.f32 0.0, %v599
      %601 = vdwg.mxu0
      %602 = vmatprep.subr.mxu0 0.0
      %603 = vmatpush1.msra.mxu0 %v518
      %604 = vmatprep.subr.mxu0 0.0
      %605 = vmatpush1.msra.mxu0 %v515
      %606 = vmatprep.subr.mxu0 0.0
      %607 = vmatpush1.msra.mxu0 %v512
      %608 = vmatprep.subr.mxu0 0.0
      %609 = vmatpush1.msra.mxu0 %v509
      %610 = vmatprep.subr.mxu0 0.0
      %611 = vmatpush1.msra.mxu0 %v506
      %612 = vmatprep.subr.mxu0 0.0
      %613 = vmatpush1.msra.mxu0 %v503
      %614 = vmatprep.subr.mxu0 0.0
      %615 = vmatpush1.msra.mxu0 %v500
      %616 = vmatprep.subr.mxu0 0.0
      %617 = vmatpush1.msra.mxu0 %v497
      %618 = vmatprep.subr.mxu0 0.0
      %619 = vmatpush1.msra.mxu0 %v494
      %620 = vmatprep.subr.mxu0 0.0
      %621 = vmatpush1.msra.mxu0 %v491
      %622 = vmatprep.subr.mxu0 0.0
      %623 = vmatpush1.msra.mxu0 %v488
      %624 = vmatprep.subr.mxu0 0.0
      %625 = vmatpush1.msra.mxu0 %v485
      %626 = vmatprep.subr.mxu0 0.0
      %627 = vmatpush1.msra.mxu0 %v482
      %628 = vmatprep.subr.mxu0 0.0
      %629 = vmatpush1.msra.mxu0 %v479
      %630 = vmatprep.subr.mxu0 0.0
      %631 = vmatpush1.msra.mxu0 %v476
      %632 = vmatprep.subr.mxu0 0.0
      %633 = vmatpush1.msra.mxu0 %v473
      %634 = vmatprep.subr.mxu0 0.0
      %635 = vmatpush2.msra.mxu0 0.0
      %636 = vmatprep.subr.mxu0 0.0
      %637 = vmatpush2.msra.mxu0 0.0
      %638 = vmatprep.subr.mxu0 0.0
      %639 = vmatpush2.msra.mxu0 0.0
      %640 = vmatprep.subr.mxu0 0.0
      %641 = vmatpush2.msra.mxu0 0.0
      %642 = vmatprep.subr.mxu0 0.0
      %643 = vmatpush2.msra.mxu0 0.0
      %644 = vmatprep.subr.mxu0 0.0
      %645 = vmatpush2.msra.mxu0 0.0
      %646 = vmatprep.subr.mxu0 0.0
      %647 = vmatpush2.msra.mxu0 0.0
      %648 = vmatprep.subr.mxu0 0.0
      %649 = vmatpush2.msra.mxu0 0.0
      %650 = vmatprep.subr.mxu0 0.0
      %651 = vmatpush2.msra.mxu0 0.0
      %652 = vmatprep.subr.mxu0 0.0
      %653 = vmatpush2.msra.mxu0 0.0
      %654 = vmatprep.subr.mxu0 0.0
      %655 = vmatpush2.msra.mxu0 0.0
      %656 = vmatprep.subr.mxu0 0.0
      %657 = vmatpush2.msra.mxu0 0.0
      %658 = vmatprep.subr.mxu0 0.0
      %659 = vmatpush2.msra.mxu0 0.0
      %660 = vmatprep.subr.mxu0 0.0
      %661 = vmatpush2.msra.mxu0 0.0
      %662 = vmatprep.subr.mxu0 0.0
      %663 = vmatpush2.msra.mxu0 0.0
      %664 = vmatprep.subr.mxu0 0.0
      %665 = vmatpush2.msra.mxu0 0.0
      %666 = vmatprep.mubr.f32.mxu0 0.0
      %667 = vmatmul.mubr.f32.gmra.mxu0 %v468
      %v668 = vpop.f32.mrf.mxu0
      %v669 = vadd.f32 0.0, %v668
      %v670 = vpop.f32.mrf.mxu0
      %671 = vmatprep.mubr.f32.mxu0 0.0
      %672 = vmatmul.mubr.f32.gmra.mxu0 %v469
      %v673 = vpop.f32.mrf.mxu0
      %v674 = vadd.f32 0.0, %v673
      %v675 = vpop.f32.mrf.mxu0
      %676 = vmatprep.mubr.f32.mxu0 0.0
      %677 = vmatmul.mubr.f32.gmra.mxu0 %v470
      %v678 = vpop.f32.mrf.mxu0
      %v679 = vadd.f32 0.0, %v678
      %v680 = vpop.f32.mrf.mxu0
      %681 = vdwg.mxu0
      %vm682 = vcmask 523264
      %v684 = vsel %vm682, %v586, 0
      %v687 = vsel %vm682, %v592, 0
      %v690 = vsel %vm682, %v598, 0
      %v693 = vsel %vm682, %v588, 0
      %v696 = vsel %vm682, %v594, 0
      %v699 = vsel %vm682, %v600, 0
      %701 = vmatprep.subr.mxu0 0.0
      %702 = vmatpush1.xpose.msra.mxu0 0.0
      %703 = vmatprep.subr.mxu0 0.0
      %704 = vmatpush1.xpose.msra.mxu0 0.0
      %705 = vmatprep.subr.mxu0 0.0
      %706 = vmatpush1.xpose.msra.mxu0 0.0
      %707 = vmatprep.subr.mxu0 0.0
      %708 = vmatpush1.xpose.msra.mxu0 0.0
      %709 = vmatprep.subr.mxu0 0.0
      %710 = vmatpush1.xpose.msra.mxu0 0.0
      %711 = vmatprep.subr.mxu0 0.0
      %712 = vmatpush1.xpose.msra.mxu0 0.0
      %713 = vmatprep.subr.mxu0 0.0
      %714 = vmatpush1.xpose.msra.mxu0 0.0
      %715 = vmatprep.subr.mxu0 0.0
      %716 = vmatpush1.xpose.msra.mxu0 0.0
      %717 = vmatprep.subr.mxu0 0.0
      %718 = vmatpush1.xpose.msra.mxu0 0.0
      %719 = vmatprep.subr.mxu0 0.0
      %720 = vmatpush1.xpose.msra.mxu0 0.0
      %721 = vmatprep.subr.mxu0 0.0
      %722 = vmatpush1.xpose.msra.mxu0 0.0
      %723 = vmatprep.subr.mxu0 0.0
      %724 = vmatpush1.xpose.msra.mxu0 0.0
      %725 = vmatprep.subr.mxu0 0.0
      %726 = vmatpush1.xpose.msra.mxu0 0.0
      %727 = vmatprep.subr.mxu0 0.0
      %728 = vmatpush1.xpose.msra.mxu0 %v699
      %729 = vmatprep.subr.mxu0 0.0
      %730 = vmatpush1.xpose.msra.mxu0 %v696
      %731 = vmatprep.subr.mxu0 0.0
      %732 = vmatpush1.xpose.msra.mxu0 %v693
      %733 = vmatprep.subr.mxu0 0.0
      %734 = vmatpush2.xpose.msra.mxu0 0.0
      %735 = vmatprep.subr.mxu0 0.0
      %736 = vmatpush2.xpose.msra.mxu0 0.0
      %737 = vmatprep.subr.mxu0 0.0
      %738 = vmatpush2.xpose.msra.mxu0 0.0
      %739 = vmatprep.subr.mxu0 0.0
      %740 = vmatpush2.xpose.msra.mxu0 0.0
      %741 = vmatprep.subr.mxu0 0.0
      %742 = vmatpush2.xpose.msra.mxu0 0.0
      %743 = vmatprep.subr.mxu0 0.0
      %744 = vmatpush2.xpose.msra.mxu0 0.0
      %745 = vmatprep.subr.mxu0 0.0
      %746 = vmatpush2.xpose.msra.mxu0 0.0
      %747 = vmatprep.subr.mxu0 0.0
      %748 = vmatpush2.xpose.msra.mxu0 0.0
      %749 = vmatprep.subr.mxu0 0.0
      %750 = vmatpush2.xpose.msra.mxu0 0.0
      %751 = vmatprep.subr.mxu0 0.0
      %752 = vmatpush2.xpose.msra.mxu0 0.0
      %753 = vmatprep.subr.mxu0 0.0
      %754 = vmatpush2.xpose.msra.mxu0 0.0
      %755 = vmatprep.subr.mxu0 0.0
      %756 = vmatpush2.xpose.msra.mxu0 0.0
      %757 = vmatprep.subr.mxu0 0.0
      %758 = vmatpush2.xpose.msra.mxu0 0.0
      %759 = vmatprep.subr.mxu0 0.0
      %760 = vmatpush2.xpose.msra.mxu0 0.0
      %761 = vmatprep.subr.mxu0 0.0
      %762 = vmatpush2.xpose.msra.mxu0 0.0
      %763 = vmatprep.subr.mxu0 0.0
      %764 = vmatpush2.xpose.msra.mxu0 0.0
      %765 = vmatprep.mubr.f32.mxu0 0.0
      %766 = vmatmul.mubr.f32.gmra.mxu0 %v684
      %v767 = vpop.f32.mrf.mxu0
      %v768 = vadd.f32 0.0, %v767
      %v769 = vpop.f32.mrf.mxu0
      %770 = vmatprep.mubr.f32.mxu0 0.0
      %771 = vmatmul.mubr.f32.gmra.mxu0 %v687
      %v772 = vpop.f32.mrf.mxu0
      %v773 = vadd.f32 0.0, %v772
      %v774 = vpop.f32.mrf.mxu0
      %775 = vmatprep.mubr.f32.mxu0 0.0
      %776 = vmatmul.mubr.f32.gmra.mxu0 %v690
      %v777 = vpop.f32.mrf.mxu0
      %v778 = vadd.f32 0.0, %v777
      %v779 = vpop.f32.mrf.mxu0
      %780 = vdwg.mxu0
      %v781 = vmul.f32 %v768, 0.125
      %v782 = vmul.f32 %v773, 0.125
      %v783 = vmul.f32 %v778, 0.125
      %vm784 = vcmask 195584
      %v785 = vsel %vm784, %v781, -inf
      %786 = vmax.xlane.f32.xlu0 %v785
      %v787 = vpop.xlane.xlu0 %786
      %v788 = vsel %vm784, %v782, -inf
      %789 = vmax.xlane.f32.xlu0 %v788
      %v790 = vpop.xlane.xlu0 %789
      %v791 = vsel %vm784, %v783, -inf
      %792 = vmax.xlane.f32.xlu0 %v791
      %v793 = vpop.xlane.xlu0 %792
      %v794 = vsub.f32 %v781, %v787
      %v795 = vsub.f32 %v782, %v790
      %v796 = vsub.f32 %v783, %v793
      %v797 = vmul.f32 %v794, 1.442695
      %v798 = vpow.pop %v797
      %v799 = vmul.f32 %v795, 1.442695
      %v800 = vpow.pop %v799
      %v801 = vmul.f32 %v796, 1.442695
      %v802 = vpow.pop %v801
      %v803 = vsel %vm784, %v798, 0.0
      %804 = vadd.xlane.f32.xlu0 %v803
      %v805 = vpop.xlane.xlu0 %804
      %v806 = vsel %vm784, %v800, 0.0
      %807 = vadd.xlane.f32.xlu0 %v806
      %v808 = vpop.xlane.xlu0 %807
      %v809 = vsel %vm784, %v802, 0.0
      %810 = vadd.xlane.f32.xlu0 %v809
      %v811 = vpop.xlane.xlu0 %810
      %v812 = vrcp.pop %v805
      %v813 = vrcp.pop %v808
      %v814 = vrcp.pop %v811
      %v815 = vmul.f32 %v798, %v812
      %v816 = vmul.f32 %v800, %v813
      %v817 = vmul.f32 %v802, %v814
      %v819 = vsel %vm784, %v815, 0
      %v822 = vsel %vm784, %v816, 0
      %v825 = vsel %vm784, %v817, 0
      %827 = vmatprep.subr.mxu0 0.0
      %828 = vmatpush1.msra.mxu0 0.0
      %829 = vmatprep.subr.mxu0 0.0
      %830 = vmatpush1.msra.mxu0 0.0
      %831 = vmatprep.subr.mxu0 0.0
      %832 = vmatpush1.msra.mxu0 0.0
      %833 = vmatprep.subr.mxu0 0.0
      %834 = vmatpush1.msra.mxu0 0.0
      %835 = vmatprep.subr.mxu0 0.0
      %836 = vmatpush1.msra.mxu0 0.0
      %837 = vmatprep.subr.mxu0 0.0
      %838 = vmatpush1.msra.mxu0 0.0
      %839 = vmatprep.subr.mxu0 0.0
      %840 = vmatpush1.msra.mxu0 0.0
      %841 = vmatprep.subr.mxu0 0.0
      %842 = vmatpush1.msra.mxu0 0.0
      %843 = vmatprep.subr.mxu0 0.0
      %844 = vmatpush1.msra.mxu0 0.0
      %845 = vmatprep.subr.mxu0 0.0
      %846 = vmatpush1.msra.mxu0 0.0
      %847 = vmatprep.subr.mxu0 0.0
      %848 = vmatpush1.msra.mxu0 0.0
      %849 = vmatprep.subr.mxu0 0.0
      %850 = vmatpush1.msra.mxu0 0.0
      %851 = vmatprep.subr.mxu0 0.0
      %852 = vmatpush1.msra.mxu0 0.0
      %853 = vmatprep.subr.mxu0 0.0
      %854 = vmatpush1.msra.mxu0 %v679
      %855 = vmatprep.subr.mxu0 0.0
      %856 = vmatpush1.msra.mxu0 %v674
      %857 = vmatprep.subr.mxu0 0.0
      %858 = vmatpush1.msra.mxu0 %v669
      %859 = vmatprep.subr.mxu0 0.0
      %860 = vmatpush2.msra.mxu0 0.0
      %861 = vmatprep.subr.mxu0 0.0
      %862 = vmatpush2.msra.mxu0 0.0
      %863 = vmatprep.subr.mxu0 0.0
      %864 = vmatpush2.msra.mxu0 0.0
      %865 = vmatprep.subr.mxu0 0.0
      %866 = vmatpush2.msra.mxu0 0.0
      %867 = vmatprep.subr.mxu0 0.0
      %868 = vmatpush2.msra.mxu0 0.0
      %869 = vmatprep.subr.mxu0 0.0
      %870 = vmatpush2.msra.mxu0 0.0
      %871 = vmatprep.subr.mxu0 0.0
      %872 = vmatpush2.msra.mxu0 0.0
      %873 = vmatprep.subr.mxu0 0.0
      %874 = vmatpush2.msra.mxu0 0.0
      %875 = vmatprep.subr.mxu0 0.0
      %876 = vmatpush2.msra.mxu0 0.0
      %877 = vmatprep.subr.mxu0 0.0
      %878 = vmatpush2.msra.mxu0 0.0
      %879 = vmatprep.subr.mxu0 0.0
      %880 = vmatpush2.msra.mxu0 0.0
      %881 = vmatprep.subr.mxu0 0.0
      %882 = vmatpush2.msra.mxu0 0.0
      %883 = vmatprep.subr.mxu0 0.0
      %884 = vmatpush2.msra.mxu0 0.0
      %885 = vmatprep.subr.mxu0 0.0
      %886 = vmatpush2.msra.mxu0 0.0
      %887 = vmatprep.subr.mxu0 0.0
      %888 = vmatpush2.msra.mxu0 0.0
      %889 = vmatprep.subr.mxu0 0.0
      %890 = vmatpush2.msra.mxu0 0.0
      %891 = vmatprep.mubr.f32.mxu0 0.0
      %892 = vmatmul.mubr.f32.gmra.mxu0 %v819
      %v893 = vpop.f32.mrf.mxu0
      %v894 = vadd.f32 0.0, %v893
      %v895 = vpop.f32.mrf.mxu0
      %896 = vmatprep.mubr.f32.mxu0 0.0
      %897 = vmatmul.mubr.f32.gmra.mxu0 %v822
      %v898 = vpop.f32.mrf.mxu0
      %v899 = vadd.f32 0.0, %v898
      %v900 = vpop.f32.mrf.mxu0
      %901 = vmatprep.mubr.f32.mxu0 0.0
      %902 = vmatmul.mubr.f32.gmra.mxu0 %v825
      %v903 = vpop.f32.mrf.mxu0
      %v904 = vadd.f32 0.0, %v903
      %v905 = vpop.f32.mrf.mxu0
      %906 = vdwg.mxu0
      %907 = vrot.lane.b32.xlu0 %v586, 64
      %v908 = vpop.permute.xlu0 %907
      %909 = vrot.lane.b32.xlu0 %v592, 64
      %v910 = vpop.permute.xlu0 %909
      %911 = vrot.lane.b32.xlu0 %v598, 64
      %v912 = vpop.permute.xlu0 %911
      %913 = vrot.lane.b32.xlu0 %v588, 64
      %v914 = vpop.permute.xlu0 %913
      %915 = vrot.lane.b32.xlu0 %v594, 64
      %v916 = vpop.permute.xlu0 %915
      %917 = vrot.lane.b32.xlu0 %v600, 64
      %v918 = vpop.permute.xlu0 %917
      %v919 = vsel %vm682, %v908, 0
      %v921 = vsel %vm682, %v910, 0
      %v923 = vsel %vm682, %v912, 0
      %v925 = vsel %vm682, %v914, 0
      %v927 = vsel %vm682, %v916, 0
      %v929 = vsel %vm682, %v918, 0
      %931 = vmatprep.subr.mxu0 0.0
      %932 = vmatpush1.xpose.msra.mxu0 0.0
      %933 = vmatprep.subr.mxu0 0.0
      %934 = vmatpush1.xpose.msra.mxu0 0.0
      %935 = vmatprep.subr.mxu0 0.0
      %936 = vmatpush1.xpose.msra.mxu0 0.0
      %937 = vmatprep.subr.mxu0 0.0
      %938 = vmatpush1.xpose.msra.mxu0 0.0
      %939 = vmatprep.subr.mxu0 0.0
      %940 = vmatpush1.xpose.msra.mxu0 0.0
      %941 = vmatprep.subr.mxu0 0.0
      %942 = vmatpush1.xpose.msra.mxu0 0.0
      %943 = vmatprep.subr.mxu0 0.0
      %944 = vmatpush1.xpose.msra.mxu0 0.0
      %945 = vmatprep.subr.mxu0 0.0
      %946 = vmatpush1.xpose.msra.mxu0 0.0
      %947 = vmatprep.subr.mxu0 0.0
      %948 = vmatpush1.xpose.msra.mxu0 0.0
      %949 = vmatprep.subr.mxu0 0.0
      %950 = vmatpush1.xpose.msra.mxu0 0.0
      %951 = vmatprep.subr.mxu0 0.0
      %952 = vmatpush1.xpose.msra.mxu0 0.0
      %953 = vmatprep.subr.mxu0 0.0
      %954 = vmatpush1.xpose.msra.mxu0 0.0
      %955 = vmatprep.subr.mxu0 0.0
      %956 = vmatpush1.xpose.msra.mxu0 0.0
      %957 = vmatprep.subr.mxu0 0.0
      %958 = vmatpush1.xpose.msra.mxu0 %v929
      %959 = vmatprep.subr.mxu0 0.0
      %960 = vmatpush1.xpose.msra.mxu0 %v927
      %961 = vmatprep.subr.mxu0 0.0
      %962 = vmatpush1.xpose.msra.mxu0 %v925
      %963 = vmatprep.subr.mxu0 0.0
      %964 = vmatpush2.xpose.msra.mxu0 0.0
      %965 = vmatprep.subr.mxu0 0.0
      %966 = vmatpush2.xpose.msra.mxu0 0.0
      %967 = vmatprep.subr.mxu0 0.0
      %968 = vmatpush2.xpose.msra.mxu0 0.0
      %969 = vmatprep.subr.mxu0 0.0
      %970 = vmatpush2.xpose.msra.mxu0 0.0
      %971 = vmatprep.subr.mxu0 0.0
      %972 = vmatpush2.xpose.msra.mxu0 0.0
      %973 = vmatprep.subr.mxu0 0.0
      %974 = vmatpush2.xpose.msra.mxu0 0.0
      %975 = vmatprep.subr.mxu0 0.0
      %976 = vmatpush2.xpose.msra.mxu0 0.0
      %977 = vmatprep.subr.mxu0 0.0
      %978 = vmatpush2.xpose.msra.mxu0 0.0
      %979 = vmatprep.subr.mxu0 0.0
      %980 = vmatpush2.xpose.msra.mxu0 0.0
      %981 = vmatprep.subr.mxu0 0.0
      %982 = vmatpush2.xpose.msra.mxu0 0.0
      %983 = vmatprep.subr.mxu0 0.0
      %984 = vmatpush2.xpose.msra.mxu0 0.0
      %985 = vmatprep.subr.mxu0 0.0
      %986 = vmatpush2.xpose.msra.mxu0 0.0
      %987 = vmatprep.subr.mxu0 0.0
      %988 = vmatpush2.xpose.msra.mxu0 0.0
      %989 = vmatprep.subr.mxu0 0.0
      %990 = vmatpush2.xpose.msra.mxu0 0.0
      %991 = vmatprep.subr.mxu0 0.0
      %992 = vmatpush2.xpose.msra.mxu0 0.0
      %993 = vmatprep.subr.mxu0 0.0
      %994 = vmatpush2.xpose.msra.mxu0 0.0
      %995 = vmatprep.mubr.f32.mxu0 0.0
      %996 = vmatmul.mubr.f32.gmra.mxu0 %v919
      %v997 = vpop.f32.mrf.mxu0
      %v998 = vadd.f32 0.0, %v997
      %v999 = vpop.f32.mrf.mxu0
      %1000 = vmatprep.mubr.f32.mxu0 0.0
      %1001 = vmatmul.mubr.f32.gmra.mxu0 %v921
      %v1002 = vpop.f32.mrf.mxu0
      %v1003 = vadd.f32 0.0, %v1002
      %v1004 = vpop.f32.mrf.mxu0
      %1005 = vmatprep.mubr.f32.mxu0 0.0
      %1006 = vmatmul.mubr.f32.gmra.mxu0 %v923
      %v1007 = vpop.f32.mrf.mxu0
      %v1008 = vadd.f32 0.0, %v1007
      %v1009 = vpop.f32.mrf.mxu0
      %1010 = vdwg.mxu0
      %v1011 = vmul.f32 %v998, 0.125
      %v1012 = vmul.f32 %v1003, 0.125
      %v1013 = vmul.f32 %v1008, 0.125
      %v1014 = vsel %vm784, %v1011, -inf
      %1015 = vmax.xlane.f32.xlu0 %v1014
      %v1016 = vpop.xlane.xlu0 %1015
      %v1017 = vsel %vm784, %v1012, -inf
      %1018 = vmax.xlane.f32.xlu0 %v1017
      %v1019 = vpop.xlane.xlu0 %1018
      %v1020 = vsel %vm784, %v1013, -inf
      %1021 = vmax.xlane.f32.xlu0 %v1020
      %v1022 = vpop.xlane.xlu0 %1021
      %v1023 = vsub.f32 %v1011, %v1016
      %v1024 = vsub.f32 %v1012, %v1019
      %v1025 = vsub.f32 %v1013, %v1022
      %v1026 = vmul.f32 %v1023, 1.442695
      %v1027 = vpow.pop %v1026
      %v1028 = vmul.f32 %v1024, 1.442695
      %v1029 = vpow.pop %v1028
      %v1030 = vmul.f32 %v1025, 1.442695
      %v1031 = vpow.pop %v1030
      %v1032 = vsel %vm784, %v1027, 0.0
      %1033 = vadd.xlane.f32.xlu0 %v1032
      %v1034 = vpop.xlane.xlu0 %1033
      %v1035 = vsel %vm784, %v1029, 0.0
      %1036 = vadd.xlane.f32.xlu0 %v1035
      %v1037 = vpop.xlane.xlu0 %1036
      %v1038 = vsel %vm784, %v1031, 0.0
      %1039 = vadd.xlane.f32.xlu0 %v1038
      %v1040 = vpop.xlane.xlu0 %1039
      %v1041 = vrcp.pop %v1034
      %v1042 = vrcp.pop %v1037
      %v1043 = vrcp.pop %v1040
      %v1044 = vmul.f32 %v1027, %v1041
      %v1045 = vmul.f32 %v1029, %v1042
      %v1046 = vmul.f32 %v1031, %v1043
      %1050 = vrot.lane.b32.xlu0 %v669, 64
      %v1051 = vpop.permute.xlu0 %1050
      %1052 = vrot.lane.b32.xlu0 %v674, 64
      %v1053 = vpop.permute.xlu0 %1052
      %1054 = vrot.lane.b32.xlu0 %v679, 64
      %v1055 = vpop.permute.xlu0 %1054
      %v1060 = vsel %vm784, %v1044, 0
      %v1063 = vsel %vm784, %v1045, 0
      %v1066 = vsel %vm784, %v1046, 0
      %1068 = vmatprep.subr.mxu0 0.0
      %1069 = vmatpush1.msra.mxu0 0.0
      %1070 = vmatprep.subr.mxu0 0.0
      %1071 = vmatpush1.msra.mxu0 0.0
      %1072 = vmatprep.subr.mxu0 0.0
      %1073 = vmatpush1.msra.mxu0 0.0
      %1074 = vmatprep.subr.mxu0 0.0
      %1075 = vmatpush1.msra.mxu0 0.0
      %1076 = vmatprep.subr.mxu0 0.0
      %1077 = vmatpush1.msra.mxu0 0.0
      %1078 = vmatprep.subr.mxu0 0.0
      %1079 = vmatpush1.msra.mxu0 0.0
      %1080 = vmatprep.subr.mxu0 0.0
      %1081 = vmatpush1.msra.mxu0 0.0
      %1082 = vmatprep.subr.mxu0 0.0
      %1083 = vmatpush1.msra.mxu0 0.0
      %1084 = vmatprep.subr.mxu0 0.0
      %1085 = vmatpush1.msra.mxu0 0.0
      %1086 = vmatprep.subr.mxu0 0.0
      %1087 = vmatpush1.msra.mxu0 0.0
      %1088 = vmatprep.subr.mxu0 0.0
      %1089 = vmatpush1.msra.mxu0 0.0
      %1090 = vmatprep.subr.mxu0 0.0
      %1091 = vmatpush1.msra.mxu0 0.0
      %1092 = vmatprep.subr.mxu0 0.0
      %1093 = vmatpush1.msra.mxu0 0.0
      %1094 = vmatprep.subr.mxu0 0.0
      %1095 = vmatpush1.msra.mxu0 %v1055
      %1096 = vmatprep.subr.mxu0 0.0
      %1097 = vmatpush1.msra.mxu0 %v1053
      %1098 = vmatprep.subr.mxu0 0.0
      %1099 = vmatpush1.msra.mxu0 %v1051
      %1100 = vmatprep.subr.mxu0 0.0
      %1101 = vmatpush2.msra.mxu0 0.0
      %1102 = vmatprep.subr.mxu0 0.0
      %1103 = vmatpush2.msra.mxu0 0.0
      %1104 = vmatprep.subr.mxu0 0.0
      %1105 = vmatpush2.msra.mxu0 0.0
      %1106 = vmatprep.subr.mxu0 0.0
      %1107 = vmatpush2.msra.mxu0 0.0
      %1108 = vmatprep.subr.mxu0 0.0
      %1109 = vmatpush2.msra.mxu0 0.0
      %1110 = vmatprep.subr.mxu0 0.0
      %1111 = vmatpush2.msra.mxu0 0.0
      %1112 = vmatprep.subr.mxu0 0.0
      %1113 = vmatpush2.msra.mxu0 0.0
      %1114 = vmatprep.subr.mxu0 0.0
      %1115 = vmatpush2.msra.mxu0 0.0
      %1116 = vmatprep.subr.mxu0 0.0
      %1117 = vmatpush2.msra.mxu0 0.0
      %1118 = vmatprep.subr.mxu0 0.0
      %1119 = vmatpush2.msra.mxu0 0.0
      %1120 = vmatprep.subr.mxu0 0.0
      %1121 = vmatpush2.msra.mxu0 0.0
      %1122 = vmatprep.subr.mxu0 0.0
      %1123 = vmatpush2.msra.mxu0 0.0
      %1124 = vmatprep.subr.mxu0 0.0
      %1125 = vmatpush2.msra.mxu0 0.0
      %1126 = vmatprep.subr.mxu0 0.0
      %1127 = vmatpush2.msra.mxu0 0.0
      %1128 = vmatprep.subr.mxu0 0.0
      %1129 = vmatpush2.msra.mxu0 0.0
      %1130 = vmatprep.subr.mxu0 0.0
      %1131 = vmatpush2.msra.mxu0 0.0
      %1132 = vmatprep.mubr.f32.mxu0 0.0
      %1133 = vmatmul.mubr.f32.gmra.mxu0 %v1060
      %v1134 = vpop.f32.mrf.mxu0
      %v1135 = vadd.f32 0.0, %v1134
      %v1136 = vpop.f32.mrf.mxu0
      %1137 = vmatprep.mubr.f32.mxu0 0.0
      %1138 = vmatmul.mubr.f32.gmra.mxu0 %v1063
      %v1139 = vpop.f32.mrf.mxu0
      %v1140 = vadd.f32 0.0, %v1139
      %v1141 = vpop.f32.mrf.mxu0
      %1142 = vmatprep.mubr.f32.mxu0 0.0
      %1143 = vmatmul.mubr.f32.gmra.mxu0 %v1066
      %v1144 = vpop.f32.mrf.mxu0
      %v1145 = vadd.f32 0.0, %v1144
      %v1146 = vpop.f32.mrf.mxu0
      %1147 = vdwg.mxu0
      %1151 = vrot.lane.b32.xlu0 %v1135, 64
      %v1152 = vpop.permute.xlu0 %1151
      %1153 = vrot.lane.b32.xlu0 %v1140, 64
      %v1154 = vpop.permute.xlu0 %1153
      %1155 = vrot.lane.b32.xlu0 %v1145, 64
      %v1156 = vpop.permute.xlu0 %1155
      %v1160 = vsel %vm682, %v894, %v1152
      %v1161 = vsel %vm682, %v899, %v1154
      %v1162 = vsel %vm682, %v904, %v1156
      %v1163 = vld [vmem:[%s4] sm:$0xff]
      %v1164 = vld [vmem:[%s4 + $0x8] sm:$0xff]
      %v1165 = vld [vmem:[%s4 + $0x10] sm:$0xff]
      %v1166 = vld [vmem:[%s4 + $0x18] sm:$0xff]
      %v1167 = vld [vmem:[%s4 + $0x20] sm:$0xff]
      %v1168 = vld [vmem:[%s4 + $0x28] sm:$0xff]
      %v1169 = vld [vmem:[%s4 + $0x30] sm:$0xff]
      %v1170 = vld [vmem:[%s4 + $0x38] sm:$0xff]
      %v1171 = vld [vmem:[%s4 + $0x40] sm:$0xff]
      %v1172 = vld [vmem:[%s4 + $0x48] sm:$0xff]
      %v1173 = vld [vmem:[%s4 + $0x50] sm:$0xff]
      %v1174 = vld [vmem:[%s4 + $0x58] sm:$0xff]
      %v1175 = vld [vmem:[%s4 + $0x60] sm:$0xff]
      %v1176 = vld [vmem:[%s4 + $0x68] sm:$0xff]
      %v1177 = vld [vmem:[%s4 + $0x70] sm:$0xff]
      %v1178 = vld [vmem:[%s4 + $0x78] sm:$0xff]
      %v1179 = vld [vmem:[%s5] sm:$0x1]
      %v1181 = vlaneseq
      %v1182 = vshrl.u32 %v1181, 7
      %v1183 = vsub.s32 0, %v1182
      %v1184 = vrot.slane %v1179, %v1183
      %1186 = vmatprep.subr.mxu0 0.0
      %1187 = vmatpush1.msra.mxu0 %v1178
      %1188 = vmatprep.subr.mxu0 0.0
      %1189 = vmatpush1.msra.mxu0 %v1177
      %1190 = vmatprep.subr.mxu0 0.0
      %1191 = vmatpush1.msra.mxu0 %v1176
      %1192 = vmatprep.subr.mxu0 0.0
      %1193 = vmatpush1.msra.mxu0 %v1175
      %1194 = vmatprep.subr.mxu0 0.0
      %1195 = vmatpush1.msra.mxu0 %v1174
      %1196 = vmatprep.subr.mxu0 0.0
      %1197 = vmatpush1.msra.mxu0 %v1173
      %1198 = vmatprep.subr.mxu0 0.0
      %1199 = vmatpush1.msra.mxu0 %v1172
      %1200 = vmatprep.subr.mxu0 0.0
      %1201 = vmatpush1.msra.mxu0 %v1171
      %1202 = vmatprep.subr.mxu0 0.0
      %1203 = vmatpush1.msra.mxu0 %v1170
      %1204 = vmatprep.subr.mxu0 0.0
      %1205 = vmatpush1.msra.mxu0 %v1169
      %1206 = vmatprep.subr.mxu0 0.0
      %1207 = vmatpush1.msra.mxu0 %v1168
      %1208 = vmatprep.subr.mxu0 0.0
      %1209 = vmatpush1.msra.mxu0 %v1167
      %1210 = vmatprep.subr.mxu0 0.0
      %1211 = vmatpush1.msra.mxu0 %v1166
      %1212 = vmatprep.subr.mxu0 0.0
      %1213 = vmatpush1.msra.mxu0 %v1165
      %1214 = vmatprep.subr.mxu0 0.0
      %1215 = vmatpush1.msra.mxu0 %v1164
      %1216 = vmatprep.subr.mxu0 0.0
      %1217 = vmatpush1.msra.mxu0 %v1163
      %1218 = vmatprep.subr.mxu0 0.0
      %1219 = vmatpush2.msra.mxu0 0.0
      %1220 = vmatprep.subr.mxu0 0.0
      %1221 = vmatpush2.msra.mxu0 0.0
      %1222 = vmatprep.subr.mxu0 0.0
      %1223 = vmatpush2.msra.mxu0 0.0
      %1224 = vmatprep.subr.mxu0 0.0
      %1225 = vmatpush2.msra.mxu0 0.0
      %1226 = vmatprep.subr.mxu0 0.0
      %1227 = vmatpush2.msra.mxu0 0.0
      %1228 = vmatprep.subr.mxu0 0.0
      %1229 = vmatpush2.msra.mxu0 0.0
      %1230 = vmatprep.subr.mxu0 0.0
      %1231 = vmatpush2.msra.mxu0 0.0
      %1232 = vmatprep.subr.mxu0 0.0
      %1233 = vmatpush2.msra.mxu0 0.0
      %1234 = vmatprep.subr.mxu0 0.0
      %1235 = vmatpush2.msra.mxu0 0.0
      %1236 = vmatprep.subr.mxu0 0.0
      %1237 = vmatpush2.msra.mxu0 0.0
      %1238 = vmatprep.subr.mxu0 0.0
      %1239 = vmatpush2.msra.mxu0 0.0
      %1240 = vmatprep.subr.mxu0 0.0
      %1241 = vmatpush2.msra.mxu0 0.0
      %1242 = vmatprep.subr.mxu0 0.0
      %1243 = vmatpush2.msra.mxu0 0.0
      %1244 = vmatprep.subr.mxu0 0.0
      %1245 = vmatpush2.msra.mxu0 0.0
      %1246 = vmatprep.subr.mxu0 0.0
      %1247 = vmatpush2.msra.mxu0 0.0
      %1248 = vmatprep.subr.mxu0 0.0
      %1249 = vmatpush2.msra.mxu0 0.0
      %1250 = vmatprep.mubr.f32.mxu0 0.0
      %1251 = vmatmul.mubr.f32.gmra.mxu0 %v1160
      %v1252 = vpop.f32.mrf.mxu0
      %v1253 = vadd.f32 %v1184, %v1252
      %v1254 = vpop.f32.mrf.mxu0
      %1255 = vmatprep.mubr.f32.mxu0 0.0
      %1256 = vmatmul.mubr.f32.gmra.mxu0 %v1161
      %v1257 = vpop.f32.mrf.mxu0
      %v1258 = vadd.f32 %v1184, %v1257
      %v1259 = vpop.f32.mrf.mxu0
      %1260 = vmatprep.mubr.f32.mxu0 0.0
      %1261 = vmatmul.mubr.f32.gmra.mxu0 %v1162
      %v1262 = vpop.f32.mrf.mxu0
      %v1263 = vadd.f32 %v1184, %v1262
      %v1264 = vpop.f32.mrf.mxu0
      %1265 = vdwg.mxu0
      %v1266 = vadd.f32 %v414, %v1253
      %v1267 = vadd.f32 %v415, %v1258
      %v1268 = vadd.f32 %v416, %v1263
      %1269 = vadd.xlane.f32.xlu0 %v1266
      %v1270 = vpop.xlane.xlu0 %1269
      %1271 = vadd.xlane.f32.xlu0 %v1267
      %v1272 = vpop.xlane.xlu0 %1271
      %1273 = vadd.xlane.f32.xlu0 %v1268
      %v1274 = vpop.xlane.xlu0 %1273
      %v1275 = vmul.f32 %v1270, %v423
      %v1276 = vmul.f32 %v1272, %v423
      %v1277 = vmul.f32 %v1274, %v423
      %v1278 = vsub.f32 %v1266, %v1275
      %v1279 = vsub.f32 %v1267, %v1276
      %v1280 = vsub.f32 %v1268, %v1277
      %v1281 = vmul.f32 %v1278, %v1278
      %v1282 = vmul.f32 %v1279, %v1279
      %v1283 = vmul.f32 %v1280, %v1280
      %1284 = vadd.xlane.f32.xlu0 %v1281
      %v1285 = vpop.xlane.xlu0 %1284
      %1286 = vadd.xlane.f32.xlu0 %v1282
      %v1287 = vpop.xlane.xlu0 %1286
      %1288 = vadd.xlane.f32.xlu0 %v1283
      %v1289 = vpop.xlane.xlu0 %1288
      %v1290 = vmul.f32 %v1285, %v423
      %v1291 = vmul.f32 %v1287, %v423
      %v1292 = vmul.f32 %v1289, %v423
      %v1293 = vadd.f32 %v1290, 1e-05
      %v1294 = vadd.f32 %v1291, 1e-05
      %v1295 = vadd.f32 %v1292, 1e-05
      %v1296 = vrsqrt.pop %v1293
      %v1297 = vrsqrt.pop %v1294
      %v1298 = vrsqrt.pop %v1295
      %v1299 = vmul.f32 %v1278, %v1296
      %v1300 = vmul.f32 %v1279, %v1297
      %v1301 = vmul.f32 %v1280, %v1298
      %v1302 = vld [vmem:[%s6] sm:$0x1]
      %v1304 = vlaneseq
      %v1305 = vshrl.u32 %v1304, 7
      %v1306 = vsub.s32 0, %v1305
      %v1307 = vrot.slane %v1302, %v1306
      %v1309 = vmul.f32 %v1299, %v1307
      %v1310 = vmul.f32 %v1300, %v1307
      %v1311 = vmul.f32 %v1301, %v1307
      %v1312 = vld [vmem:[%s7] sm:$0x1]
      %v1314 = vlaneseq
      %v1315 = vshrl.u32 %v1314, 7
      %v1316 = vsub.s32 0, %v1315
      %v1317 = vrot.slane %v1312, %v1316
      %v1319 = vadd.f32 %v1309, %v1317
      %v1320 = vadd.f32 %v1310, %v1317
      %v1321 = vadd.f32 %v1311, %v1317
      %v1322 = vld [vmem:[%s8] sm:$0xff]
      %v1323 = vld [vmem:[%s8 + $0x8] sm:$0xff]
      %v1324 = vld [vmem:[%s8 + $0x10] sm:$0xff]
      %v1325 = vld [vmem:[%s8 + $0x18] sm:$0xff]
      %v1326 = vld [vmem:[%s8 + $0x20] sm:$0xff]
      %v1327 = vld [vmem:[%s8 + $0x28] sm:$0xff]
      %v1328 = vld [vmem:[%s8 + $0x30] sm:$0xff]
      %v1329 = vld [vmem:[%s8 + $0x38] sm:$0xff]
      %v1330 = vld [vmem:[%s8 + $0x40] sm:$0xff]
      %v1331 = vld [vmem:[%s8 + $0x48] sm:$0xff]
      %v1332 = vld [vmem:[%s8 + $0x50] sm:$0xff]
      %v1333 = vld [vmem:[%s8 + $0x58] sm:$0xff]
      %v1334 = vld [vmem:[%s8 + $0x60] sm:$0xff]
      %v1335 = vld [vmem:[%s8 + $0x68] sm:$0xff]
      %v1336 = vld [vmem:[%s8 + $0x70] sm:$0xff]
      %v1337 = vld [vmem:[%s8 + $0x78] sm:$0xff]
      %v1338 = vld [vmem:[%s8 + $0x80] sm:$0xff]
      %v1339 = vld [vmem:[%s8 + $0x88] sm:$0xff]
      %v1340 = vld [vmem:[%s8 + $0x90] sm:$0xff]
      %v1341 = vld [vmem:[%s8 + $0x98] sm:$0xff]
      %v1342 = vld [vmem:[%s8 + $0xa0] sm:$0xff]
      %v1343 = vld [vmem:[%s8 + $0xa8] sm:$0xff]
      %v1344 = vld [vmem:[%s8 + $0xb0] sm:$0xff]
      %v1345 = vld [vmem:[%s8 + $0xb8] sm:$0xff]
      %v1346 = vld [vmem:[%s8 + $0xc0] sm:$0xff]
      %v1347 = vld [vmem:[%s8 + $0xc8] sm:$0xff]
      %v1348 = vld [vmem:[%s8 + $0xd0] sm:$0xff]
      %v1349 = vld [vmem:[%s8 + $0xd8] sm:$0xff]
      %v1350 = vld [vmem:[%s8 + $0xe0] sm:$0xff]
      %v1351 = vld [vmem:[%s8 + $0xe8] sm:$0xff]
      %v1352 = vld [vmem:[%s8 + $0xf0] sm:$0xff]
      %v1353 = vld [vmem:[%s8 + $0xf8] sm:$0xff]
      %v1354 = vld [vmem:[%s8 + $0x100] sm:$0xff]
      %v1355 = vld [vmem:[%s8 + $0x108] sm:$0xff]
      %v1356 = vld [vmem:[%s8 + $0x110] sm:$0xff]
      %v1357 = vld [vmem:[%s8 + $0x118] sm:$0xff]
      %v1358 = vld [vmem:[%s8 + $0x120] sm:$0xff]
      %v1359 = vld [vmem:[%s8 + $0x128] sm:$0xff]
      %v1360 = vld [vmem:[%s8 + $0x130] sm:$0xff]
      %v1361 = vld [vmem:[%s8 + $0x138] sm:$0xff]
      %v1362 = vld [vmem:[%s8 + $0x140] sm:$0xff]
      %v1363 = vld [vmem:[%s8 + $0x148] sm:$0xff]
      %v1364 = vld [vmem:[%s8 + $0x150] sm:$0xff]
      %v1365 = vld [vmem:[%s8 + $0x158] sm:$0xff]
      %v1366 = vld [vmem:[%s8 + $0x160] sm:$0xff]
      %v1367 = vld [vmem:[%s8 + $0x168] sm:$0xff]
      %v1368 = vld [vmem:[%s8 + $0x170] sm:$0xff]
      %v1369 = vld [vmem:[%s8 + $0x178] sm:$0xff]
      %v1370 = vld [vmem:[%s8 + $0x180] sm:$0xff]
      %v1371 = vld [vmem:[%s8 + $0x188] sm:$0xff]
      %v1372 = vld [vmem:[%s8 + $0x190] sm:$0xff]
      %v1373 = vld [vmem:[%s8 + $0x198] sm:$0xff]
      %v1374 = vld [vmem:[%s8 + $0x1a0] sm:$0xff]
      %v1375 = vld [vmem:[%s8 + $0x1a8] sm:$0xff]
      %v1376 = vld [vmem:[%s8 + $0x1b0] sm:$0xff]
      %v1377 = vld [vmem:[%s8 + $0x1b8] sm:$0xff]
      %v1378 = vld [vmem:[%s8 + $0x1c0] sm:$0xff]
      %v1379 = vld [vmem:[%s8 + $0x1c8] sm:$0xff]
      %v1380 = vld [vmem:[%s8 + $0x1d0] sm:$0xff]
      %v1381 = vld [vmem:[%s8 + $0x1d8] sm:$0xff]
      %v1382 = vld [vmem:[%s8 + $0x1e0] sm:$0xff]
      %v1383 = vld [vmem:[%s8 + $0x1e8] sm:$0xff]
      %v1384 = vld [vmem:[%s8 + $0x1f0] sm:$0xff]
      %v1385 = vld [vmem:[%s8 + $0x1f8] sm:$0xff]
      %v1386 = vld [vmem:[%s9] sm:$0xf]
      %v1388 = vlaneseq
      %v1389 = vshrl.u32 %v1388, 7
      %v1390 = vsub.s32 0, %v1389
      %v1391 = vrot.slane %v1386, %v1390
      %v1392 = vlaneseq
      %v1393 = vshrl.u32 %v1392, 7
      %v1394 = vsub.s32 1, %v1393
      %v1395 = vrot.slane %v1386, %v1394
      %v1396 = vlaneseq
      %v1397 = vshrl.u32 %v1396, 7
      %v1398 = vsub.s32 2, %v1397
      %v1399 = vrot.slane %v1386, %v1398
      %v1400 = vlaneseq
      %v1401 = vshrl.u32 %v1400, 7
      %v1402 = vsub.s32 3, %v1401
      %v1403 = vrot.slane %v1386, %v1402
      %1408 = vmatprep.subr.mxu0 %v1383
      %1409 = vmatpush1.msra.mxu0 %v1382
      %1410 = vmatprep.subr.mxu0 %v1379
      %1411 = vmatpush1.msra.mxu0 %v1378
      %1412 = vmatprep.subr.mxu0 %v1375
      %1413 = vmatpush1.msra.mxu0 %v1374
      %1414 = vmatprep.subr.mxu0 %v1371
      %1415 = vmatpush1.msra.mxu0 %v1370
      %1416 = vmatprep.subr.mxu0 %v1367
      %1417 = vmatpush1.msra.mxu0 %v1366
      %1418 = vmatprep.subr.mxu0 %v1363
      %1419 = vmatpush1.msra.mxu0 %v1362
      %1420 = vmatprep.subr.mxu0 %v1359
      %1421 = vmatpush1.msra.mxu0 %v1358
      %1422 = vmatprep.subr.mxu0 %v1355
      %1423 = vmatpush1.msra.mxu0 %v1354
      %1424 = vmatprep.subr.mxu0 %v1351
      %1425 = vmatpush1.msra.mxu0 %v1350
      %1426 = vmatprep.subr.mxu0 %v1347
      %1427 = vmatpush1.msra.mxu0 %v1346
      %1428 = vmatprep.subr.mxu0 %v1343
      %1429 = vmatpush1.msra.mxu0 %v1342
      %1430 = vmatprep.subr.mxu0 %v1339
      %1431 = vmatpush1.msra.mxu0 %v1338
      %1432 = vmatprep.subr.mxu0 %v1335
      %1433 = vmatpush1.msra.mxu0 %v1334
      %1434 = vmatprep.subr.mxu0 %v1331
      %1435 = vmatpush1.msra.mxu0 %v1330
      %1436 = vmatprep.subr.mxu0 %v1327
      %1437 = vmatpush1.msra.mxu0 %v1326
      %1438 = vmatprep.subr.mxu0 %v1323
      %1439 = vmatpush1.msra.mxu0 %v1322
      %1440 = vmatprep.subr.mxu0 0.0
      %1441 = vmatpush2.msra.mxu0 0.0
      %1442 = vmatprep.subr.mxu0 0.0
      %1443 = vmatpush2.msra.mxu0 0.0
      %1444 = vmatprep.subr.mxu0 0.0
      %1445 = vmatpush2.msra.mxu0 0.0
      %1446 = vmatprep.subr.mxu0 0.0
      %1447 = vmatpush2.msra.mxu0 0.0
      %1448 = vmatprep.subr.mxu0 0.0
      %1449 = vmatpush2.msra.mxu0 0.0
      %1450 = vmatprep.subr.mxu0 0.0
      %1451 = vmatpush2.msra.mxu0 0.0
      %1452 = vmatprep.subr.mxu0 0.0
      %1453 = vmatpush2.msra.mxu0 0.0
      %1454 = vmatprep.subr.mxu0 0.0
      %1455 = vmatpush2.msra.mxu0 0.0
      %1456 = vmatprep.subr.mxu0 0.0
      %1457 = vmatpush2.msra.mxu0 0.0
      %1458 = vmatprep.subr.mxu0 0.0
      %1459 = vmatpush2.msra.mxu0 0.0
      %1460 = vmatprep.subr.mxu0 0.0
      %1461 = vmatpush2.msra.mxu0 0.0
      %1462 = vmatprep.subr.mxu0 0.0
      %1463 = vmatpush2.msra.mxu0 0.0
      %1464 = vmatprep.subr.mxu0 0.0
      %1465 = vmatpush2.msra.mxu0 0.0
      %1466 = vmatprep.subr.mxu0 0.0
      %1467 = vmatpush2.msra.mxu0 0.0
      %1468 = vmatprep.subr.mxu0 0.0
      %1469 = vmatpush2.msra.mxu0 0.0
      %1470 = vmatprep.subr.mxu0 0.0
      %1471 = vmatpush2.msra.mxu0 0.0
      %1472 = vmatprep.mubr.f32.mxu0 0.0
      %1473 = vmatmul.mubr.f32.gmra.mxu0 %v1319
      %v1474 = vpop.f32.mrf.mxu0
      %v1475 = vadd.f32 %v1391, %v1474
      %v1476 = vpop.f32.mrf.mxu0
      %v1477 = vadd.f32 %v1395, %v1476
      %1478 = vmatprep.mubr.f32.mxu0 0.0
      %1479 = vmatmul.mubr.f32.gmra.mxu0 %v1320
      %v1480 = vpop.f32.mrf.mxu0
      %v1481 = vadd.f32 %v1391, %v1480
      %v1482 = vpop.f32.mrf.mxu0
      %v1483 = vadd.f32 %v1395, %v1482
      %1484 = vmatprep.mubr.f32.mxu0 0.0
      %1485 = vmatmul.mubr.f32.gmra.mxu0 %v1321
      %v1486 = vpop.f32.mrf.mxu0
      %v1487 = vadd.f32 %v1391, %v1486
      %v1488 = vpop.f32.mrf.mxu0
      %v1489 = vadd.f32 %v1395, %v1488
      %1490 = vdwg.mxu0
      %1491 = vmatprep.subr.mxu0 %v1385
      %1492 = vmatpush1.msra.mxu0 %v1384
      %1493 = vmatprep.subr.mxu0 %v1381
      %1494 = vmatpush1.msra.mxu0 %v1380
      %1495 = vmatprep.subr.mxu0 %v1377
      %1496 = vmatpush1.msra.mxu0 %v1376
      %1497 = vmatprep.subr.mxu0 %v1373
      %1498 = vmatpush1.msra.mxu0 %v1372
      %1499 = vmatprep.subr.mxu0 %v1369
      %1500 = vmatpush1.msra.mxu0 %v1368
      %1501 = vmatprep.subr.mxu0 %v1365
      %1502 = vmatpush1.msra.mxu0 %v1364
      %1503 = vmatprep.subr.mxu0 %v1361
      %1504 = vmatpush1.msra.mxu0 %v1360
      %1505 = vmatprep.subr.mxu0 %v1357
      %1506 = vmatpush1.msra.mxu0 %v1356
      %1507 = vmatprep.subr.mxu0 %v1353
      %1508 = vmatpush1.msra.mxu0 %v1352
      %1509 = vmatprep.subr.mxu0 %v1349
      %1510 = vmatpush1.msra.mxu0 %v1348
      %1511 = vmatprep.subr.mxu0 %v1345
      %1512 = vmatpush1.msra.mxu0 %v1344
      %1513 = vmatprep.subr.mxu0 %v1341
      %1514 = vmatpush1.msra.mxu0 %v1340
      %1515 = vmatprep.subr.mxu0 %v1337
      %1516 = vmatpush1.msra.mxu0 %v1336
      %1517 = vmatprep.subr.mxu0 %v1333
      %1518 = vmatpush1.msra.mxu0 %v1332
      %1519 = vmatprep.subr.mxu0 %v1329
      %1520 = vmatpush1.msra.mxu0 %v1328
      %1521 = vmatprep.subr.mxu0 %v1325
      %1522 = vmatpush1.msra.mxu0 %v1324
      %1523 = vmatprep.subr.mxu0 0.0
      %1524 = vmatpush2.msra.mxu0 0.0
      %1525 = vmatprep.subr.mxu0 0.0
      %1526 = vmatpush2.msra.mxu0 0.0
      %1527 = vmatprep.subr.mxu0 0.0
      %1528 = vmatpush2.msra.mxu0 0.0
      %1529 = vmatprep.subr.mxu0 0.0
      %1530 = vmatpush2.msra.mxu0 0.0
      %1531 = vmatprep.subr.mxu0 0.0
      %1532 = vmatpush2.msra.mxu0 0.0
      %1533 = vmatprep.subr.mxu0 0.0
      %1534 = vmatpush2.msra.mxu0 0.0
      %1535 = vmatprep.subr.mxu0 0.0
      %1536 = vmatpush2.msra.mxu0 0.0
      %1537 = vmatprep.subr.mxu0 0.0
      %1538 = vmatpush2.msra.mxu0 0.0
      %1539 = vmatprep.subr.mxu0 0.0
      %1540 = vmatpush2.msra.mxu0 0.0
      %1541 = vmatprep.subr.mxu0 0.0
      %1542 = vmatpush2.msra.mxu0 0.0
      %1543 = vmatprep.subr.mxu0 0.0
      %1544 = vmatpush2.msra.mxu0 0.0
      %1545 = vmatprep.subr.mxu0 0.0
      %1546 = vmatpush2.msra.mxu0 0.0
      %1547 = vmatprep.subr.mxu0 0.0
      %1548 = vmatpush2.msra.mxu0 0.0
      %1549 = vmatprep.subr.mxu0 0.0
      %1550 = vmatpush2.msra.mxu0 0.0
      %1551 = vmatprep.subr.mxu0 0.0
      %1552 = vmatpush2.msra.mxu0 0.0
      %1553 = vmatprep.subr.mxu0 0.0
      %1554 = vmatpush2.msra.mxu0 0.0
      %1555 = vmatprep.mubr.f32.mxu0 0.0
      %1556 = vmatmul.mubr.f32.gmra.mxu0 %v1319
      %v1557 = vpop.f32.mrf.mxu0
      %v1558 = vadd.f32 %v1399, %v1557
      %v1559 = vpop.f32.mrf.mxu0
      %v1560 = vadd.f32 %v1403, %v1559
      %1561 = vmatprep.mubr.f32.mxu0 0.0
      %1562 = vmatmul.mubr.f32.gmra.mxu0 %v1320
      %v1563 = vpop.f32.mrf.mxu0
      %v1564 = vadd.f32 %v1399, %v1563
      %v1565 = vpop.f32.mrf.mxu0
      %v1566 = vadd.f32 %v1403, %v1565
      %1567 = vmatprep.mubr.f32.mxu0 0.0
      %1568 = vmatmul.mubr.f32.gmra.mxu0 %v1321
      %v1569 = vpop.f32.mrf.mxu0
      %v1570 = vadd.f32 %v1399, %v1569
      %v1571 = vpop.f32.mrf.mxu0
      %v1572 = vadd.f32 %v1403, %v1571
      %1573 = vdwg.mxu0
      %v1574 = vmul.f32 %v1475, 0.5
      %v1575 = vmul.f32 %v1477, 0.5
      %v1576 = vmul.f32 %v1558, 0.5
      %v1577 = vmul.f32 %v1560, 0.5
      %v1578 = vmul.f32 %v1481, 0.5
      %v1579 = vmul.f32 %v1483, 0.5
      %v1580 = vmul.f32 %v1564, 0.5
      %v1581 = vmul.f32 %v1566, 0.5
      %v1582 = vmul.f32 %v1487, 0.5
      %v1583 = vmul.f32 %v1489, 0.5
      %v1584 = vmul.f32 %v1570, 0.5
      %v1585 = vmul.f32 %v1572, 0.5
      %v1586 = vmul.f32 %v1475, 0.70710677
      %v1587 = vmul.f32 %v1477, 0.70710677
      %v1588 = vmul.f32 %v1558, 0.70710677
      %v1589 = vmul.f32 %v1560, 0.70710677
      %v1590 = vmul.f32 %v1481, 0.70710677
      %v1591 = vmul.f32 %v1483, 0.70710677
      %v1592 = vmul.f32 %v1564, 0.70710677
      %v1593 = vmul.f32 %v1566, 0.70710677
      %v1594 = vmul.f32 %v1487, 0.70710677
      %v1595 = vmul.f32 %v1489, 0.70710677
      %v1596 = vmul.f32 %v1570, 0.70710677
      %v1597 = vmul.f32 %v1572, 0.70710677
      %v1598 = verf.f32.pop %v1586
      %v1599 = verf.f32.pop %v1587
      %v1600 = verf.f32.pop %v1588
      %v1601 = verf.f32.pop %v1589
      %v1602 = verf.f32.pop %v1590
      %v1603 = verf.f32.pop %v1591
      %v1604 = verf.f32.pop %v1592
      %v1605 = verf.f32.pop %v1593
      %v1606 = verf.f32.pop %v1594
      %v1607 = verf.f32.pop %v1595
      %v1608 = verf.f32.pop %v1596
      %v1609 = verf.f32.pop %v1597
      %v1610 = vadd.f32 %v1598, 1.0
      %v1611 = vadd.f32 %v1599, 1.0
      %v1612 = vadd.f32 %v1600, 1.0
      %v1613 = vadd.f32 %v1601, 1.0
      %v1614 = vadd.f32 %v1602, 1.0
      %v1615 = vadd.f32 %v1603, 1.0
      %v1616 = vadd.f32 %v1604, 1.0
      %v1617 = vadd.f32 %v1605, 1.0
      %v1618 = vadd.f32 %v1606, 1.0
      %v1619 = vadd.f32 %v1607, 1.0
      %v1620 = vadd.f32 %v1608, 1.0
      %v1621 = vadd.f32 %v1609, 1.0
      %v1622 = vmul.f32 %v1574, %v1610
      %v1623 = vmul.f32 %v1575, %v1611
      %v1624 = vmul.f32 %v1576, %v1612
      %v1625 = vmul.f32 %v1577, %v1613
      %v1626 = vmul.f32 %v1578, %v1614
      %v1627 = vmul.f32 %v1579, %v1615
      %v1628 = vmul.f32 %v1580, %v1616
      %v1629 = vmul.f32 %v1581, %v1617
      %v1630 = vmul.f32 %v1582, %v1618
      %v1631 = vmul.f32 %v1583, %v1619
      %v1632 = vmul.f32 %v1584, %v1620
      %v1633 = vmul.f32 %v1585, %v1621
      %v1634 = vld [vmem:[%s10] sm:$0xff]
      %v1635 = vld [vmem:[%s10 + $0x8] sm:$0xff]
      %v1636 = vld [vmem:[%s10 + $0x10] sm:$0xff]
      %v1637 = vld [vmem:[%s10 + $0x18] sm:$0xff]
      %v1638 = vld [vmem:[%s10 + $0x20] sm:$0xff]
      %v1639 = vld [vmem:[%s10 + $0x28] sm:$0xff]
      %v1640 = vld [vmem:[%s10 + $0x30] sm:$0xff]
      %v1641 = vld [vmem:[%s10 + $0x38] sm:$0xff]
      %v1642 = vld [vmem:[%s10 + $0x40] sm:$0xff]
      %v1643 = vld [vmem:[%s10 + $0x48] sm:$0xff]
      %v1644 = vld [vmem:[%s10 + $0x50] sm:$0xff]
      %v1645 = vld [vmem:[%s10 + $0x58] sm:$0xff]
      %v1646 = vld [vmem:[%s10 + $0x60] sm:$0xff]
      %v1647 = vld [vmem:[%s10 + $0x68] sm:$0xff]
      %v1648 = vld [vmem:[%s10 + $0x70] sm:$0xff]
      %v1649 = vld [vmem:[%s10 + $0x78] sm:$0xff]
      %v1650 = vld [vmem:[%s10 + $0x80] sm:$0xff]
      %v1651 = vld [vmem:[%s10 + $0x88] sm:$0xff]
      %v1652 = vld [vmem:[%s10 + $0x90] sm:$0xff]
      %v1653 = vld [vmem:[%s10 + $0x98] sm:$0xff]
      %v1654 = vld [vmem:[%s10 + $0xa0] sm:$0xff]
      %v1655 = vld [vmem:[%s10 + $0xa8] sm:$0xff]
      %v1656 = vld [vmem:[%s10 + $0xb0] sm:$0xff]
      %v1657 = vld [vmem:[%s10 + $0xb8] sm:$0xff]
      %v1658 = vld [vmem:[%s10 + $0xc0] sm:$0xff]
      %v1659 = vld [vmem:[%s10 + $0xc8] sm:$0xff]
      %v1660 = vld [vmem:[%s10 + $0xd0] sm:$0xff]
      %v1661 = vld [vmem:[%s10 + $0xd8] sm:$0xff]
      %v1662 = vld [vmem:[%s10 + $0xe0] sm:$0xff]
      %v1663 = vld [vmem:[%s10 + $0xe8] sm:$0xff]
      %v1664 = vld [vmem:[%s10 + $0xf0] sm:$0xff]
      %v1665 = vld [vmem:[%s10 + $0xf8] sm:$0xff]
      %v1666 = vld [vmem:[%s10 + $0x100] sm:$0xff]
      %v1667 = vld [vmem:[%s10 + $0x108] sm:$0xff]
      %v1668 = vld [vmem:[%s10 + $0x110] sm:$0xff]
      %v1669 = vld [vmem:[%s10 + $0x118] sm:$0xff]
      %v1670 = vld [vmem:[%s10 + $0x120] sm:$0xff]
      %v1671 = vld [vmem:[%s10 + $0x128] sm:$0xff]
      %v1672 = vld [vmem:[%s10 + $0x130] sm:$0xff]
      %v1673 = vld [vmem:[%s10 + $0x138] sm:$0xff]
      %v1674 = vld [vmem:[%s10 + $0x140] sm:$0xff]
      %v1675 = vld [vmem:[%s10 + $0x148] sm:$0xff]
      %v1676 = vld [vmem:[%s10 + $0x150] sm:$0xff]
      %v1677 = vld [vmem:[%s10 + $0x158] sm:$0xff]
      %v1678 = vld [vmem:[%s10 + $0x160] sm:$0xff]
      %v1679 = vld [vmem:[%s10 + $0x168] sm:$0xff]
      %v1680 = vld [vmem:[%s10 + $0x170] sm:$0xff]
      %v1681 = vld [vmem:[%s10 + $0x178] sm:$0xff]
      %v1682 = vld [vmem:[%s10 + $0x180] sm:$0xff]
      %v1683 = vld [vmem:[%s10 + $0x188] sm:$0xff]
      %v1684 = vld [vmem:[%s10 + $0x190] sm:$0xff]
      %v1685 = vld [vmem:[%s10 + $0x198] sm:$0xff]
      %v1686 = vld [vmem:[%s10 + $0x1a0] sm:$0xff]
      %v1687 = vld [vmem:[%s10 + $0x1a8] sm:$0xff]
      %v1688 = vld [vmem:[%s10 + $0x1b0] sm:$0xff]
      %v1689 = vld [vmem:[%s10 + $0x1b8] sm:$0xff]
      %v1690 = vld [vmem:[%s10 + $0x1c0] sm:$0xff]
      %v1691 = vld [vmem:[%s10 + $0x1c8] sm:$0xff]
      %v1692 = vld [vmem:[%s10 + $0x1d0] sm:$0xff]
      %v1693 = vld [vmem:[%s10 + $0x1d8] sm:$0xff]
      %v1694 = vld [vmem:[%s10 + $0x1e0] sm:$0xff]
      %v1695 = vld [vmem:[%s10 + $0x1e8] sm:$0xff]
      %v1696 = vld [vmem:[%s10 + $0x1f0] sm:$0xff]
      %v1697 = vld [vmem:[%s10 + $0x1f8] sm:$0xff]
      %v1698 = vld [vmem:[%s11] sm:$0x1]
      %v1700 = vlaneseq
      %v1701 = vshrl.u32 %v1700, 7
      %v1702 = vsub.s32 0, %v1701
      %v1703 = vrot.slane %v1698, %v1702
      %1705 = vmatprep.subr.mxu0 0.0
      %1706 = vmatpush1.msra.mxu0 %v1649
      %1707 = vmatprep.subr.mxu0 0.0
      %1708 = vmatpush1.msra.mxu0 %v1648
      %1709 = vmatprep.subr.mxu0 0.0
      %1710 = vmatpush1.msra.mxu0 %v1647
      %1711 = vmatprep.subr.mxu0 0.0
      %1712 = vmatpush1.msra.mxu0 %v1646
      %1713 = vmatprep.subr.mxu0 0.0
      %1714 = vmatpush1.msra.mxu0 %v1645
      %1715 = vmatprep.subr.mxu0 0.0
      %1716 = vmatpush1.msra.mxu0 %v1644
      %1717 = vmatprep.subr.mxu0 0.0
      %1718 = vmatpush1.msra.mxu0 %v1643
      %1719 = vmatprep.subr.mxu0 0.0
      %1720 = vmatpush1.msra.mxu0 %v1642
      %1721 = vmatprep.subr.mxu0 0.0
      %1722 = vmatpush1.msra.mxu0 %v1641
      %1723 = vmatprep.subr.mxu0 0.0
      %1724 = vmatpush1.msra.mxu0 %v1640
      %1725 = vmatprep.subr.mxu0 0.0
      %1726 = vmatpush1.msra.mxu0 %v1639
      %1727 = vmatprep.subr.mxu0 0.0
      %1728 = vmatpush1.msra.mxu0 %v1638
      %1729 = vmatprep.subr.mxu0 0.0
      %1730 = vmatpush1.msra.mxu0 %v1637
      %1731 = vmatprep.subr.mxu0 0.0
      %1732 = vmatpush1.msra.mxu0 %v1636
      %1733 = vmatprep.subr.mxu0 0.0
      %1734 = vmatpush1.msra.mxu0 %v1635
      %1735 = vmatprep.subr.mxu0 0.0
      %1736 = vmatpush1.msra.mxu0 %v1634
      %1737 = vmatprep.subr.mxu0 0.0
      %1738 = vmatpush2.msra.mxu0 %v1665
      %1739 = vmatprep.subr.mxu0 0.0
      %1740 = vmatpush2.msra.mxu0 %v1664
      %1741 = vmatprep.subr.mxu0 0.0
      %1742 = vmatpush2.msra.mxu0 %v1663
      %1743 = vmatprep.subr.mxu0 0.0
      %1744 = vmatpush2.msra.mxu0 %v1662
      %1745 = vmatprep.subr.mxu0 0.0
      %1746 = vmatpush2.msra.mxu0 %v1661
      %1747 = vmatprep.subr.mxu0 0.0
      %1748 = vmatpush2.msra.mxu0 %v1660
      %1749 = vmatprep.subr.mxu0 0.0
      %1750 = vmatpush2.msra.mxu0 %v1659
      %1751 = vmatprep.subr.mxu0 0.0
      %1752 = vmatpush2.msra.mxu0 %v1658
      %1753 = vmatprep.subr.mxu0 0.0
      %1754 = vmatpush2.msra.mxu0 %v1657
      %1755 = vmatprep.subr.mxu0 0.0
      %1756 = vmatpush2.msra.mxu0 %v1656
      %1757 = vmatprep.subr.mxu0 0.0
      %1758 = vmatpush2.msra.mxu0 %v1655
      %1759 = vmatprep.subr.mxu0 0.0
      %1760 = vmatpush2.msra.mxu0 %v1654
      %1761 = vmatprep.subr.mxu0 0.0
      %1762 = vmatpush2.msra.mxu0 %v1653
      %1763 = vmatprep.subr.mxu0 0.0
      %1764 = vmatpush2.msra.mxu0 %v1652
      %1765 = vmatprep.subr.mxu0 0.0
      %1766 = vmatpush2.msra.mxu0 %v1651
      %1767 = vmatprep.subr.mxu0 0.0
      %1768 = vmatpush2.msra.mxu0 %v1650
      %1769 = vmatprep.mubr.f32.mxu0 %v1623
      %1770 = vmatmul.mubr.f32.gmra.mxu0 %v1622
      %v1771 = vpop.f32.mrf.mxu0
      %v1772 = vadd.f32 %v1703, %v1771
      %v1773 = vpop.f32.mrf.mxu0
      %1774 = vmatprep.mubr.f32.mxu0 %v1627
      %1775 = vmatmul.mubr.f32.gmra.mxu0 %v1626
      %v1776 = vpop.f32.mrf.mxu0
      %v1777 = vadd.f32 %v1703, %v1776
      %v1778 = vpop.f32.mrf.mxu0
      %1779 = vmatprep.mubr.f32.mxu0 %v1631
      %1780 = vmatmul.mubr.f32.gmra.mxu0 %v1630
      %v1781 = vpop.f32.mrf.mxu0
      %v1782 = vadd.f32 %v1703, %v1781
      %v1783 = vpop.f32.mrf.mxu0
      %1784 = vdwg.mxu0
      %1785 = vmatprep.subr.mxu0 0.0
      %1786 = vmatpush1.msra.mxu0 %v1681
      %1787 = vmatprep.subr.mxu0 0.0
      %1788 = vmatpush1.msra.mxu0 %v1680
      %1789 = vmatprep.subr.mxu0 0.0
      %1790 = vmatpush1.msra.mxu0 %v1679
      %1791 = vmatprep.subr.mxu0 0.0
      %1792 = vmatpush1.msra.mxu0 %v1678
      %1793 = vmatprep.subr.mxu0 0.0
      %1794 = vmatpush1.msra.mxu0 %v1677
      %1795 = vmatprep.subr.mxu0 0.0
      %1796 = vmatpush1.msra.mxu0 %v1676
      %1797 = vmatprep.subr.mxu0 0.0
      %1798 = vmatpush1.msra.mxu0 %v1675
      %1799 = vmatprep.subr.mxu0 0.0
      %1800 = vmatpush1.msra.mxu0 %v1674
      %1801 = vmatprep.subr.mxu0 0.0
      %1802 = vmatpush1.msra.mxu0 %v1673
      %1803 = vmatprep.subr.mxu0 0.0
      %1804 = vmatpush1.msra.mxu0 %v1672
      %1805 = vmatprep.subr.mxu0 0.0
      %1806 = vmatpush1.msra.mxu0 %v1671
      %1807 = vmatprep.subr.mxu0 0.0
      %1808 = vmatpush1.msra.mxu0 %v1670
      %1809 = vmatprep.subr.mxu0 0.0
      %1810 = vmatpush1.msra.mxu0 %v1669
      %1811 = vmatprep.subr.mxu0 0.0
      %1812 = vmatpush1.msra.mxu0 %v1668
      %1813 = vmatprep.subr.mxu0 0.0
      %1814 = vmatpush1.msra.mxu0 %v1667
      %1815 = vmatprep.subr.mxu0 0.0
      %1816 = vmatpush1.msra.mxu0 %v1666
      %1817 = vmatprep.subr.mxu0 0.0
      %1818 = vmatpush2.msra.mxu0 %v1697
      %1819 = vmatprep.subr.mxu0 0.0
      %1820 = vmatpush2.msra.mxu0 %v1696
      %1821 = vmatprep.subr.mxu0 0.0
      %1822 = vmatpush2.msra.mxu0 %v1695
      %1823 = vmatprep.subr.mxu0 0.0
      %1824 = vmatpush2.msra.mxu0 %v1694
      %1825 = vmatprep.subr.mxu0 0.0
      %1826 = vmatpush2.msra.mxu0 %v1693
      %1827 = vmatprep.subr.mxu0 0.0
      %1828 = vmatpush2.msra.mxu0 %v1692
      %1829 = vmatprep.subr.mxu0 0.0
      %1830 = vmatpush2.msra.mxu0 %v1691
      %1831 = vmatprep.subr.mxu0 0.0
      %1832 = vmatpush2.msra.mxu0 %v1690
      %1833 = vmatprep.subr.mxu0 0.0
      %1834 = vmatpush2.msra.mxu0 %v1689
      %1835 = vmatprep.subr.mxu0 0.0
      %1836 = vmatpush2.msra.mxu0 %v1688
      %1837 = vmatprep.subr.mxu0 0.0
      %1838 = vmatpush2.msra.mxu0 %v1687
      %1839 = vmatprep.subr.mxu0 0.0
      %1840 = vmatpush2.msra.mxu0 %v1686
      %1841 = vmatprep.subr.mxu0 0.0
      %1842 = vmatpush2.msra.mxu0 %v1685
      %1843 = vmatprep.subr.mxu0 0.0
      %1844 = vmatpush2.msra.mxu0 %v1684
      %1845 = vmatprep.subr.mxu0 0.0
      %1846 = vmatpush2.msra.mxu0 %v1683
      %1847 = vmatprep.subr.mxu0 0.0
      %1848 = vmatpush2.msra.mxu0 %v1682
      %1849 = vmatprep.mubr.f32.mxu0 %v1625
      %1850 = vmatmul.mubr.f32.gmra.mxu0 %v1624
      %v1851 = vpop.f32.mrf.mxu0
      %v1852 = vadd.f32 %v1772, %v1851
      %v1853 = vpop.f32.mrf.mxu0
      %1854 = vmatprep.mubr.f32.mxu0 %v1629
      %1855 = vmatmul.mubr.f32.gmra.mxu0 %v1628
      %v1856 = vpop.f32.mrf.mxu0
      %v1857 = vadd.f32 %v1777, %v1856
      %v1858 = vpop.f32.mrf.mxu0
      %1859 = vmatprep.mubr.f32.mxu0 %v1633
      %1860 = vmatmul.mubr.f32.gmra.mxu0 %v1632
      %v1861 = vpop.f32.mrf.mxu0
      %v1862 = vadd.f32 %v1782, %v1861
      %v1863 = vpop.f32.mrf.mxu0
      %1864 = vdwg.mxu0
      %v1865 = vadd.f32 %v1266, %v1852
      %v1866 = vadd.f32 %v1267, %v1857
      %v1867 = vadd.f32 %v1268, %v1862
      %1868 = vst [vmem:[%s413] sm:$0xff] %v1865
      %1869 = vst [vmem:[%s413 + $0x8] sm:$0xff] %v1866
      %1870 = vst [vmem:[%s413 + $0x10] sm:$0xff] %v1867
      %p1871 = scmp.lt.s32.totalorder %s23, 1
      %s1872 = scalar_select %p1871, %s23, 1
      %s1873 = smul.addr %s1872, 3
      %s1874 = smul.addr %s1873, 8
      %s1875 = scalar_lea.vmem %s12, %s1874
      // Predicated region
      $region69: #{trans_rtg_det_forward.4} parent=67 // pred_check
        %p1876 = pneg %p298
      $region70: #{trans_rtg_det_forward.4} parent=67 // pred_check_branch
        %1878 = sbr.rel (%p1876) target = $region72
      $region71: #{trans_rtg_det_forward.4} parent=67 // pred_region
        _
      $region72: #{trans_rtg_det_forward.4} parent=67 // pred_fallthru
        _
    $region68: #{trans_rtg_det_forward.4} parent=5 // pred_fallthru
      _
    %p1879 = scmp.le.s32.totalorder 2, %s18
    // Predicated region
    $region73: #{trans_rtg_det_forward.4} parent=5 // pred_check
      %p1880 = pneg %p1879
    $region74: #{trans_rtg_det_forward.4} parent=5 // pred_check_branch
      %1882 = sbr.rel (%p1880) target = $region76
    $region75: #{trans_rtg_det_forward.4} parent=5 // pred_region
      %s1883 = ssub.s32 %s18, 2
      // Predicated region
      $region77: #{trans_rtg_det_forward.4} parent=75 // pred_check
        %p1884 = pneg %p304
      $region78: #{trans_rtg_det_forward.4} parent=75 // pred_check_branch
        %1886 = sbr.rel (%p1884) target = $region80
      $region79: #{trans_rtg_det_forward.4} parent=75 // pred_region
        %p1887 = scmp.lt.s32.totalorder %s24, 1
        %s1888 = scalar_select %p1887, %s24, 1
        %s1889 = smul.addr %s1888, 3
        %s1890 = smul.addr %s1889, 8
        %s1891 = scalar_lea.vmem %s12, %s1890
      $region80: #{trans_rtg_det_forward.4} parent=75 // pred_fallthru
        _
    $region76: #{trans_rtg_det_forward.4} parent=5 // pred_fallthru
      _
  $region6: #{trans_rtg_det_forward.4} parent=0 // loop_footer
    %s22 = sadd.s32 1, %s18
  $region7: #{trans_rtg_det_forward.4} parent=0 // loop_footer_branch
    %17 = sbr.rel target = $region3
  $region8: #{trans_rtg_det_forward.4} parent=0 // loop_exit
    _

</llo_original>
